<compile_context>
chip_gen: v5e
topology: v5e:2x2
jax: 0.10.0
libtpu: 0.0.40
codegen_flags: <defaults>
</compile_context>

<pallas_src>
import jax
import jax.numpy as jnp
from jax import lax
from jax.experimental import pallas as pl
from jax.experimental.pallas import tpu as pltpu

# ---- module hyper-parameters (small, consistent with ImageAttention.__init__) ----
IMG_FEATURE_SIZE = 64                       # params['imgFeatureSize']
RNN_HIDDEN_SIZE = 32                        # params['rnnHiddenSize']
ANS_EMBED_SIZE = 16                         # params['ansEmbedSize']
QUERY_SIZE = 2 * RNN_HIDDEN_SIZE + ANS_EMBED_SIZE   # 80
HIDDEN = 1024                               # hard-coded 1024 in the PyTorch module
H_CHUNK = 256                               # K-tile size over the hidden axis
# NOTE: params['imgEmbedSize'] is stored but never used in forward().


def _image_attention_kernel(x_ref, qt_ref, wv_ref, bv_ref, wqt_ref, bq_ref,
                            wl_ref, bl_ref, sel_ref, nind_ref, gather_ref,
                            out_ref):
    """Single grid step; the whole (B, M, N) problem is fused.

    x_ref   : (B*M*N, F)   bf16 image features, rows in (b, m, n) order
    qt_ref  : (Q, B)       bf16 query, transposed
    wv_ref  : (NC, F, HC)  bf16   bv_ref : (NC, 1, HC) f32   v_proj params, H-chunked
    wqt_ref : (NC, HC, Q)  bf16   bq_ref : (NC, HC, 1) f32   q_proj params, H-chunked
    wl_ref  : (NC, HC, 1)  f32    bl_ref : (1, 1)      f32   final Linear(1024->1)
    sel_ref : (BMN, B)   0/1 mask selecting each row's own batch column
    nind_ref: (BMN, N)   0/1 mask scattering row r into lane r % N
    gather_ref: (BM, BMN) 0/1 mask summing rows of group g = r // N
    out_ref : (B*M, N)   softmax over the lane (N) axis
    """
    f32 = jnp.float32
    nc = wv_ref.shape[0]
    bmn = x_ref.shape[0]
    b = qt_ref.shape[1]

    def chunk(c, acc):
        # v-projection chunk: bf16 MXU matmul, f32 accumulate, ReLU in f32.
        v_c = jnp.maximum(
            jnp.dot(x_ref[...], wv_ref[c], preferred_element_type=f32)
            + bv_ref[c], 0.0)                                     # (BMN, HC) f32
        # q-projection chunk, computed directly in (HC, B) layout (no transpose).
        q_c = jnp.maximum(
            jnp.dot(wqt_ref[c], qt_ref[...], preferred_element_type=f32)
            + bq_ref[c], 0.0)                                     # (HC, B) f32
        # Fold the final Linear(1024 -> 1) weight into the query projection:
        #   logits[r] += v_c[r, :] . (q_c[:, b(r)] * wl_c)
        w_eff_c = q_c * wl_ref[c]                                 # (HC, B) f32
        # Keep the 1024-deep contraction in f32 so the reference check stays tight.
        return acc + jnp.dot(v_c, w_eff_c, preferred_element_type=f32)

    logits_all = lax.fori_loop(0, nc, chunk, jnp.zeros((bmn, b), f32),
                               unroll=True)                        # (BMN, B)

    # Select, for every row r, the column of its own batch (precomputed 0/1 mask).
    lcol = jnp.sum(logits_all * sel_ref[...], axis=1, keepdims=True)   # (BMN, 1)

    # Regroup the (BMN, 1) logit column into a lane-dense (B*M, N) tile with a
    # tiny 0/1 MXU matmul (precomputed masks; avoids a sublane->lane reshape).
    logits2d = jnp.dot(gather_ref[...], lcol * nind_ref[...],
                       preferred_element_type=f32) + bl_ref[...]       # (BM, N)

    # softmax over n (dim=2 of the original (B, M, N, 1) logits) == lane axis.
    mx = jnp.max(logits2d, axis=-1, keepdims=True)
    e = jnp.exp(logits2d - mx)
    out_ref[...] = e / jnp.sum(e, axis=-1, keepdims=True)


def image_attention(image, query, wv, bv, wq, bq, wl, bl):
    """image: (B, M, N, F) f32, query: (B, Q) f32 -> attn (B, M, N, 1) f32."""
    B, M, N, F = image.shape
    Q = query.shape[-1]
    H = wv.shape[-1]
    HC = H_CHUNK
    NC = H // HC
    BMN, BM = B * M * N, B * M
    bf16, f32 = jnp.bfloat16, jnp.float32

    # Layout / dtype prep (cheap XLA ops outside the kernel):
    #  * flatten the image into one MXU operand (rows in (b, m, n) order),
    #  * pre-transpose + H-chunk the projection weights so the kernel never
    #    transposes / relayouts anything,
    #  * cast the matmul operands to bf16 (halves weight DMA, native MXU rate);
    #    biases, wl and all ReLU/softmax math stay f32.
    x = image.reshape(BMN, F).astype(bf16)                            # (BMN, F)
    qt = query.T.astype(bf16)                                         # (Q, B)
    wv_c = wv.reshape(F, NC, HC).transpose(1, 0, 2).astype(bf16)      # (NC, F, HC)
    bv_c = bv.reshape(NC, 1, HC).astype(f32)                          # (NC, 1, HC)
    wqt_c = wq.T.reshape(NC, HC, Q).astype(bf16)                      # (NC, HC, Q)
    bq_c = bq.reshape(NC, HC, 1).astype(f32)                          # (NC, HC, 1)
    wl_c = wl.reshape(NC, HC, 1).astype(f32)                          # (NC, HC, 1)
    bl2 = bl.reshape(1, 1).astype(f32)                                # (1, 1)

    # Constant 0/1 masks, hoisted out of the kernel (depend only on B, M, N).
    r = jnp.arange(BMN)
    sel = (r[:, None] // (M * N) == jnp.arange(B)[None, :]).astype(f32)    # (BMN, B)
    n_ind = ((r[:, None] % N) == jnp.arange(N)[None, :]).astype(f32)       # (BMN, N)
    gather = (r[None, :] // N == jnp.arange(BM)[:, None]).astype(f32)      # (BM, BMN)

    attn2d = pl.pallas_call(
        _image_attention_kernel,
        out_shape=jax.ShapeDtypeStruct((BM, N), f32),
        grid=(1,),                           # single fused step, no per-step overhead
        in_specs=[
            pl.BlockSpec((BMN, F),    lambda i: (0, 0)),       # image (flattened, bf16)
            pl.BlockSpec((Q, B),      lambda i: (0, 0)),       # query^T (bf16)
            pl.BlockSpec((NC, F, HC), lambda i: (0, 0, 0)),    # Wv, H-chunked (bf16)
            pl.BlockSpec((NC, 1, HC), lambda i: (0, 0, 0)),    # bv, H-chunked
            pl.BlockSpec((NC, HC, Q), lambda i: (0, 0, 0)),    # Wq^T, H-chunked (bf16)
            pl.BlockSpec((NC, HC, 1), lambda i: (0, 0, 0)),    # bq, H-chunked
            pl.BlockSpec((NC, HC, 1), lambda i: (0, 0, 0)),    # w_linear, H-chunked
            pl.BlockSpec((1, 1),      lambda i: (0, 0)),       # b_linear
            pl.BlockSpec((BMN, B),    lambda i: (0, 0)),       # batch-select mask
            pl.BlockSpec((BMN, N),    lambda i: (0, 0)),       # n-indicator mask
            pl.BlockSpec((BM, BMN),   lambda i: (0, 0)),       # row-group gather mask
        ],
        out_specs=pl.BlockSpec((BM, N), lambda i: (0, 0)),      # lane-dense (BM, N)
        compiler_params=pltpu.CompilerParams(
            dimension_semantics=("arbitrary",)),
    )(x, qt, wv_c, bv_c, wqt_c, bq_c, wl_c, bl2, sel, n_ind, gather)

    return attn2d.reshape(B, M, N, 1)


def _weight_norm_dim_none(v, g=None):
    """PyTorch weight_norm(..., dim=None): w = g * v / ||v||_F.

    g defaults to ||v||_F (PyTorch's init value), in which case this is an
    identity; pass a trained scalar g to mirror real weight_norm parameters.
    """
    norm = jnp.sqrt(jnp.sum(v * v))
    if g is None:
        g = norm
    return g * v / norm


if __name__ == "__main__":
    key = jax.random.PRNGKey(0)
    B, M, N = 2, 4, 16
    ks = jax.random.split(key, 8)

    image = jax.random.normal(ks[0], (B, M, N, IMG_FEATURE_SIZE), jnp.float32)
    query = jax.random.normal(ks[1], (B, QUERY_SIZE), jnp.float32)

    # Deterministic synthetic parameters (weights stored as (in, out): y = x @ W + b).
    wv = _weight_norm_dim_none(
        0.05 * jax.random.normal(ks[2], (IMG_FEATURE_SIZE, HIDDEN), jnp.float32))
    bv = 0.05 * jax.random.normal(ks[3], (1, HIDDEN), jnp.float32)
    wq = _weight_norm_dim_none(
        0.05 * jax.random.normal(ks[4], (QUERY_SIZE, HIDDEN), jnp.float32))
    bq = 0.05 * jax.random.normal(ks[5], (1, HIDDEN), jnp.float32)
    wl = _weight_norm_dim_none(
        0.05 * jax.random.normal(ks[6], (1, HIDDEN), jnp.float32))
    bl = 0.05 * jax.random.normal(ks[7], (1, 1), jnp.float32)

    attn = image_attention(image, query, wv, bv, wq, bq, wl, bl)
    attn = jax.block_until_ready(attn)
    assert attn.shape == (B, M, N, 1)

    # Pure-JAX f32 reference for correctness (kernel uses bf16 matmul operands,
    # so the tolerance is slightly looser than the pure-f32 version).
    v_ref = jnp.maximum(image @ wv + bv[0], 0.0)                       # (B, M, N, H)
    q_ref = jnp.maximum(query @ wq + bq[0], 0.0)[:, None, None, :]     # (B, 1, 1, H)
    logits_ref = jnp.sum(v_ref * q_ref * wl[0], axis=-1, keepdims=True) + bl[0, 0]
    ref = jax.nn.softmax(logits_ref, axis=2)                           # softmax over N
    assert jnp.allclose(attn, ref, atol=2e-3, rtol=2e-2)
    # attention rows must still sum to 1 over N.
    assert jnp.allclose(jnp.sum(attn, axis=2), 1.0, atol=1e-5)

    print("KERNEL_OK")
</pallas_src>

<mosaic_0001>
module attributes {stable_mosaic.version = 11 : i64} {
  func.func @_image_attention_kernel(%arg0: i32, %arg1: memref<128x64xbf16, #tpu.memory_space<vmem>>, %arg2: memref<80x2xbf16, #tpu.memory_space<vmem>>, %arg3: memref<4x64x256xbf16, #tpu.memory_space<vmem>>, %arg4: memref<4x1x256xf32, #tpu.memory_space<vmem>>, %arg5: memref<4x256x80xbf16, #tpu.memory_space<vmem>>, %arg6: memref<4x256x1xf32, #tpu.memory_space<vmem>>, %arg7: memref<4x256x1xf32, #tpu.memory_space<vmem>>, %arg8: memref<1x1xf32, #tpu.memory_space<vmem>>, %arg9: memref<128x2xf32, #tpu.memory_space<vmem>>, %arg10: memref<128x16xf32, #tpu.memory_space<vmem>>, %arg11: memref<8x128xf32, #tpu.memory_space<vmem>>, %arg12: memref<8x16xf32, #tpu.memory_space<vmem>>) attributes {dimension_semantics = [#tpu.dimension_semantics<arbitrary>], iteration_bounds = array<i64: 1>, scalar_prefetch = 0 : i64, scratch_operands = 0 : i64, tpu.core_type = #tpu.core_type<tc>, window_params = [{pipeline_mode = #tpu.pipeline_mode<synchronous>, transform_indices = @transform_0, window_bounds = array<i64: 128, 64>}, {pipeline_mode = #tpu.pipeline_mode<synchronous>, transform_indices = @transform_1, window_bounds = array<i64: 80, 2>}, {pipeline_mode = #tpu.pipeline_mode<synchronous>, transform_indices = @transform_2, window_bounds = array<i64: 4, 64, 256>}, {pipeline_mode = #tpu.pipeline_mode<synchronous>, transform_indices = @transform_3, window_bounds = array<i64: 4, 1, 256>}, {pipeline_mode = #tpu.pipeline_mode<synchronous>, transform_indices = @transform_4, window_bounds = array<i64: 4, 256, 80>}, {pipeline_mode = #tpu.pipeline_mode<synchronous>, transform_indices = @transform_5, window_bounds = array<i64: 4, 256, 1>}, {pipeline_mode = #tpu.pipeline_mode<synchronous>, transform_indices = @transform_6, window_bounds = array<i64: 4, 256, 1>}, {pipeline_mode = #tpu.pipeline_mode<synchronous>, transform_indices = @transform_7, window_bounds = array<i64: 1, 1>}, {pipeline_mode = #tpu.pipeline_mode<synchronous>, transform_indices = @transform_8, window_bounds = array<i64: 128, 2>}, {pipeline_mode = #tpu.pipeline_mode<synchronous>, transform_indices = @transform_9, window_bounds = array<i64: 128, 16>}, {pipeline_mode = #tpu.pipeline_mode<synchronous>, transform_indices = @transform_10, window_bounds = array<i64: 8, 128>}, {pipeline_mode = #tpu.pipeline_mode<synchronous>, transform_indices = @transform_11, window_bounds = array<i64: 8, 16>}]} {
    %cst = arith.constant 0.000000e+00 : f32
    %0 = vector.broadcast %cst : f32 to vector<128x2xf32>
    %c0_i32 = arith.constant 0 : i32
    %c0 = arith.constant 0 : index
    %c0_0 = arith.constant 0 : index
    %1 = vector.load %arg1[%c0, %c0_0] : memref<128x64xbf16, #tpu.memory_space<vmem>>, vector<128x64xbf16>
    %2 = arith.index_cast %c0_i32 : i32 to index
    %c0_1 = arith.constant 0 : index
    %c0_2 = arith.constant 0 : index
    %3 = vector.load %arg3[%2, %c0_1, %c0_2] : memref<4x64x256xbf16, #tpu.memory_space<vmem>>, vector<1x64x256xbf16>
    %4 = vector.shape_cast %3 : vector<1x64x256xbf16> to vector<64x256xbf16>
    %cst_3 = arith.constant dense<0.000000e+00> : vector<128x256xf32>
    %5 = tpu.matmul %1, %4, %cst_3 {dimension_numbers = #tpu.dot_dimension_numbers<[1], [0], [0], [1], [0, 0, 1, 1], [], []>} : vector<128x64xbf16>, vector<64x256xbf16>, vector<128x256xf32> -> vector<128x256xf32>
    %6 = arith.index_cast %c0_i32 : i32 to index
    %c0_4 = arith.constant 0 : index
    %c0_5 = arith.constant 0 : index
    %7 = vector.load %arg4[%6, %c0_4, %c0_5] : memref<4x1x256xf32, #tpu.memory_space<vmem>>, vector<1x1x256xf32>
    %8 = vector.shape_cast %7 : vector<1x1x256xf32> to vector<1x256xf32>
    %9 = vector.broadcast %8 : vector<1x256xf32> to vector<128x256xf32>
    %10 = arith.addf %5, %9 : vector<128x256xf32>
    %cst_6 = arith.constant 0.000000e+00 : f32
    %11 = vector.broadcast %cst_6 : f32 to vector<128x256xf32>
    %12 = arith.maximumf %10, %11 : vector<128x256xf32>
    %13 = arith.index_cast %c0_i32 : i32 to index
    %c0_7 = arith.constant 0 : index
    %c0_8 = arith.constant 0 : index
    %14 = vector.load %arg5[%13, %c0_7, %c0_8] : memref<4x256x80xbf16, #tpu.memory_space<vmem>>, vector<1x256x80xbf16>
    %15 = vector.shape_cast %14 : vector<1x256x80xbf16> to vector<256x80xbf16>
    %c0_9 = arith.constant 0 : index
    %c0_10 = arith.constant 0 : index
    %16 = vector.load %arg2[%c0_9, %c0_10] : memref<80x2xbf16, #tpu.memory_space<vmem>>, vector<80x2xbf16>
    %cst_11 = arith.constant dense<0.000000e+00> : vector<256x2xf32>
    %17 = tpu.matmul %15, %16, %cst_11 {dimension_numbers = #tpu.dot_dimension_numbers<[1], [0], [0], [1], [0, 0, 1, 1], [], []>} : vector<256x80xbf16>, vector<80x2xbf16>, vector<256x2xf32> -> vector<256x2xf32>
    %18 = arith.index_cast %c0_i32 : i32 to index
    %c0_12 = arith.constant 0 : index
    %c0_13 = arith.constant 0 : index
    %19 = vector.load %arg6[%18, %c0_12, %c0_13] : memref<4x256x1xf32, #tpu.memory_space<vmem>>, vector<1x256x1xf32>
    %20 = vector.shape_cast %19 : vector<1x256x1xf32> to vector<256x1xf32>
    %21 = vector.broadcast %20 : vector<256x1xf32> to vector<256x2xf32>
    %22 = arith.addf %17, %21 : vector<256x2xf32>
    %cst_14 = arith.constant 0.000000e+00 : f32
    %23 = vector.broadcast %cst_14 : f32 to vector<256x2xf32>
    %24 = arith.maximumf %22, %23 : vector<256x2xf32>
    %25 = arith.index_cast %c0_i32 : i32 to index
    %c0_15 = arith.constant 0 : index
    %c0_16 = arith.constant 0 : index
    %26 = vector.load %arg7[%25, %c0_15, %c0_16] : memref<4x256x1xf32, #tpu.memory_space<vmem>>, vector<1x256x1xf32>
    %27 = vector.shape_cast %26 : vector<1x256x1xf32> to vector<256x1xf32>
    %28 = vector.broadcast %27 : vector<256x1xf32> to vector<256x2xf32>
    %29 = arith.mulf %24, %28 : vector<256x2xf32>
    %cst_17 = arith.constant dense<0.000000e+00> : vector<128x2xf32>
    %30 = tpu.matmul %12, %29, %cst_17 {dimension_numbers = #tpu.dot_dimension_numbers<[1], [0], [0], [1], [0, 0, 1, 1], [], []>} : vector<128x256xf32>, vector<256x2xf32>, vector<128x2xf32> -> vector<128x2xf32>
    %31 = arith.addf %0, %30 : vector<128x2xf32>
    %c1_i32 = arith.constant 1 : i32
    %c0_18 = arith.constant 0 : index
    %c0_19 = arith.constant 0 : index
    %32 = vector.load %arg1[%c0_18, %c0_19] : memref<128x64xbf16, #tpu.memory_space<vmem>>, vector<128x64xbf16>
    %33 = arith.index_cast %c1_i32 : i32 to index
    %c0_20 = arith.constant 0 : index
    %c0_21 = arith.constant 0 : index
    %34 = vector.load %arg3[%33, %c0_20, %c0_21] : memref<4x64x256xbf16, #tpu.memory_space<vmem>>, vector<1x64x256xbf16>
    %35 = vector.shape_cast %34 : vector<1x64x256xbf16> to vector<64x256xbf16>
    %cst_22 = arith.constant dense<0.000000e+00> : vector<128x256xf32>
    %36 = tpu.matmul %32, %35, %cst_22 {dimension_numbers = #tpu.dot_dimension_numbers<[1], [0], [0], [1], [0, 0, 1, 1], [], []>} : vector<128x64xbf16>, vector<64x256xbf16>, vector<128x256xf32> -> vector<128x256xf32>
    %37 = arith.index_cast %c1_i32 : i32 to index
    %c0_23 = arith.constant 0 : index
    %c0_24 = arith.constant 0 : index
    %38 = vector.load %arg4[%37, %c0_23, %c0_24] : memref<4x1x256xf32, #tpu.memory_space<vmem>>, vector<1x1x256xf32>
    %39 = vector.shape_cast %38 : vector<1x1x256xf32> to vector<1x256xf32>
    %40 = vector.broadcast %39 : vector<1x256xf32> to vector<128x256xf32>
    %41 = arith.addf %36, %40 : vector<128x256xf32>
    %cst_25 = arith.constant 0.000000e+00 : f32
    %42 = vector.broadcast %cst_25 : f32 to vector<128x256xf32>
    %43 = arith.maximumf %41, %42 : vector<128x256xf32>
    %44 = arith.index_cast %c1_i32 : i32 to index
    %c0_26 = arith.constant 0 : index
    %c0_27 = arith.constant 0 : index
    %45 = vector.load %arg5[%44, %c0_26, %c0_27] : memref<4x256x80xbf16, #tpu.memory_space<vmem>>, vector<1x256x80xbf16>
    %46 = vector.shape_cast %45 : vector<1x256x80xbf16> to vector<256x80xbf16>
    %c0_28 = arith.constant 0 : index
    %c0_29 = arith.constant 0 : index
    %47 = vector.load %arg2[%c0_28, %c0_29] : memref<80x2xbf16, #tpu.memory_space<vmem>>, vector<80x2xbf16>
    %cst_30 = arith.constant dense<0.000000e+00> : vector<256x2xf32>
    %48 = tpu.matmul %46, %47, %cst_30 {dimension_numbers = #tpu.dot_dimension_numbers<[1], [0], [0], [1], [0, 0, 1, 1], [], []>} : vector<256x80xbf16>, vector<80x2xbf16>, vector<256x2xf32> -> vector<256x2xf32>
    %49 = arith.index_cast %c1_i32 : i32 to index
    %c0_31 = arith.constant 0 : index
    %c0_32 = arith.constant 0 : index
    %50 = vector.load %arg6[%49, %c0_31, %c0_32] : memref<4x256x1xf32, #tpu.memory_space<vmem>>, vector<1x256x1xf32>
    %51 = vector.shape_cast %50 : vector<1x256x1xf32> to vector<256x1xf32>
    %52 = vector.broadcast %51 : vector<256x1xf32> to vector<256x2xf32>
    %53 = arith.addf %48, %52 : vector<256x2xf32>
    %cst_33 = arith.constant 0.000000e+00 : f32
    %54 = vector.broadcast %cst_33 : f32 to vector<256x2xf32>
    %55 = arith.maximumf %53, %54 : vector<256x2xf32>
    %56 = arith.index_cast %c1_i32 : i32 to index
    %c0_34 = arith.constant 0 : index
    %c0_35 = arith.constant 0 : index
    %57 = vector.load %arg7[%56, %c0_34, %c0_35] : memref<4x256x1xf32, #tpu.memory_space<vmem>>, vector<1x256x1xf32>
    %58 = vector.shape_cast %57 : vector<1x256x1xf32> to vector<256x1xf32>
    %59 = vector.broadcast %58 : vector<256x1xf32> to vector<256x2xf32>
    %60 = arith.mulf %55, %59 : vector<256x2xf32>
    %cst_36 = arith.constant dense<0.000000e+00> : vector<128x2xf32>
    %61 = tpu.matmul %43, %60, %cst_36 {dimension_numbers = #tpu.dot_dimension_numbers<[1], [0], [0], [1], [0, 0, 1, 1], [], []>} : vector<128x256xf32>, vector<256x2xf32>, vector<128x2xf32> -> vector<128x2xf32>
    %62 = arith.addf %31, %61 : vector<128x2xf32>
    %c2_i32 = arith.constant 2 : i32
    %c0_37 = arith.constant 0 : index
    %c0_38 = arith.constant 0 : index
    %63 = vector.load %arg1[%c0_37, %c0_38] : memref<128x64xbf16, #tpu.memory_space<vmem>>, vector<128x64xbf16>
    %64 = arith.index_cast %c2_i32 : i32 to index
    %c0_39 = arith.constant 0 : index
    %c0_40 = arith.constant 0 : index
    %65 = vector.load %arg3[%64, %c0_39, %c0_40] : memref<4x64x256xbf16, #tpu.memory_space<vmem>>, vector<1x64x256xbf16>
    %66 = vector.shape_cast %65 : vector<1x64x256xbf16> to vector<64x256xbf16>
    %cst_41 = arith.constant dense<0.000000e+00> : vector<128x256xf32>
    %67 = tpu.matmul %63, %66, %cst_41 {dimension_numbers = #tpu.dot_dimension_numbers<[1], [0], [0], [1], [0, 0, 1, 1], [], []>} : vector<128x64xbf16>, vector<64x256xbf16>, vector<128x256xf32> -> vector<128x256xf32>
    %68 = arith.index_cast %c2_i32 : i32 to index
    %c0_42 = arith.constant 0 : index
    %c0_43 = arith.constant 0 : index
    %69 = vector.load %arg4[%68, %c0_42, %c0_43] : memref<4x1x256xf32, #tpu.memory_space<vmem>>, vector<1x1x256xf32>
    %70 = vector.shape_cast %69 : vector<1x1x256xf32> to vector<1x256xf32>
    %71 = vector.broadcast %70 : vector<1x256xf32> to vector<128x256xf32>
    %72 = arith.addf %67, %71 : vector<128x256xf32>
    %cst_44 = arith.constant 0.000000e+00 : f32
    %73 = vector.broadcast %cst_44 : f32 to vector<128x256xf32>
    %74 = arith.maximumf %72, %73 : vector<128x256xf32>
    %75 = arith.index_cast %c2_i32 : i32 to index
    %c0_45 = arith.constant 0 : index
    %c0_46 = arith.constant 0 : index
    %76 = vector.load %arg5[%75, %c0_45, %c0_46] : memref<4x256x80xbf16, #tpu.memory_space<vmem>>, vector<1x256x80xbf16>
    %77 = vector.shape_cast %76 : vector<1x256x80xbf16> to vector<256x80xbf16>
    %c0_47 = arith.constant 0 : index
    %c0_48 = arith.constant 0 : index
    %78 = vector.load %arg2[%c0_47, %c0_48] : memref<80x2xbf16, #tpu.memory_space<vmem>>, vector<80x2xbf16>
    %cst_49 = arith.constant dense<0.000000e+00> : vector<256x2xf32>
    %79 = tpu.matmul %77, %78, %cst_49 {dimension_numbers = #tpu.dot_dimension_numbers<[1], [0], [0], [1], [0, 0, 1, 1], [], []>} : vector<256x80xbf16>, vector<80x2xbf16>, vector<256x2xf32> -> vector<256x2xf32>
    %80 = arith.index_cast %c2_i32 : i32 to index
    %c0_50 = arith.constant 0 : index
    %c0_51 = arith.constant 0 : index
    %81 = vector.load %arg6[%80, %c0_50, %c0_51] : memref<4x256x1xf32, #tpu.memory_space<vmem>>, vector<1x256x1xf32>
    %82 = vector.shape_cast %81 : vector<1x256x1xf32> to vector<256x1xf32>
    %83 = vector.broadcast %82 : vector<256x1xf32> to vector<256x2xf32>
    %84 = arith.addf %79, %83 : vector<256x2xf32>
    %cst_52 = arith.constant 0.000000e+00 : f32
    %85 = vector.broadcast %cst_52 : f32 to vector<256x2xf32>
    %86 = arith.maximumf %84, %85 : vector<256x2xf32>
    %87 = arith.index_cast %c2_i32 : i32 to index
    %c0_53 = arith.constant 0 : index
    %c0_54 = arith.constant 0 : index
    %88 = vector.load %arg7[%87, %c0_53, %c0_54] : memref<4x256x1xf32, #tpu.memory_space<vmem>>, vector<1x256x1xf32>
    %89 = vector.shape_cast %88 : vector<1x256x1xf32> to vector<256x1xf32>
    %90 = vector.broadcast %89 : vector<256x1xf32> to vector<256x2xf32>
    %91 = arith.mulf %86, %90 : vector<256x2xf32>
    %cst_55 = arith.constant dense<0.000000e+00> : vector<128x2xf32>
    %92 = tpu.matmul %74, %91, %cst_55 {dimension_numbers = #tpu.dot_dimension_numbers<[1], [0], [0], [1], [0, 0, 1, 1], [], []>} : vector<128x256xf32>, vector<256x2xf32>, vector<128x2xf32> -> vector<128x2xf32>
    %93 = arith.addf %62, %92 : vector<128x2xf32>
    %c3_i32 = arith.constant 3 : i32
    %c0_56 = arith.constant 0 : index
    %c0_57 = arith.constant 0 : index
    %94 = vector.load %arg1[%c0_56, %c0_57] : memref<128x64xbf16, #tpu.memory_space<vmem>>, vector<128x64xbf16>
    %95 = arith.index_cast %c3_i32 : i32 to index
    %c0_58 = arith.constant 0 : index
    %c0_59 = arith.constant 0 : index
    %96 = vector.load %arg3[%95, %c0_58, %c0_59] : memref<4x64x256xbf16, #tpu.memory_space<vmem>>, vector<1x64x256xbf16>
    %97 = vector.shape_cast %96 : vector<1x64x256xbf16> to vector<64x256xbf16>
    %cst_60 = arith.constant dense<0.000000e+00> : vector<128x256xf32>
    %98 = tpu.matmul %94, %97, %cst_60 {dimension_numbers = #tpu.dot_dimension_numbers<[1], [0], [0], [1], [0, 0, 1, 1], [], []>} : vector<128x64xbf16>, vector<64x256xbf16>, vector<128x256xf32> -> vector<128x256xf32>
    %99 = arith.index_cast %c3_i32 : i32 to index
    %c0_61 = arith.constant 0 : index
    %c0_62 = arith.constant 0 : index
    %100 = vector.load %arg4[%99, %c0_61, %c0_62] : memref<4x1x256xf32, #tpu.memory_space<vmem>>, vector<1x1x256xf32>
    %101 = vector.shape_cast %100 : vector<1x1x256xf32> to vector<1x256xf32>
    %102 = vector.broadcast %101 : vector<1x256xf32> to vector<128x256xf32>
    %103 = arith.addf %98, %102 : vector<128x256xf32>
    %cst_63 = arith.constant 0.000000e+00 : f32
    %104 = vector.broadcast %cst_63 : f32 to vector<128x256xf32>
    %105 = arith.maximumf %103, %104 : vector<128x256xf32>
    %106 = arith.index_cast %c3_i32 : i32 to index
    %c0_64 = arith.constant 0 : index
    %c0_65 = arith.constant 0 : index
    %107 = vector.load %arg5[%106, %c0_64, %c0_65] : memref<4x256x80xbf16, #tpu.memory_space<vmem>>, vector<1x256x80xbf16>
    %108 = vector.shape_cast %107 : vector<1x256x80xbf16> to vector<256x80xbf16>
    %c0_66 = arith.constant 0 : index
    %c0_67 = arith.constant 0 : index
    %109 = vector.load %arg2[%c0_66, %c0_67] : memref<80x2xbf16, #tpu.memory_space<vmem>>, vector<80x2xbf16>
    %cst_68 = arith.constant dense<0.000000e+00> : vector<256x2xf32>
    %110 = tpu.matmul %108, %109, %cst_68 {dimension_numbers = #tpu.dot_dimension_numbers<[1], [0], [0], [1], [0, 0, 1, 1], [], []>} : vector<256x80xbf16>, vector<80x2xbf16>, vector<256x2xf32> -> vector<256x2xf32>
    %111 = arith.index_cast %c3_i32 : i32 to index
    %c0_69 = arith.constant 0 : index
    %c0_70 = arith.constant 0 : index
    %112 = vector.load %arg6[%111, %c0_69, %c0_70] : memref<4x256x1xf32, #tpu.memory_space<vmem>>, vector<1x256x1xf32>
    %113 = vector.shape_cast %112 : vector<1x256x1xf32> to vector<256x1xf32>
    %114 = vector.broadcast %113 : vector<256x1xf32> to vector<256x2xf32>
    %115 = arith.addf %110, %114 : vector<256x2xf32>
    %cst_71 = arith.constant 0.000000e+00 : f32
    %116 = vector.broadcast %cst_71 : f32 to vector<256x2xf32>
    %117 = arith.maximumf %115, %116 : vector<256x2xf32>
    %118 = arith.index_cast %c3_i32 : i32 to index
    %c0_72 = arith.constant 0 : index
    %c0_73 = arith.constant 0 : index
    %119 = vector.load %arg7[%118, %c0_72, %c0_73] : memref<4x256x1xf32, #tpu.memory_space<vmem>>, vector<1x256x1xf32>
    %120 = vector.shape_cast %119 : vector<1x256x1xf32> to vector<256x1xf32>
    %121 = vector.broadcast %120 : vector<256x1xf32> to vector<256x2xf32>
    %122 = arith.mulf %117, %121 : vector<256x2xf32>
    %cst_74 = arith.constant dense<0.000000e+00> : vector<128x2xf32>
    %123 = tpu.matmul %105, %122, %cst_74 {dimension_numbers = #tpu.dot_dimension_numbers<[1], [0], [0], [1], [0, 0, 1, 1], [], []>} : vector<128x256xf32>, vector<256x2xf32>, vector<128x2xf32> -> vector<128x2xf32>
    %124 = arith.addf %93, %123 : vector<128x2xf32>
    %c4_i32 = arith.constant 4 : i32
    %c0_75 = arith.constant 0 : index
    %c0_76 = arith.constant 0 : index
    %125 = vector.load %arg9[%c0_75, %c0_76] : memref<128x2xf32, #tpu.memory_space<vmem>>, vector<128x2xf32>
    %126 = arith.mulf %124, %125 : vector<128x2xf32>
    %cst_77 = arith.constant dense<0.000000e+00> : vector<128xf32>
    %127 = vector.multi_reduction <add>, %126, %cst_77 [1] : vector<128x2xf32> to vector<128xf32>
    %128 = vector.shape_cast %127 : vector<128xf32> to vector<128x1xf32>
    %c0_78 = arith.constant 0 : index
    %c0_79 = arith.constant 0 : index
    %129 = vector.load %arg11[%c0_78, %c0_79] : memref<8x128xf32, #tpu.memory_space<vmem>>, vector<8x128xf32>
    %c0_80 = arith.constant 0 : index
    %c0_81 = arith.constant 0 : index
    %130 = vector.load %arg10[%c0_80, %c0_81] : memref<128x16xf32, #tpu.memory_space<vmem>>, vector<128x16xf32>
    %131 = vector.broadcast %128 : vector<128x1xf32> to vector<128x16xf32>
    %132 = arith.mulf %131, %130 : vector<128x16xf32>
    %cst_82 = arith.constant dense<0.000000e+00> : vector<8x16xf32>
    %133 = tpu.matmul %129, %132, %cst_82 {dimension_numbers = #tpu.dot_dimension_numbers<[1], [0], [0], [1], [0, 0, 1, 1], [], []>} : vector<8x128xf32>, vector<128x16xf32>, vector<8x16xf32> -> vector<8x16xf32>
    %c0_83 = arith.constant 0 : index
    %c0_84 = arith.constant 0 : index
    %134 = vector.load %arg8[%c0_83, %c0_84] : memref<1x1xf32, #tpu.memory_space<vmem>>, vector<1x1xf32>
    %135 = vector.broadcast %134 : vector<1x1xf32> to vector<8x16xf32>
    %136 = arith.addf %133, %135 : vector<8x16xf32>
    %cst_85 = arith.constant dense<0xFF800000> : vector<8xf32>
    %137 = vector.multi_reduction <maximumf>, %136, %cst_85 [1] : vector<8x16xf32> to vector<8xf32>
    %138 = vector.shape_cast %137 : vector<8xf32> to vector<8x1xf32>
    %139 = vector.broadcast %138 : vector<8x1xf32> to vector<8x16xf32>
    %140 = arith.subf %136, %139 : vector<8x16xf32>
    %141 = math.exp %140 : vector<8x16xf32>
    %cst_86 = arith.constant dense<0.000000e+00> : vector<8xf32>
    %142 = vector.multi_reduction <add>, %141, %cst_86 [1] : vector<8x16xf32> to vector<8xf32>
    %143 = vector.shape_cast %142 : vector<8xf32> to vector<8x1xf32>
    %144 = vector.broadcast %143 : vector<8x1xf32> to vector<8x16xf32>
    %145 = arith.divf %141, %144 : vector<8x16xf32>
    %c0_87 = arith.constant 0 : index
    %c0_88 = arith.constant 0 : index
    %146 = vector.load %arg12[%c0_87, %c0_88] : memref<8x16xf32, #tpu.memory_space<vmem>>, vector<8x16xf32>
    tpu.vector_store %arg12[%c0_87, %c0_88], %145 {strides = array<i32>} : memref<8x16xf32, #tpu.memory_space<vmem>>, vector<8x16xf32>,
    return
  }
  func.func @transform_0(%arg0: i32) -> (i32, i32) {
    %c0_i32 = arith.constant 0 : i32
    %c0_i32_0 = arith.constant 0 : i32
    %c0_i32_1 = arith.constant 0 : i32
    return %c0_i32, %c0_i32_0 : i32, i32
  }
  func.func @transform_1(%arg0: i32) -> (i32, i32) {
    %c0_i32 = arith.constant 0 : i32
    %c0_i32_0 = arith.constant 0 : i32
    %c0_i32_1 = arith.constant 0 : i32
    return %c0_i32, %c0_i32_0 : i32, i32
  }
  func.func @transform_2(%arg0: i32) -> (i32, i32, i32) {
    %c0_i32 = arith.constant 0 : i32
    %c0_i32_0 = arith.constant 0 : i32
    %c0_i32_1 = arith.constant 0 : i32
    %c0_i32_2 = arith.constant 0 : i32
    return %c0_i32, %c0_i32_0, %c0_i32_1 : i32, i32, i32
  }
  func.func @transform_3(%arg0: i32) -> (i32, i32, i32) {
    %c0_i32 = arith.constant 0 : i32
    %c0_i32_0 = arith.constant 0 : i32
    %c0_i32_1 = arith.constant 0 : i32
    %c0_i32_2 = arith.constant 0 : i32
    return %c0_i32, %c0_i32_0, %c0_i32_1 : i32, i32, i32
  }
  func.func @transform_4(%arg0: i32) -> (i32, i32, i32) {
    %c0_i32 = arith.constant 0 : i32
    %c0_i32_0 = arith.constant 0 : i32
    %c0_i32_1 = arith.constant 0 : i32
    %c0_i32_2 = arith.constant 0 : i32
    return %c0_i32, %c0_i32_0, %c0_i32_1 : i32, i32, i32
  }
  func.func @transform_5(%arg0: i32) -> (i32, i32, i32) {
    %c0_i32 = arith.constant 0 : i32
    %c0_i32_0 = arith.constant 0 : i32
    %c0_i32_1 = arith.constant 0 : i32
    %c0_i32_2 = arith.constant 0 : i32
    return %c0_i32, %c0_i32_0, %c0_i32_1 : i32, i32, i32
  }
  func.func @transform_6(%arg0: i32) -> (i32, i32, i32) {
    %c0_i32 = arith.constant 0 : i32
    %c0_i32_0 = arith.constant 0 : i32
    %c0_i32_1 = arith.constant 0 : i32
    %c0_i32_2 = arith.constant 0 : i32
    return %c0_i32, %c0_i32_0, %c0_i32_1 : i32, i32, i32
  }
  func.func @transform_7(%arg0: i32) -> (i32, i32) {
    %c0_i32 = arith.constant 0 : i32
    %c0_i32_0 = arith.constant 0 : i32
    %c0_i32_1 = arith.constant 0 : i32
    return %c0_i32, %c0_i32_0 : i32, i32
  }
  func.func @transform_8(%arg0: i32) -> (i32, i32) {
    %c0_i32 = arith.constant 0 : i32
    %c0_i32_0 = arith.constant 0 : i32
    %c0_i32_1 = arith.constant 0 : i32
    return %c0_i32, %c0_i32_0 : i32, i32
  }
  func.func @transform_9(%arg0: i32) -> (i32, i32) {
    %c0_i32 = arith.constant 0 : i32
    %c0_i32_0 = arith.constant 0 : i32
    %c0_i32_1 = arith.constant 0 : i32
    return %c0_i32, %c0_i32_0 : i32, i32
  }
  func.func @transform_10(%arg0: i32) -> (i32, i32) {
    %c0_i32 = arith.constant 0 : i32
    %c0_i32_0 = arith.constant 0 : i32
    %c0_i32_1 = arith.constant 0 : i32
    return %c0_i32, %c0_i32_0 : i32, i32
  }
  func.func @transform_11(%arg0: i32) -> (i32, i32) {
    %c0_i32 = arith.constant 0 : i32
    %c0_i32_0 = arith.constant 0 : i32
    %c0_i32_1 = arith.constant 0 : i32
    return %c0_i32, %c0_i32_0 : i32, i32
  }
}

</mosaic_0001>

<llo_original>
// kernel: tpu_custom_call.1
$region0: #{tpu_custom_call.1}
  #allocation0 [shape = 'u32[]', space=smem, size = 0x4, offset = 0x4, fixed_abs, tag = 'smem constant byte address 0x4 - core index']
  #allocation1 [shape = 'u32[72,128]{1,0:T(1,128)}', space=vmem, size = 0x9000, scoped, tag = 'internal scratch']
  #allocation2 [shape = 'f32[1,1]{1,0:T(1,128)S(1)}', space=vmem, size = 0x200, scoped, tag = 'scoped memory for tpu_custom_call.1']
  %s0 = inlined_call_operand.vmem [shape: bf16[128,64], index: 0, kind: input, shape index: {}]
  %s1 = inlined_call_operand.vmem [shape: bf16[80,2], index: 1, kind: input, shape index: {}]
  %s2 = inlined_call_operand.vmem [shape: bf16[4,64,256], index: 2, kind: input, shape index: {}]
  %s3 = inlined_call_operand.vmem [shape: f32[4,1,256], index: 3, kind: input, shape index: {}]
  %s4 = inlined_call_operand.vmem [shape: bf16[4,256,80], index: 4, kind: input, shape index: {}]
  %s5 = inlined_call_operand.vmem [shape: f32[4,256,1], index: 5, kind: input, shape index: {}]
  %s6 = inlined_call_operand.vmem [shape: f32[4,256,1], index: 6, kind: input, shape index: {}]
  %s7 = inlined_call_operand.<no memory space> [shape: f32[1,1], index: 7, kind: input, shape index: {}]
  %s8 = inlined_call_operand.vmem [shape: f32[128,2], index: 8, kind: input, shape index: {}]
  %s9 = inlined_call_operand.vmem [shape: f32[128,16], index: 9, kind: input, shape index: {}]
  %s10 = inlined_call_operand.vmem [shape: f32[8,128], index: 10, kind: input, shape index: {}]
  %s11 = inlined_call_operand.hbm [shape: f32[8,16], index: 11, kind: output, shape index: {}]
  %s12 = sld [smem:[#allocation0]]
  $region54: #{tpu_custom_call.1} parent=0
    _
  %s14 = ssub.s32 1, %s12
  %s15 = scalar_select 0, %s14, %s12
  %v16 = vstv %s7
  %17 = vst [vmem:[#allocation2] sm:$0x1] %v16
  $region1: #{tpu_custom_call.1} parent=0
    #allocation3 [shape = 'u8[4096]{0}', space=vmem, size = 0x1000, scoped, tag = 'output window, operand 0, single buffered']
    #allocation4 [shape = 's32[1]{0}', space=sflag, size = 0x4, scoped, tag = 'scoped memory for tpu_custom_call.1']
    %18 = vsyncpa [#allocation4], 0
    // Predicated region
    $region2: #{tpu_custom_call.1} parent=1 // pred_check
      _
    $region3: #{tpu_custom_call.1} parent=1 // pred_check_branch
      %20 = sbr.rel (0) target = $region5
    $region4: #{tpu_custom_call.1} parent=1 // pred_region
      _
    $region5: #{tpu_custom_call.1} parent=1 // pred_fallthru
      _
    // Predicated region
    $region6: #{tpu_custom_call.1} parent=1 // pred_check
      _
    $region7: #{tpu_custom_call.1} parent=1 // pred_check_branch
      %22 = sbr.rel (0) target = $region9
    $region8: #{tpu_custom_call.1} parent=1 // pred_region
      _
    $region9: #{tpu_custom_call.1} parent=1 // pred_fallthru
      _
    // Predicated region
    $region10: #{tpu_custom_call.1} parent=1 // pred_check
      _
    $region11: #{tpu_custom_call.1} parent=1 // pred_check_branch
      %24 = sbr.rel (0) target = $region13
    $region12: #{tpu_custom_call.1} parent=1 // pred_region
      _
    $region13: #{tpu_custom_call.1} parent=1 // pred_fallthru
      _
    // Predicated region
    $region14: #{tpu_custom_call.1} parent=1 // pred_check
      _
    $region15: #{tpu_custom_call.1} parent=1 // pred_check_branch
      %26 = sbr.rel (0) target = $region17
    $region16: #{tpu_custom_call.1} parent=1 // pred_region
      _
    $region17: #{tpu_custom_call.1} parent=1 // pred_fallthru
      _
    // Predicated region
    $region18: #{tpu_custom_call.1} parent=1 // pred_check
      _
    $region19: #{tpu_custom_call.1} parent=1 // pred_check_branch
      %28 = sbr.rel (0) target = $region21
    $region20: #{tpu_custom_call.1} parent=1 // pred_region
      _
    $region21: #{tpu_custom_call.1} parent=1 // pred_fallthru
      _
    // Predicated region
    $region22: #{tpu_custom_call.1} parent=1 // pred_check
      _
    $region23: #{tpu_custom_call.1} parent=1 // pred_check_branch
      %30 = sbr.rel (0) target = $region25
    $region24: #{tpu_custom_call.1} parent=1 // pred_region
      _
    $region25: #{tpu_custom_call.1} parent=1 // pred_fallthru
      _
    // Predicated region
    $region26: #{tpu_custom_call.1} parent=1 // pred_check
      _
    $region27: #{tpu_custom_call.1} parent=1 // pred_check_branch
      %32 = sbr.rel (0) target = $region29
    $region28: #{tpu_custom_call.1} parent=1 // pred_region
      _
    $region29: #{tpu_custom_call.1} parent=1 // pred_fallthru
      _
    // Predicated region
    $region30: #{tpu_custom_call.1} parent=1 // pred_check
      _
    $region31: #{tpu_custom_call.1} parent=1 // pred_check_branch
      %34 = sbr.rel (0) target = $region33
    $region32: #{tpu_custom_call.1} parent=1 // pred_region
      _
    $region33: #{tpu_custom_call.1} parent=1 // pred_fallthru
      _
    // Predicated region
    $region34: #{tpu_custom_call.1} parent=1 // pred_check
      _
    $region35: #{tpu_custom_call.1} parent=1 // pred_check_branch
      %36 = sbr.rel (0) target = $region37
    $region36: #{tpu_custom_call.1} parent=1 // pred_region
      _
    $region37: #{tpu_custom_call.1} parent=1 // pred_fallthru
      _
    // Predicated region
    $region38: #{tpu_custom_call.1} parent=1 // pred_check
      _
    $region39: #{tpu_custom_call.1} parent=1 // pred_check_branch
      %38 = sbr.rel (0) target = $region41
    $region40: #{tpu_custom_call.1} parent=1 // pred_region
      _
    $region41: #{tpu_custom_call.1} parent=1 // pred_fallthru
      _
    // Predicated region
    $region42: #{tpu_custom_call.1} parent=1 // pred_check
      _
    $region43: #{tpu_custom_call.1} parent=1 // pred_check_branch
      %40 = sbr.rel (0) target = $region45
    $region44: #{tpu_custom_call.1} parent=1 // pred_region
      _
    $region45: #{tpu_custom_call.1} parent=1 // pred_fallthru
      _
    %v42 = vld [vmem:[%s0] sm:$0xf]
    %v43 = vld [vmem:[%s0 + $0x4] sm:$0xf]
    %v44 = vld [vmem:[%s0 + $0x8] sm:$0xf]
    %v45 = vld [vmem:[%s0 + $0xc] sm:$0xf]
    %v46 = vld [vmem:[%s0 + $0x10] sm:$0xf]
    %v47 = vld [vmem:[%s0 + $0x14] sm:$0xf]
    %v48 = vld [vmem:[%s0 + $0x18] sm:$0xf]
    %v49 = vld [vmem:[%s0 + $0x1c] sm:$0xf]
    %v50 = vld [vmem:[%s0 + $0x20] sm:$0xf]
    %v51 = vld [vmem:[%s0 + $0x24] sm:$0xf]
    %v52 = vld [vmem:[%s0 + $0x28] sm:$0xf]
    %v53 = vld [vmem:[%s0 + $0x2c] sm:$0xf]
    %v54 = vld [vmem:[%s0 + $0x30] sm:$0xf]
    %v55 = vld [vmem:[%s0 + $0x34] sm:$0xf]
    %v56 = vld [vmem:[%s0 + $0x38] sm:$0xf]
    %v57 = vld [vmem:[%s0 + $0x3c] sm:$0xf]
    %v58 = vld [vmem:[%s2] sm:$0xff]
    %v59 = vld [vmem:[%s2 + $0x8] sm:$0xff]
    %v60 = vld [vmem:[%s2 + $0x10] sm:$0xff]
    %v61 = vld [vmem:[%s2 + $0x18] sm:$0xff]
    %v62 = vld [vmem:[%s2 + $0x20] sm:$0xff]
    %v63 = vld [vmem:[%s2 + $0x28] sm:$0xff]
    %v64 = vld [vmem:[%s2 + $0x30] sm:$0xff]
    %v65 = vld [vmem:[%s2 + $0x38] sm:$0xff]
    %v66 = vld [vmem:[%s3] sm:$0x3]
    %v68 = vperm.slane %v66, 0
    %v69 = vperm.slane %v66, 1
    %v88 = vunpack.c.l.b16 %v42
    %v89 = vunpack.c.l.b16 %v43
    %v90 = vunpack.c.l.b16 %v44
    %v91 = vunpack.c.l.b16 %v45
    %v92 = vunpack.c.l.b16 %v46
    %v93 = vunpack.c.l.b16 %v47
    %v94 = vunpack.c.l.b16 %v48
    %v95 = vunpack.c.l.b16 %v49
    %v96 = vunpack.c.l.b16 %v50
    %v97 = vunpack.c.l.b16 %v51
    %v98 = vunpack.c.l.b16 %v52
    %v99 = vunpack.c.l.b16 %v53
    %v100 = vunpack.c.l.b16 %v54
    %v101 = vunpack.c.l.b16 %v55
    %v102 = vunpack.c.l.b16 %v56
    %v103 = vunpack.c.l.b16 %v57
    %v104 = vpack.c.b16 %v89, %v88
    %v105 = vpack.c.b16 %v91, %v90
    %v106 = vpack.c.b16 %v93, %v92
    %v107 = vpack.c.b16 %v95, %v94
    %v108 = vpack.c.b16 %v97, %v96
    %v109 = vpack.c.b16 %v99, %v98
    %v110 = vpack.c.b16 %v101, %v100
    %v111 = vpack.c.b16 %v103, %v102
    %v120 = vunpack.c.l.b16 %v58
    %v121 = vunpack.c.h.b16 %v58
    %v122 = vunpack.c.l.b16 %v59
    %v123 = vunpack.c.h.b16 %v59
    %v124 = vunpack.c.l.b16 %v60
    %v125 = vunpack.c.h.b16 %v60
    %v126 = vunpack.c.l.b16 %v61
    %v127 = vunpack.c.h.b16 %v61
    %v128 = vunpack.c.l.b16 %v62
    %v129 = vunpack.c.h.b16 %v62
    %v130 = vunpack.c.l.b16 %v63
    %v131 = vunpack.c.h.b16 %v63
    %v132 = vunpack.c.l.b16 %v64
    %v133 = vunpack.c.h.b16 %v64
    %v134 = vunpack.c.l.b16 %v65
    %v135 = vunpack.c.h.b16 %v65
    %v136 = vpack.c.b16 %v122, %v120
    %v137 = vpack.c.b16 %v123, %v121
    %v138 = vpack.c.b16 %v126, %v124
    %v139 = vpack.c.b16 %v127, %v125
    %v140 = vpack.c.b16 %v130, %v128
    %v141 = vpack.c.b16 %v131, %v129
    %v142 = vpack.c.b16 %v134, %v132
    %v143 = vpack.c.b16 %v135, %v133
    %vm152 = vcmask 523264
    %v154 = vsel %vm152, %v104, 0
    %v157 = vsel %vm152, %v105, 0
    %v160 = vsel %vm152, %v106, 0
    %v163 = vsel %vm152, %v107, 0
    %v166 = vsel %vm152, %v108, 0
    %v169 = vsel %vm152, %v109, 0
    %v172 = vsel %vm152, %v110, 0
    %v175 = vsel %vm152, %v111, 0
    %177 = vmatpush.bf16.msra.mxu0 0
    %178 = vmatpush.bf16.msra.mxu0 0
    %179 = vmatpush.bf16.msra.mxu0 0
    %180 = vmatpush.bf16.msra.mxu0 0
    %181 = vmatpush.bf16.msra.mxu0 %v142
    %182 = vmatpush.bf16.msra.mxu0 %v140
    %183 = vmatpush.bf16.msra.mxu0 %v138
    %184 = vmatpush.bf16.msra.mxu0 %v136
    %185 = vmatmul.bf16.gmra.mxu0 %v154
    %v186 = vpop.f32.mrf.mxu0
    %v187 = vadd.f32 %v68, %v186
    %v188 = vpop.f32.mrf.mxu0
    %v189 = vadd.f32 %v68, %v188
    %190 = vmatmul.bf16.gmra.mxu0 %v157
    %v191 = vpop.f32.mrf.mxu0
    %v192 = vadd.f32 %v68, %v191
    %v193 = vpop.f32.mrf.mxu0
    %v194 = vadd.f32 %v68, %v193
    %195 = vmatmul.bf16.gmra.mxu0 %v160
    %v196 = vpop.f32.mrf.mxu0
    %v197 = vadd.f32 %v68, %v196
    %v198 = vpop.f32.mrf.mxu0
    %v199 = vadd.f32 %v68, %v198
    %200 = vmatmul.bf16.gmra.mxu0 %v163
    %v201 = vpop.f32.mrf.mxu0
    %v202 = vadd.f32 %v68, %v201
    %v203 = vpop.f32.mrf.mxu0
    %v204 = vadd.f32 %v68, %v203
    %205 = vmatmul.bf16.gmra.mxu0 %v166
    %v206 = vpop.f32.mrf.mxu0
    %v207 = vadd.f32 %v68, %v206
    %v208 = vpop.f32.mrf.mxu0
    %v209 = vadd.f32 %v68, %v208
    %210 = vmatmul.bf16.gmra.mxu0 %v169
    %v211 = vpop.f32.mrf.mxu0
    %v212 = vadd.f32 %v68, %v211
    %v213 = vpop.f32.mrf.mxu0
    %v214 = vadd.f32 %v68, %v213
    %215 = vmatmul.bf16.gmra.mxu0 %v172
    %v216 = vpop.f32.mrf.mxu0
    %v217 = vadd.f32 %v68, %v216
    %v218 = vpop.f32.mrf.mxu0
    %v219 = vadd.f32 %v68, %v218
    %220 = vmatmul.bf16.gmra.mxu0 %v175
    %v221 = vpop.f32.mrf.mxu0
    %v222 = vadd.f32 %v68, %v221
    %v223 = vpop.f32.mrf.mxu0
    %v224 = vadd.f32 %v68, %v223
    %225 = vdwg.mxu0
    %226 = vmatpush.bf16.msra.mxu0 0
    %227 = vmatpush.bf16.msra.mxu0 0
    %228 = vmatpush.bf16.msra.mxu0 0
    %229 = vmatpush.bf16.msra.mxu0 0
    %230 = vmatpush.bf16.msra.mxu0 %v143
    %231 = vmatpush.bf16.msra.mxu0 %v141
    %232 = vmatpush.bf16.msra.mxu0 %v139
    %233 = vmatpush.bf16.msra.mxu0 %v137
    %234 = vmatmul.bf16.gmra.mxu0 %v154
    %v235 = vpop.f32.mrf.mxu0
    %v236 = vadd.f32 %v69, %v235
    %v237 = vpop.f32.mrf.mxu0
    %v238 = vadd.f32 %v69, %v237
    %239 = vmatmul.bf16.gmra.mxu0 %v157
    %v240 = vpop.f32.mrf.mxu0
    %v241 = vadd.f32 %v69, %v240
    %v242 = vpop.f32.mrf.mxu0
    %v243 = vadd.f32 %v69, %v242
    %244 = vmatmul.bf16.gmra.mxu0 %v160
    %v245 = vpop.f32.mrf.mxu0
    %v246 = vadd.f32 %v69, %v245
    %v247 = vpop.f32.mrf.mxu0
    %v248 = vadd.f32 %v69, %v247
    %249 = vmatmul.bf16.gmra.mxu0 %v163
    %v250 = vpop.f32.mrf.mxu0
    %v251 = vadd.f32 %v69, %v250
    %v252 = vpop.f32.mrf.mxu0
    %v253 = vadd.f32 %v69, %v252
    %254 = vmatmul.bf16.gmra.mxu0 %v166
    %v255 = vpop.f32.mrf.mxu0
    %v256 = vadd.f32 %v69, %v255
    %v257 = vpop.f32.mrf.mxu0
    %v258 = vadd.f32 %v69, %v257
    %259 = vmatmul.bf16.gmra.mxu0 %v169
    %v260 = vpop.f32.mrf.mxu0
    %v261 = vadd.f32 %v69, %v260
    %v262 = vpop.f32.mrf.mxu0
    %v263 = vadd.f32 %v69, %v262
    %264 = vmatmul.bf16.gmra.mxu0 %v172
    %v265 = vpop.f32.mrf.mxu0
    %v266 = vadd.f32 %v69, %v265
    %v267 = vpop.f32.mrf.mxu0
    %v268 = vadd.f32 %v69, %v267
    %269 = vmatmul.bf16.gmra.mxu0 %v175
    %v270 = vpop.f32.mrf.mxu0
    %v271 = vadd.f32 %v69, %v270
    %v272 = vpop.f32.mrf.mxu0
    %v273 = vadd.f32 %v69, %v272
    %274 = vdwg.mxu0
    %v275 = vmax.f32 %v187, 0.0
    %v276 = vmax.f32 %v236, 0.0
    %v277 = vmax.f32 %v189, 0.0
    %v278 = vmax.f32 %v238, 0.0
    %v279 = vmax.f32 %v192, 0.0
    %v280 = vmax.f32 %v241, 0.0
    %v281 = vmax.f32 %v194, 0.0
    %v282 = vmax.f32 %v243, 0.0
    %v283 = vmax.f32 %v197, 0.0
    %v284 = vmax.f32 %v246, 0.0
    %v285 = vmax.f32 %v199, 0.0
    %v286 = vmax.f32 %v248, 0.0
    %v287 = vmax.f32 %v202, 0.0
    %v288 = vmax.f32 %v251, 0.0
    %v289 = vmax.f32 %v204, 0.0
    %v290 = vmax.f32 %v253, 0.0
    %v291 = vmax.f32 %v207, 0.0
    %v292 = vmax.f32 %v256, 0.0
    %v293 = vmax.f32 %v209, 0.0
    %v294 = vmax.f32 %v258, 0.0
    %v295 = vmax.f32 %v212, 0.0
    %v296 = vmax.f32 %v261, 0.0
    %v297 = vmax.f32 %v214, 0.0
    %v298 = vmax.f32 %v263, 0.0
    %v299 = vmax.f32 %v217, 0.0
    %v300 = vmax.f32 %v266, 0.0
    %v301 = vmax.f32 %v219, 0.0
    %v302 = vmax.f32 %v268, 0.0
    %v303 = vmax.f32 %v222, 0.0
    %v304 = vmax.f32 %v271, 0.0
    %v305 = vmax.f32 %v224, 0.0
    %v306 = vmax.f32 %v273, 0.0
    %v307 = vld [vmem:[%s4] sm:$0xf]
    %v308 = vld [vmem:[%s4 + $0x4] sm:$0xf]
    %v309 = vld [vmem:[%s4 + $0x8] sm:$0xf]
    %v310 = vld [vmem:[%s4 + $0xc] sm:$0xf]
    %v311 = vld [vmem:[%s4 + $0x10] sm:$0xf]
    %v312 = vld [vmem:[%s4 + $0x14] sm:$0xf]
    %v313 = vld [vmem:[%s4 + $0x18] sm:$0xf]
    %v314 = vld [vmem:[%s4 + $0x1c] sm:$0xf]
    %v315 = vld [vmem:[%s4 + $0x20] sm:$0xf]
    %v316 = vld [vmem:[%s4 + $0x24] sm:$0xf]
    %v317 = vld [vmem:[%s4 + $0x28] sm:$0xf]
    %v318 = vld [vmem:[%s4 + $0x2c] sm:$0xf]
    %v319 = vld [vmem:[%s4 + $0x30] sm:$0xf]
    %v320 = vld [vmem:[%s4 + $0x34] sm:$0xf]
    %v321 = vld [vmem:[%s4 + $0x38] sm:$0xf]
    %v322 = vld [vmem:[%s4 + $0x3c] sm:$0xf]
    %v323 = vld [vmem:[%s4 + $0x40] sm:$0xf]
    %v324 = vld [vmem:[%s4 + $0x44] sm:$0xf]
    %v325 = vld [vmem:[%s4 + $0x48] sm:$0xf]
    %v326 = vld [vmem:[%s4 + $0x4c] sm:$0xf]
    %v327 = vld [vmem:[%s4 + $0x50] sm:$0xf]
    %v328 = vld [vmem:[%s4 + $0x54] sm:$0xf]
    %v329 = vld [vmem:[%s4 + $0x58] sm:$0xf]
    %v330 = vld [vmem:[%s4 + $0x5c] sm:$0xf]
    %v331 = vld [vmem:[%s4 + $0x60] sm:$0xf]
    %v332 = vld [vmem:[%s4 + $0x64] sm:$0xf]
    %v333 = vld [vmem:[%s4 + $0x68] sm:$0xf]
    %v334 = vld [vmem:[%s4 + $0x6c] sm:$0xf]
    %v335 = vld [vmem:[%s4 + $0x70] sm:$0xf]
    %v336 = vld [vmem:[%s4 + $0x74] sm:$0xf]
    %v337 = vld [vmem:[%s4 + $0x78] sm:$0xf]
    %v338 = vld [vmem:[%s4 + $0x7c] sm:$0xf]
    %v339 = vld [vmem:[%s1] sm:$0xf]
    %v340 = vld [vmem:[%s1 + $0x4] sm:$0xf]
    %v341 = vld [vmem:[%s1 + $0x8] sm:$0xf]
    %v342 = vld [vmem:[%s1 + $0xc] sm:$0xf]
    %v343 = vld [vmem:[%s1 + $0x10] sm:$0xf]
    %v344 = vld [vmem:[%s1 + $0x14] sm:$0xf]
    %v345 = vld [vmem:[%s1 + $0x18] sm:$0xf]
    %v346 = vld [vmem:[%s1 + $0x1c] sm:$0xf]
    %v347 = vld [vmem:[%s1 + $0x20] sm:$0xf]
    %v348 = vld [vmem:[%s1 + $0x24] sm:$0xf]
    %v349 = vld [vmem:[%s5] sm:$0xff]
    %v350 = vld [vmem:[%s5 + $0x8] sm:$0xff]
    %v351 = vld [vmem:[%s5 + $0x10] sm:$0xff]
    %v352 = vld [vmem:[%s5 + $0x18] sm:$0xff]
    %v353 = vld [vmem:[%s5 + $0x20] sm:$0xff]
    %v354 = vld [vmem:[%s5 + $0x28] sm:$0xff]
    %v355 = vld [vmem:[%s5 + $0x30] sm:$0xff]
    %v356 = vld [vmem:[%s5 + $0x38] sm:$0xff]
    %v357 = vld [vmem:[%s5 + $0x40] sm:$0xff]
    %v358 = vld [vmem:[%s5 + $0x48] sm:$0xff]
    %v359 = vld [vmem:[%s5 + $0x50] sm:$0xff]
    %v360 = vld [vmem:[%s5 + $0x58] sm:$0xff]
    %v361 = vld [vmem:[%s5 + $0x60] sm:$0xff]
    %v362 = vld [vmem:[%s5 + $0x68] sm:$0xff]
    %v363 = vld [vmem:[%s5 + $0x70] sm:$0xff]
    %v364 = vld [vmem:[%s5 + $0x78] sm:$0xff]
    %v365 = vld [vmem:[%s5 + $0x80] sm:$0xff]
    %v366 = vld [vmem:[%s5 + $0x88] sm:$0xff]
    %v367 = vld [vmem:[%s5 + $0x90] sm:$0xff]
    %v368 = vld [vmem:[%s5 + $0x98] sm:$0xff]
    %v369 = vld [vmem:[%s5 + $0xa0] sm:$0xff]
    %v370 = vld [vmem:[%s5 + $0xa8] sm:$0xff]
    %v371 = vld [vmem:[%s5 + $0xb0] sm:$0xff]
    %v372 = vld [vmem:[%s5 + $0xb8] sm:$0xff]
    %v373 = vld [vmem:[%s5 + $0xc0] sm:$0xff]
    %v374 = vld [vmem:[%s5 + $0xc8] sm:$0xff]
    %v375 = vld [vmem:[%s5 + $0xd0] sm:$0xff]
    %v376 = vld [vmem:[%s5 + $0xd8] sm:$0xff]
    %v377 = vld [vmem:[%s5 + $0xe0] sm:$0xff]
    %v378 = vld [vmem:[%s5 + $0xe8] sm:$0xff]
    %v379 = vld [vmem:[%s5 + $0xf0] sm:$0xff]
    %v380 = vld [vmem:[%s5 + $0xf8] sm:$0xff]
    %382 = vset.pattern.permute.xlu0 0
    %383 = vperm.xlu0 %382, %v349
    %v384 = vpop.permute.xlu0 %383
    %387 = vset.pattern.permute.xlu0 0
    %388 = vperm.xlu0 %387, %v350
    %v389 = vpop.permute.xlu0 %388
    %392 = vset.pattern.permute.xlu0 0
    %393 = vperm.xlu0 %392, %v351
    %v394 = vpop.permute.xlu0 %393
    %397 = vset.pattern.permute.xlu0 0
    %398 = vperm.xlu0 %397, %v352
    %v399 = vpop.permute.xlu0 %398
    %402 = vset.pattern.permute.xlu0 0
    %403 = vperm.xlu0 %402, %v353
    %v404 = vpop.permute.xlu0 %403
    %407 = vset.pattern.permute.xlu0 0
    %408 = vperm.xlu0 %407, %v354
    %v409 = vpop.permute.xlu0 %408
    %412 = vset.pattern.permute.xlu0 0
    %413 = vperm.xlu0 %412, %v355
    %v414 = vpop.permute.xlu0 %413
    %417 = vset.pattern.permute.xlu0 0
    %418 = vperm.xlu0 %417, %v356
    %v419 = vpop.permute.xlu0 %418
    %422 = vset.pattern.permute.xlu0 0
    %423 = vperm.xlu0 %422, %v357
    %v424 = vpop.permute.xlu0 %423
    %427 = vset.pattern.permute.xlu0 0
    %428 = vperm.xlu0 %427, %v358
    %v429 = vpop.permute.xlu0 %428
    %432 = vset.pattern.permute.xlu0 0
    %433 = vperm.xlu0 %432, %v359
    %v434 = vpop.permute.xlu0 %433
    %437 = vset.pattern.permute.xlu0 0
    %438 = vperm.xlu0 %437, %v360
    %v439 = vpop.permute.xlu0 %438
    %442 = vset.pattern.permute.xlu0 0
    %443 = vperm.xlu0 %442, %v361
    %v444 = vpop.permute.xlu0 %443
    %447 = vset.pattern.permute.xlu0 0
    %448 = vperm.xlu0 %447, %v362
    %v449 = vpop.permute.xlu0 %448
    %452 = vset.pattern.permute.xlu0 0
    %453 = vperm.xlu0 %452, %v363
    %v454 = vpop.permute.xlu0 %453
    %457 = vset.pattern.permute.xlu0 0
    %458 = vperm.xlu0 %457, %v364
    %v459 = vpop.permute.xlu0 %458
    %462 = vset.pattern.permute.xlu0 0
    %463 = vperm.xlu0 %462, %v365
    %v464 = vpop.permute.xlu0 %463
    %467 = vset.pattern.permute.xlu0 0
    %468 = vperm.xlu0 %467, %v366
    %v469 = vpop.permute.xlu0 %468
    %472 = vset.pattern.permute.xlu0 0
    %473 = vperm.xlu0 %472, %v367
    %v474 = vpop.permute.xlu0 %473
    %477 = vset.pattern.permute.xlu0 0
    %478 = vperm.xlu0 %477, %v368
    %v479 = vpop.permute.xlu0 %478
    %482 = vset.pattern.permute.xlu0 0
    %483 = vperm.xlu0 %482, %v369
    %v484 = vpop.permute.xlu0 %483
    %487 = vset.pattern.permute.xlu0 0
    %488 = vperm.xlu0 %487, %v370
    %v489 = vpop.permute.xlu0 %488
    %492 = vset.pattern.permute.xlu0 0
    %493 = vperm.xlu0 %492, %v371
    %v494 = vpop.permute.xlu0 %493
    %497 = vset.pattern.permute.xlu0 0
    %498 = vperm.xlu0 %497, %v372
    %v499 = vpop.permute.xlu0 %498
    %502 = vset.pattern.permute.xlu0 0
    %503 = vperm.xlu0 %502, %v373
    %v504 = vpop.permute.xlu0 %503
    %507 = vset.pattern.permute.xlu0 0
    %508 = vperm.xlu0 %507, %v374
    %v509 = vpop.permute.xlu0 %508
    %512 = vset.pattern.permute.xlu0 0
    %513 = vperm.xlu0 %512, %v375
    %v514 = vpop.permute.xlu0 %513
    %517 = vset.pattern.permute.xlu0 0
    %518 = vperm.xlu0 %517, %v376
    %v519 = vpop.permute.xlu0 %518
    %522 = vset.pattern.permute.xlu0 0
    %523 = vperm.xlu0 %522, %v377
    %v524 = vpop.permute.xlu0 %523
    %527 = vset.pattern.permute.xlu0 0
    %528 = vperm.xlu0 %527, %v378
    %v529 = vpop.permute.xlu0 %528
    %532 = vset.pattern.permute.xlu0 0
    %533 = vperm.xlu0 %532, %v379
    %v534 = vpop.permute.xlu0 %533
    %537 = vset.pattern.permute.xlu0 0
    %538 = vperm.xlu0 %537, %v380
    %v539 = vpop.permute.xlu0 %538
    %v573 = vunpack.c.l.b16 %v307
    %v574 = vunpack.c.l.b16 %v308
    %v575 = vunpack.c.l.b16 %v309
    %v576 = vunpack.c.l.b16 %v310
    %v577 = vunpack.c.l.b16 %v311
    %v578 = vunpack.c.l.b16 %v312
    %v579 = vunpack.c.l.b16 %v313
    %v580 = vunpack.c.l.b16 %v314
    %v581 = vunpack.c.l.b16 %v315
    %v582 = vunpack.c.l.b16 %v316
    %v583 = vunpack.c.l.b16 %v317
    %v584 = vunpack.c.l.b16 %v318
    %v585 = vunpack.c.l.b16 %v319
    %v586 = vunpack.c.l.b16 %v320
    %v587 = vunpack.c.l.b16 %v321
    %v588 = vunpack.c.l.b16 %v322
    %v589 = vunpack.c.l.b16 %v323
    %v590 = vunpack.c.l.b16 %v324
    %v591 = vunpack.c.l.b16 %v325
    %v592 = vunpack.c.l.b16 %v326
    %v593 = vunpack.c.l.b16 %v327
    %v594 = vunpack.c.l.b16 %v328
    %v595 = vunpack.c.l.b16 %v329
    %v596 = vunpack.c.l.b16 %v330
    %v597 = vunpack.c.l.b16 %v331
    %v598 = vunpack.c.l.b16 %v332
    %v599 = vunpack.c.l.b16 %v333
    %v600 = vunpack.c.l.b16 %v334
    %v601 = vunpack.c.l.b16 %v335
    %v602 = vunpack.c.l.b16 %v336
    %v603 = vunpack.c.l.b16 %v337
    %v604 = vunpack.c.l.b16 %v338
    %v605 = vpack.c.b16 %v574, %v573
    %v606 = vpack.c.b16 %v576, %v575
    %v607 = vpack.c.b16 %v578, %v577
    %v608 = vpack.c.b16 %v580, %v579
    %v609 = vpack.c.b16 %v582, %v581
    %v610 = vpack.c.b16 %v584, %v583
    %v611 = vpack.c.b16 %v586, %v585
    %v612 = vpack.c.b16 %v588, %v587
    %v613 = vpack.c.b16 %v590, %v589
    %v614 = vpack.c.b16 %v592, %v591
    %v615 = vpack.c.b16 %v594, %v593
    %v616 = vpack.c.b16 %v596, %v595
    %v617 = vpack.c.b16 %v598, %v597
    %v618 = vpack.c.b16 %v600, %v599
    %v619 = vpack.c.b16 %v602, %v601
    %v620 = vpack.c.b16 %v604, %v603
    %v631 = vunpack.c.l.b16 %v339
    %v632 = vunpack.c.l.b16 %v340
    %v633 = vunpack.c.l.b16 %v341
    %v634 = vunpack.c.l.b16 %v342
    %v635 = vunpack.c.l.b16 %v343
    %v636 = vunpack.c.l.b16 %v344
    %v637 = vunpack.c.l.b16 %v345
    %v638 = vunpack.c.l.b16 %v346
    %v639 = vunpack.c.l.b16 %v347
    %v640 = vunpack.c.l.b16 %v348
    %v641 = vpack.c.b16 %v632, %v631
    %v642 = vpack.c.b16 %v634, %v633
    %v643 = vpack.c.b16 %v636, %v635
    %v644 = vpack.c.b16 %v638, %v637
    %v645 = vpack.c.b16 %v640, %v639
    %vm651 = vcmask 654336
    %v653 = vsel %vm651, %v605, 0
    %v656 = vsel %vm651, %v606, 0
    %v659 = vsel %vm651, %v607, 0
    %v662 = vsel %vm651, %v608, 0
    %v665 = vsel %vm651, %v609, 0
    %v668 = vsel %vm651, %v610, 0
    %v671 = vsel %vm651, %v611, 0
    %v674 = vsel %vm651, %v612, 0
    %v677 = vsel %vm651, %v613, 0
    %v680 = vsel %vm651, %v614, 0
    %v683 = vsel %vm651, %v615, 0
    %v686 = vsel %vm651, %v616, 0
    %v689 = vsel %vm651, %v617, 0
    %v692 = vsel %vm651, %v618, 0
    %v695 = vsel %vm651, %v619, 0
    %v698 = vsel %vm651, %v620, 0
    %700 = vmatpush.bf16.msra.mxu0 0
    %701 = vmatpush.bf16.msra.mxu0 0
    %702 = vmatpush.bf16.msra.mxu0 0
    %703 = vmatpush.bf16.msra.mxu0 %v645
    %704 = vmatpush.bf16.msra.mxu0 %v644
    %705 = vmatpush.bf16.msra.mxu0 %v643
    %706 = vmatpush.bf16.msra.mxu0 %v642
    %707 = vmatpush.bf16.msra.mxu0 %v641
    %708 = vmatmul.bf16.gmra.mxu0 %v653
    %v709 = vpop.f32.mrf.mxu0
    %v710 = vadd.f32 %v384, %v709
    %v711 = vpop.f32.mrf.mxu0
    %v712 = vadd.f32 %v389, %v711
    %713 = vmatmul.bf16.gmra.mxu0 %v656
    %v714 = vpop.f32.mrf.mxu0
    %v715 = vadd.f32 %v394, %v714
    %v716 = vpop.f32.mrf.mxu0
    %v717 = vadd.f32 %v399, %v716
    %718 = vmatmul.bf16.gmra.mxu0 %v659
    %v719 = vpop.f32.mrf.mxu0
    %v720 = vadd.f32 %v404, %v719
    %v721 = vpop.f32.mrf.mxu0
    %v722 = vadd.f32 %v409, %v721
    %723 = vmatmul.bf16.gmra.mxu0 %v662
    %v724 = vpop.f32.mrf.mxu0
    %v725 = vadd.f32 %v414, %v724
    %v726 = vpop.f32.mrf.mxu0
    %v727 = vadd.f32 %v419, %v726
    %728 = vmatmul.bf16.gmra.mxu0 %v665
    %v729 = vpop.f32.mrf.mxu0
    %v730 = vadd.f32 %v424, %v729
    %v731 = vpop.f32.mrf.mxu0
    %v732 = vadd.f32 %v429, %v731
    %733 = vmatmul.bf16.gmra.mxu0 %v668
    %v734 = vpop.f32.mrf.mxu0
    %v735 = vadd.f32 %v434, %v734
    %v736 = vpop.f32.mrf.mxu0
    %v737 = vadd.f32 %v439, %v736
    %738 = vmatmul.bf16.gmra.mxu0 %v671
    %v739 = vpop.f32.mrf.mxu0
    %v740 = vadd.f32 %v444, %v739
    %v741 = vpop.f32.mrf.mxu0
    %v742 = vadd.f32 %v449, %v741
    %743 = vmatmul.bf16.gmra.mxu0 %v674
    %v744 = vpop.f32.mrf.mxu0
    %v745 = vadd.f32 %v454, %v744
    %v746 = vpop.f32.mrf.mxu0
    %v747 = vadd.f32 %v459, %v746
    %748 = vmatmul.bf16.gmra.mxu0 %v677
    %v749 = vpop.f32.mrf.mxu0
    %v750 = vadd.f32 %v464, %v749
    %v751 = vpop.f32.mrf.mxu0
    %v752 = vadd.f32 %v469, %v751
    %753 = vmatmul.bf16.gmra.mxu0 %v680
    %v754 = vpop.f32.mrf.mxu0
    %v755 = vadd.f32 %v474, %v754
    %v756 = vpop.f32.mrf.mxu0
    %v757 = vadd.f32 %v479, %v756
    %758 = vmatmul.bf16.gmra.mxu0 %v683
    %v759 = vpop.f32.mrf.mxu0
    %v760 = vadd.f32 %v484, %v759
    %v761 = vpop.f32.mrf.mxu0
    %v762 = vadd.f32 %v489, %v761
    %763 = vmatmul.bf16.gmra.mxu0 %v686
    %v764 = vpop.f32.mrf.mxu0
    %v765 = vadd.f32 %v494, %v764
    %v766 = vpop.f32.mrf.mxu0
    %v767 = vadd.f32 %v499, %v766
    %768 = vmatmul.bf16.gmra.mxu0 %v689
    %v769 = vpop.f32.mrf.mxu0
    %v770 = vadd.f32 %v504, %v769
    %v771 = vpop.f32.mrf.mxu0
    %v772 = vadd.f32 %v509, %v771
    %773 = vmatmul.bf16.gmra.mxu0 %v692
    %v774 = vpop.f32.mrf.mxu0
    %v775 = vadd.f32 %v514, %v774
    %v776 = vpop.f32.mrf.mxu0
    %v777 = vadd.f32 %v519, %v776
    %778 = vmatmul.bf16.gmra.mxu0 %v695
    %v779 = vpop.f32.mrf.mxu0
    %v780 = vadd.f32 %v524, %v779
    %v781 = vpop.f32.mrf.mxu0
    %v782 = vadd.f32 %v529, %v781
    %783 = vmatmul.bf16.gmra.mxu0 %v698
    %v784 = vpop.f32.mrf.mxu0
    %v785 = vadd.f32 %v534, %v784
    %v786 = vpop.f32.mrf.mxu0
    %v787 = vadd.f32 %v539, %v786
    %788 = vdwg.mxu0
    %v789 = vmax.f32 %v710, 0.0
    %v790 = vmax.f32 %v712, 0.0
    %v791 = vmax.f32 %v715, 0.0
    %v792 = vmax.f32 %v717, 0.0
    %v793 = vmax.f32 %v720, 0.0
    %v794 = vmax.f32 %v722, 0.0
    %v795 = vmax.f32 %v725, 0.0
    %v796 = vmax.f32 %v727, 0.0
    %v797 = vmax.f32 %v730, 0.0
    %v798 = vmax.f32 %v732, 0.0
    %v799 = vmax.f32 %v735, 0.0
    %v800 = vmax.f32 %v737, 0.0
    %v801 = vmax.f32 %v740, 0.0
    %v802 = vmax.f32 %v742, 0.0
    %v803 = vmax.f32 %v745, 0.0
    %v804 = vmax.f32 %v747, 0.0
    %v805 = vmax.f32 %v750, 0.0
    %v806 = vmax.f32 %v752, 0.0
    %v807 = vmax.f32 %v755, 0.0
    %v808 = vmax.f32 %v757, 0.0
    %v809 = vmax.f32 %v760, 0.0
    %v810 = vmax.f32 %v762, 0.0
    %v811 = vmax.f32 %v765, 0.0
    %v812 = vmax.f32 %v767, 0.0
    %v813 = vmax.f32 %v770, 0.0
    %v814 = vmax.f32 %v772, 0.0
    %v815 = vmax.f32 %v775, 0.0
    %v816 = vmax.f32 %v777, 0.0
    %v817 = vmax.f32 %v780, 0.0
    %v818 = vmax.f32 %v782, 0.0
    %v819 = vmax.f32 %v785, 0.0
    %v820 = vmax.f32 %v787, 0.0
    %v821 = vld [vmem:[%s6] sm:$0xff]
    %v822 = vld [vmem:[%s6 + $0x8] sm:$0xff]
    %v823 = vld [vmem:[%s6 + $0x10] sm:$0xff]
    %v824 = vld [vmem:[%s6 + $0x18] sm:$0xff]
    %v825 = vld [vmem:[%s6 + $0x20] sm:$0xff]
    %v826 = vld [vmem:[%s6 + $0x28] sm:$0xff]
    %v827 = vld [vmem:[%s6 + $0x30] sm:$0xff]
    %v828 = vld [vmem:[%s6 + $0x38] sm:$0xff]
    %v829 = vld [vmem:[%s6 + $0x40] sm:$0xff]
    %v830 = vld [vmem:[%s6 + $0x48] sm:$0xff]
    %v831 = vld [vmem:[%s6 + $0x50] sm:$0xff]
    %v832 = vld [vmem:[%s6 + $0x58] sm:$0xff]
    %v833 = vld [vmem:[%s6 + $0x60] sm:$0xff]
    %v834 = vld [vmem:[%s6 + $0x68] sm:$0xff]
    %v835 = vld [vmem:[%s6 + $0x70] sm:$0xff]
    %v836 = vld [vmem:[%s6 + $0x78] sm:$0xff]
    %v837 = vld [vmem:[%s6 + $0x80] sm:$0xff]
    %v838 = vld [vmem:[%s6 + $0x88] sm:$0xff]
    %v839 = vld [vmem:[%s6 + $0x90] sm:$0xff]
    %v840 = vld [vmem:[%s6 + $0x98] sm:$0xff]
    %v841 = vld [vmem:[%s6 + $0xa0] sm:$0xff]
    %v842 = vld [vmem:[%s6 + $0xa8] sm:$0xff]
    %v843 = vld [vmem:[%s6 + $0xb0] sm:$0xff]
    %v844 = vld [vmem:[%s6 + $0xb8] sm:$0xff]
    %v845 = vld [vmem:[%s6 + $0xc0] sm:$0xff]
    %v846 = vld [vmem:[%s6 + $0xc8] sm:$0xff]
    %v847 = vld [vmem:[%s6 + $0xd0] sm:$0xff]
    %v848 = vld [vmem:[%s6 + $0xd8] sm:$0xff]
    %v849 = vld [vmem:[%s6 + $0xe0] sm:$0xff]
    %v850 = vld [vmem:[%s6 + $0xe8] sm:$0xff]
    %v851 = vld [vmem:[%s6 + $0xf0] sm:$0xff]
    %v852 = vld [vmem:[%s6 + $0xf8] sm:$0xff]
    %854 = vset.pattern.permute.xlu0 0
    %855 = vperm.xlu0 %854, %v821
    %v856 = vpop.permute.xlu0 %855
    %859 = vset.pattern.permute.xlu0 0
    %860 = vperm.xlu0 %859, %v822
    %v861 = vpop.permute.xlu0 %860
    %864 = vset.pattern.permute.xlu0 0
    %865 = vperm.xlu0 %864, %v823
    %v866 = vpop.permute.xlu0 %865
    %869 = vset.pattern.permute.xlu0 0
    %870 = vperm.xlu0 %869, %v824
    %v871 = vpop.permute.xlu0 %870
    %874 = vset.pattern.permute.xlu0 0
    %875 = vperm.xlu0 %874, %v825
    %v876 = vpop.permute.xlu0 %875
    %879 = vset.pattern.permute.xlu0 0
    %880 = vperm.xlu0 %879, %v826
    %v881 = vpop.permute.xlu0 %880
    %884 = vset.pattern.permute.xlu0 0
    %885 = vperm.xlu0 %884, %v827
    %v886 = vpop.permute.xlu0 %885
    %889 = vset.pattern.permute.xlu0 0
    %890 = vperm.xlu0 %889, %v828
    %v891 = vpop.permute.xlu0 %890
    %894 = vset.pattern.permute.xlu0 0
    %895 = vperm.xlu0 %894, %v829
    %v896 = vpop.permute.xlu0 %895
    %899 = vset.pattern.permute.xlu0 0
    %900 = vperm.xlu0 %899, %v830
    %v901 = vpop.permute.xlu0 %900
    %904 = vset.pattern.permute.xlu0 0
    %905 = vperm.xlu0 %904, %v831
    %v906 = vpop.permute.xlu0 %905
    %909 = vset.pattern.permute.xlu0 0
    %910 = vperm.xlu0 %909, %v832
    %v911 = vpop.permute.xlu0 %910
    %914 = vset.pattern.permute.xlu0 0
    %915 = vperm.xlu0 %914, %v833
    %v916 = vpop.permute.xlu0 %915
    %919 = vset.pattern.permute.xlu0 0
    %920 = vperm.xlu0 %919, %v834
    %v921 = vpop.permute.xlu0 %920
    %924 = vset.pattern.permute.xlu0 0
    %925 = vperm.xlu0 %924, %v835
    %v926 = vpop.permute.xlu0 %925
    %929 = vset.pattern.permute.xlu0 0
    %930 = vperm.xlu0 %929, %v836
    %v931 = vpop.permute.xlu0 %930
    %934 = vset.pattern.permute.xlu0 0
    %935 = vperm.xlu0 %934, %v837
    %v936 = vpop.permute.xlu0 %935
    %939 = vset.pattern.permute.xlu0 0
    %940 = vperm.xlu0 %939, %v838
    %v941 = vpop.permute.xlu0 %940
    %944 = vset.pattern.permute.xlu0 0
    %945 = vperm.xlu0 %944, %v839
    %v946 = vpop.permute.xlu0 %945
    %949 = vset.pattern.permute.xlu0 0
    %950 = vperm.xlu0 %949, %v840
    %v951 = vpop.permute.xlu0 %950
    %954 = vset.pattern.permute.xlu0 0
    %955 = vperm.xlu0 %954, %v841
    %v956 = vpop.permute.xlu0 %955
    %959 = vset.pattern.permute.xlu0 0
    %960 = vperm.xlu0 %959, %v842
    %v961 = vpop.permute.xlu0 %960
    %964 = vset.pattern.permute.xlu0 0
    %965 = vperm.xlu0 %964, %v843
    %v966 = vpop.permute.xlu0 %965
    %969 = vset.pattern.permute.xlu0 0
    %970 = vperm.xlu0 %969, %v844
    %v971 = vpop.permute.xlu0 %970
    %974 = vset.pattern.permute.xlu0 0
    %975 = vperm.xlu0 %974, %v845
    %v976 = vpop.permute.xlu0 %975
    %979 = vset.pattern.permute.xlu0 0
    %980 = vperm.xlu0 %979, %v846
    %v981 = vpop.permute.xlu0 %980
    %984 = vset.pattern.permute.xlu0 0
    %985 = vperm.xlu0 %984, %v847
    %v986 = vpop.permute.xlu0 %985
    %989 = vset.pattern.permute.xlu0 0
    %990 = vperm.xlu0 %989, %v848
    %v991 = vpop.permute.xlu0 %990
    %994 = vset.pattern.permute.xlu0 0
    %995 = vperm.xlu0 %994, %v849
    %v996 = vpop.permute.xlu0 %995
    %999 = vset.pattern.permute.xlu0 0
    %1000 = vperm.xlu0 %999, %v850
    %v1001 = vpop.permute.xlu0 %1000
    %1004 = vset.pattern.permute.xlu0 0
    %1005 = vperm.xlu0 %1004, %v851
    %v1006 = vpop.permute.xlu0 %1005
    %1009 = vset.pattern.permute.xlu0 0
    %1010 = vperm.xlu0 %1009, %v852
    %v1011 = vpop.permute.xlu0 %1010
    %v1013 = vmul.f32 %v789, %v856
    %v1014 = vmul.f32 %v790, %v861
    %v1015 = vmul.f32 %v791, %v866
    %v1016 = vmul.f32 %v792, %v871
    %v1017 = vmul.f32 %v793, %v876
    %v1018 = vmul.f32 %v794, %v881
    %v1019 = vmul.f32 %v795, %v886
    %v1020 = vmul.f32 %v796, %v891
    %v1021 = vmul.f32 %v797, %v896
    %v1022 = vmul.f32 %v798, %v901
    %v1023 = vmul.f32 %v799, %v906
    %v1024 = vmul.f32 %v800, %v911
    %v1025 = vmul.f32 %v801, %v916
    %v1026 = vmul.f32 %v802, %v921
    %v1027 = vmul.f32 %v803, %v926
    %v1028 = vmul.f32 %v804, %v931
    %v1029 = vmul.f32 %v805, %v936
    %v1030 = vmul.f32 %v806, %v941
    %v1031 = vmul.f32 %v807, %v946
    %v1032 = vmul.f32 %v808, %v951
    %v1033 = vmul.f32 %v809, %v956
    %v1034 = vmul.f32 %v810, %v961
    %v1035 = vmul.f32 %v811, %v966
    %v1036 = vmul.f32 %v812, %v971
    %v1037 = vmul.f32 %v813, %v976
    %v1038 = vmul.f32 %v814, %v981
    %v1039 = vmul.f32 %v815, %v986
    %v1040 = vmul.f32 %v816, %v991
    %v1041 = vmul.f32 %v817, %v996
    %v1042 = vmul.f32 %v818, %v1001
    %v1043 = vmul.f32 %v819, %v1006
    %v1044 = vmul.f32 %v820, %v1011
    %s1045 = scalar_lea.vmem %s2, 64
    %v1046 = vld [vmem:[%s1045] sm:$0xff]
    %v1047 = vld [vmem:[%s1045 + $0x8] sm:$0xff]
    %v1048 = vld [vmem:[%s1045 + $0x10] sm:$0xff]
    %v1049 = vld [vmem:[%s1045 + $0x18] sm:$0xff]
    %v1050 = vld [vmem:[%s1045 + $0x20] sm:$0xff]
    %v1051 = vld [vmem:[%s1045 + $0x28] sm:$0xff]
    %v1052 = vld [vmem:[%s1045 + $0x30] sm:$0xff]
    %v1053 = vld [vmem:[%s1045 + $0x38] sm:$0xff]
    %s1054 = scalar_lea.vmem %s3, 2
    %v1055 = vld [vmem:[%s1054] sm:$0x3]
    %v1057 = vperm.slane %v1055, 0
    %v1058 = vperm.slane %v1055, 1
    %v1069 = vunpack.c.l.b16 %v1046
    %v1070 = vunpack.c.h.b16 %v1046
    %v1071 = vunpack.c.l.b16 %v1047
    %v1072 = vunpack.c.h.b16 %v1047
    %v1073 = vunpack.c.l.b16 %v1048
    %v1074 = vunpack.c.h.b16 %v1048
    %v1075 = vunpack.c.l.b16 %v1049
    %v1076 = vunpack.c.h.b16 %v1049
    %v1077 = vunpack.c.l.b16 %v1050
    %v1078 = vunpack.c.h.b16 %v1050
    %v1079 = vunpack.c.l.b16 %v1051
    %v1080 = vunpack.c.h.b16 %v1051
    %v1081 = vunpack.c.l.b16 %v1052
    %v1082 = vunpack.c.h.b16 %v1052
    %v1083 = vunpack.c.l.b16 %v1053
    %v1084 = vunpack.c.h.b16 %v1053
    %v1085 = vpack.c.b16 %v1071, %v1069
    %v1086 = vpack.c.b16 %v1072, %v1070
    %v1087 = vpack.c.b16 %v1075, %v1073
    %v1088 = vpack.c.b16 %v1076, %v1074
    %v1089 = vpack.c.b16 %v1079, %v1077
    %v1090 = vpack.c.b16 %v1080, %v1078
    %v1091 = vpack.c.b16 %v1083, %v1081
    %v1092 = vpack.c.b16 %v1084, %v1082
    %1101 = vmatpush.bf16.msra.mxu0 0
    %1102 = vmatpush.bf16.msra.mxu0 0
    %1103 = vmatpush.bf16.msra.mxu0 0
    %1104 = vmatpush.bf16.msra.mxu0 0
    %1105 = vmatpush.bf16.msra.mxu0 %v1091
    %1106 = vmatpush.bf16.msra.mxu0 %v1089
    %1107 = vmatpush.bf16.msra.mxu0 %v1087
    %1108 = vmatpush.bf16.msra.mxu0 %v1085
    %1109 = vmatmul.bf16.gmra.mxu0 %v154
    %v1110 = vpop.f32.mrf.mxu0
    %v1111 = vadd.f32 %v1057, %v1110
    %v1112 = vpop.f32.mrf.mxu0
    %v1113 = vadd.f32 %v1057, %v1112
    %1114 = vmatmul.bf16.gmra.mxu0 %v157
    %v1115 = vpop.f32.mrf.mxu0
    %v1116 = vadd.f32 %v1057, %v1115
    %v1117 = vpop.f32.mrf.mxu0
    %v1118 = vadd.f32 %v1057, %v1117
    %1119 = vmatmul.bf16.gmra.mxu0 %v160
    %v1120 = vpop.f32.mrf.mxu0
    %v1121 = vadd.f32 %v1057, %v1120
    %v1122 = vpop.f32.mrf.mxu0
    %v1123 = vadd.f32 %v1057, %v1122
    %1124 = vmatmul.bf16.gmra.mxu0 %v163
    %v1125 = vpop.f32.mrf.mxu0
    %v1126 = vadd.f32 %v1057, %v1125
    %v1127 = vpop.f32.mrf.mxu0
    %v1128 = vadd.f32 %v1057, %v1127
    %1129 = vmatmul.bf16.gmra.mxu0 %v166
    %v1130 = vpop.f32.mrf.mxu0
    %v1131 = vadd.f32 %v1057, %v1130
    %v1132 = vpop.f32.mrf.mxu0
    %v1133 = vadd.f32 %v1057, %v1132
    %1134 = vmatmul.bf16.gmra.mxu0 %v169
    %v1135 = vpop.f32.mrf.mxu0
    %v1136 = vadd.f32 %v1057, %v1135
    %v1137 = vpop.f32.mrf.mxu0
    %v1138 = vadd.f32 %v1057, %v1137
    %1139 = vmatmul.bf16.gmra.mxu0 %v172
    %v1140 = vpop.f32.mrf.mxu0
    %v1141 = vadd.f32 %v1057, %v1140
    %v1142 = vpop.f32.mrf.mxu0
    %v1143 = vadd.f32 %v1057, %v1142
    %1144 = vmatmul.bf16.gmra.mxu0 %v175
    %v1145 = vpop.f32.mrf.mxu0
    %v1146 = vadd.f32 %v1057, %v1145
    %v1147 = vpop.f32.mrf.mxu0
    %v1148 = vadd.f32 %v1057, %v1147
    %1149 = vdwg.mxu0
    %1150 = vmatpush.bf16.msra.mxu0 0
    %1151 = vmatpush.bf16.msra.mxu0 0
    %1152 = vmatpush.bf16.msra.mxu0 0
    %1153 = vmatpush.bf16.msra.mxu0 0
    %1154 = vmatpush.bf16.msra.mxu0 %v1092
    %1155 = vmatpush.bf16.msra.mxu0 %v1090
    %1156 = vmatpush.bf16.msra.mxu0 %v1088
    %1157 = vmatpush.bf16.msra.mxu0 %v1086
    %1158 = vmatmul.bf16.gmra.mxu0 %v154
    %v1159 = vpop.f32.mrf.mxu0
    %v1160 = vadd.f32 %v1058, %v1159
    %v1161 = vpop.f32.mrf.mxu0
    %v1162 = vadd.f32 %v1058, %v1161
    %1163 = vmatmul.bf16.gmra.mxu0 %v157
    %v1164 = vpop.f32.mrf.mxu0
    %v1165 = vadd.f32 %v1058, %v1164
    %v1166 = vpop.f32.mrf.mxu0
    %v1167 = vadd.f32 %v1058, %v1166
    %1168 = vmatmul.bf16.gmra.mxu0 %v160
    %v1169 = vpop.f32.mrf.mxu0
    %v1170 = vadd.f32 %v1058, %v1169
    %v1171 = vpop.f32.mrf.mxu0
    %v1172 = vadd.f32 %v1058, %v1171
    %1173 = vmatmul.bf16.gmra.mxu0 %v163
    %v1174 = vpop.f32.mrf.mxu0
    %v1175 = vadd.f32 %v1058, %v1174
    %v1176 = vpop.f32.mrf.mxu0
    %v1177 = vadd.f32 %v1058, %v1176
    %1178 = vmatmul.bf16.gmra.mxu0 %v166
    %v1179 = vpop.f32.mrf.mxu0
    %v1180 = vadd.f32 %v1058, %v1179
    %v1181 = vpop.f32.mrf.mxu0
    %v1182 = vadd.f32 %v1058, %v1181
    %1183 = vmatmul.bf16.gmra.mxu0 %v169
    %v1184 = vpop.f32.mrf.mxu0
    %v1185 = vadd.f32 %v1058, %v1184
    %v1186 = vpop.f32.mrf.mxu0
    %v1187 = vadd.f32 %v1058, %v1186
    %1188 = vmatmul.bf16.gmra.mxu0 %v172
    %v1189 = vpop.f32.mrf.mxu0
    %v1190 = vadd.f32 %v1058, %v1189
    %v1191 = vpop.f32.mrf.mxu0
    %v1192 = vadd.f32 %v1058, %v1191
    %1193 = vmatmul.bf16.gmra.mxu0 %v175
    %v1194 = vpop.f32.mrf.mxu0
    %v1195 = vadd.f32 %v1058, %v1194
    %v1196 = vpop.f32.mrf.mxu0
    %v1197 = vadd.f32 %v1058, %v1196
    %1198 = vdwg.mxu0
    %v1199 = vmax.f32 %v1111, 0.0
    %v1200 = vmax.f32 %v1160, 0.0
    %v1201 = vmax.f32 %v1113, 0.0
    %v1202 = vmax.f32 %v1162, 0.0
    %v1203 = vmax.f32 %v1116, 0.0
    %v1204 = vmax.f32 %v1165, 0.0
    %v1205 = vmax.f32 %v1118, 0.0
    %v1206 = vmax.f32 %v1167, 0.0
    %v1207 = vmax.f32 %v1121, 0.0
    %v1208 = vmax.f32 %v1170, 0.0
    %v1209 = vmax.f32 %v1123, 0.0
    %v1210 = vmax.f32 %v1172, 0.0
    %v1211 = vmax.f32 %v1126, 0.0
    %v1212 = vmax.f32 %v1175, 0.0
    %v1213 = vmax.f32 %v1128, 0.0
    %v1214 = vmax.f32 %v1177, 0.0
    %v1215 = vmax.f32 %v1131, 0.0
    %v1216 = vmax.f32 %v1180, 0.0
    %v1217 = vmax.f32 %v1133, 0.0
    %v1218 = vmax.f32 %v1182, 0.0
    %v1219 = vmax.f32 %v1136, 0.0
    %v1220 = vmax.f32 %v1185, 0.0
    %v1221 = vmax.f32 %v1138, 0.0
    %v1222 = vmax.f32 %v1187, 0.0
    %v1223 = vmax.f32 %v1141, 0.0
    %v1224 = vmax.f32 %v1190, 0.0
    %v1225 = vmax.f32 %v1143, 0.0
    %v1226 = vmax.f32 %v1192, 0.0
    %v1227 = vmax.f32 %v1146, 0.0
    %v1228 = vmax.f32 %v1195, 0.0
    %v1229 = vmax.f32 %v1148, 0.0
    %v1230 = vmax.f32 %v1197, 0.0
    %s1231 = scalar_lea.vmem %s4, 128
    %v1232 = vld [vmem:[%s1231] sm:$0xf]
    %v1233 = vld [vmem:[%s1231 + $0x4] sm:$0xf]
    %v1234 = vld [vmem:[%s1231 + $0x8] sm:$0xf]
    %v1235 = vld [vmem:[%s1231 + $0xc] sm:$0xf]
    %v1236 = vld [vmem:[%s1231 + $0x10] sm:$0xf]
    %v1237 = vld [vmem:[%s1231 + $0x14] sm:$0xf]
    %v1238 = vld [vmem:[%s1231 + $0x18] sm:$0xf]
    %v1239 = vld [vmem:[%s1231 + $0x1c] sm:$0xf]
    %v1240 = vld [vmem:[%s1231 + $0x20] sm:$0xf]
    %v1241 = vld [vmem:[%s1231 + $0x24] sm:$0xf]
    %v1242 = vld [vmem:[%s1231 + $0x28] sm:$0xf]
    %v1243 = vld [vmem:[%s1231 + $0x2c] sm:$0xf]
    %v1244 = vld [vmem:[%s1231 + $0x30] sm:$0xf]
    %v1245 = vld [vmem:[%s1231 + $0x34] sm:$0xf]
    %v1246 = vld [vmem:[%s1231 + $0x38] sm:$0xf]
    %v1247 = vld [vmem:[%s1231 + $0x3c] sm:$0xf]
    %v1248 = vld [vmem:[%s1231 + $0x40] sm:$0xf]
    %v1249 = vld [vmem:[%s1231 + $0x44] sm:$0xf]
    %v1250 = vld [vmem:[%s1231 + $0x48] sm:$0xf]
    %v1251 = vld [vmem:[%s1231 + $0x4c] sm:$0xf]
    %v1252 = vld [vmem:[%s1231 + $0x50] sm:$0xf]
    %v1253 = vld [vmem:[%s1231 + $0x54] sm:$0xf]
    %v1254 = vld [vmem:[%s1231 + $0x58] sm:$0xf]
    %v1255 = vld [vmem:[%s1231 + $0x5c] sm:$0xf]
    %v1256 = vld [vmem:[%s1231 + $0x60] sm:$0xf]
    %v1257 = vld [vmem:[%s1231 + $0x64] sm:$0xf]
    %v1258 = vld [vmem:[%s1231 + $0x68] sm:$0xf]
    %v1259 = vld [vmem:[%s1231 + $0x6c] sm:$0xf]
    %v1260 = vld [vmem:[%s1231 + $0x70] sm:$0xf]
    %v1261 = vld [vmem:[%s1231 + $0x74] sm:$0xf]
    %v1262 = vld [vmem:[%s1231 + $0x78] sm:$0xf]
    %v1263 = vld [vmem:[%s1231 + $0x7c] sm:$0xf]
    %s1264 = scalar_lea.vmem %s5, 256
    %v1265 = vld [vmem:[%s1264] sm:$0xff]
    %v1266 = vld [vmem:[%s1264 + $0x8] sm:$0xff]
    %v1267 = vld [vmem:[%s1264 + $0x10] sm:$0xff]
    %v1268 = vld [vmem:[%s1264 + $0x18] sm:$0xff]
    %v1269 = vld [vmem:[%s1264 + $0x20] sm:$0xff]
    %v1270 = vld [vmem:[%s1264 + $0x28] sm:$0xff]
    %v1271 = vld [vmem:[%s1264 + $0x30] sm:$0xff]
    %v1272 = vld [vmem:[%s1264 + $0x38] sm:$0xff]
    %v1273 = vld [vmem:[%s1264 + $0x40] sm:$0xff]
    %v1274 = vld [vmem:[%s1264 + $0x48] sm:$0xff]
    %v1275 = vld [vmem:[%s1264 + $0x50] sm:$0xff]
    %v1276 = vld [vmem:[%s1264 + $0x58] sm:$0xff]
    %v1277 = vld [vmem:[%s1264 + $0x60] sm:$0xff]
    %v1278 = vld [vmem:[%s1264 + $0x68] sm:$0xff]
    %v1279 = vld [vmem:[%s1264 + $0x70] sm:$0xff]
    %v1280 = vld [vmem:[%s1264 + $0x78] sm:$0xff]
    %v1281 = vld [vmem:[%s1264 + $0x80] sm:$0xff]
    %v1282 = vld [vmem:[%s1264 + $0x88] sm:$0xff]
    %v1283 = vld [vmem:[%s1264 + $0x90] sm:$0xff]
    %v1284 = vld [vmem:[%s1264 + $0x98] sm:$0xff]
    %v1285 = vld [vmem:[%s1264 + $0xa0] sm:$0xff]
    %v1286 = vld [vmem:[%s1264 + $0xa8] sm:$0xff]
    %v1287 = vld [vmem:[%s1264 + $0xb0] sm:$0xff]
    %v1288 = vld [vmem:[%s1264 + $0xb8] sm:$0xff]
    %v1289 = vld [vmem:[%s1264 + $0xc0] sm:$0xff]
    %v1290 = vld [vmem:[%s1264 + $0xc8] sm:$0xff]
    %v1291 = vld [vmem:[%s1264 + $0xd0] sm:$0xff]
    %v1292 = vld [vmem:[%s1264 + $0xd8] sm:$0xff]
    %v1293 = vld [vmem:[%s1264 + $0xe0] sm:$0xff]
    %v1294 = vld [vmem:[%s1264 + $0xe8] sm:$0xff]
    %v1295 = vld [vmem:[%s1264 + $0xf0] sm:$0xff]
    %v1296 = vld [vmem:[%s1264 + $0xf8] sm:$0xff]
    %1298 = vset.pattern.permute.xlu0 0
    %1299 = vperm.xlu0 %1298, %v1265
    %v1300 = vpop.permute.xlu0 %1299
    %1303 = vset.pattern.permute.xlu0 0
    %1304 = vperm.xlu0 %1303, %v1266
    %v1305 = vpop.permute.xlu0 %1304
    %1308 = vset.pattern.permute.xlu0 0
    %1309 = vperm.xlu0 %1308, %v1267
    %v1310 = vpop.permute.xlu0 %1309
    %1313 = vset.pattern.permute.xlu0 0
    %1314 = vperm.xlu0 %1313, %v1268
    %v1315 = vpop.permute.xlu0 %1314
    %1318 = vset.pattern.permute.xlu0 0
    %1319 = vperm.xlu0 %1318, %v1269
    %v1320 = vpop.permute.xlu0 %1319
    %1323 = vset.pattern.permute.xlu0 0
    %1324 = vperm.xlu0 %1323, %v1270
    %v1325 = vpop.permute.xlu0 %1324
    %1328 = vset.pattern.permute.xlu0 0
    %1329 = vperm.xlu0 %1328, %v1271
    %v1330 = vpop.permute.xlu0 %1329
    %1333 = vset.pattern.permute.xlu0 0
    %1334 = vperm.xlu0 %1333, %v1272
    %v1335 = vpop.permute.xlu0 %1334
    %1338 = vset.pattern.permute.xlu0 0
    %1339 = vperm.xlu0 %1338, %v1273
    %v1340 = vpop.permute.xlu0 %1339
    %1343 = vset.pattern.permute.xlu0 0
    %1344 = vperm.xlu0 %1343, %v1274
    %v1345 = vpop.permute.xlu0 %1344
    %1348 = vset.pattern.permute.xlu0 0
    %1349 = vperm.xlu0 %1348, %v1275
    %v1350 = vpop.permute.xlu0 %1349
    %1353 = vset.pattern.permute.xlu0 0
    %1354 = vperm.xlu0 %1353, %v1276
    %v1355 = vpop.permute.xlu0 %1354
    %1358 = vset.pattern.permute.xlu0 0
    %1359 = vperm.xlu0 %1358, %v1277
    %v1360 = vpop.permute.xlu0 %1359
    %1363 = vset.pattern.permute.xlu0 0
    %1364 = vperm.xlu0 %1363, %v1278
    %v1365 = vpop.permute.xlu0 %1364
    %1368 = vset.pattern.permute.xlu0 0
    %1369 = vperm.xlu0 %1368, %v1279
    %v1370 = vpop.permute.xlu0 %1369
    %1373 = vset.pattern.permute.xlu0 0
    %1374 = vperm.xlu0 %1373, %v1280
    %v1375 = vpop.permute.xlu0 %1374
    %1378 = vset.pattern.permute.xlu0 0
    %1379 = vperm.xlu0 %1378, %v1281
    %v1380 = vpop.permute.xlu0 %1379
    %1383 = vset.pattern.permute.xlu0 0
    %1384 = vperm.xlu0 %1383, %v1282
    %v1385 = vpop.permute.xlu0 %1384
    %1388 = vset.pattern.permute.xlu0 0
    %1389 = vperm.xlu0 %1388, %v1283
    %v1390 = vpop.permute.xlu0 %1389
    %1393 = vset.pattern.permute.xlu0 0
    %1394 = vperm.xlu0 %1393, %v1284
    %v1395 = vpop.permute.xlu0 %1394
    %1398 = vset.pattern.permute.xlu0 0
    %1399 = vperm.xlu0 %1398, %v1285
    %v1400 = vpop.permute.xlu0 %1399
    %1403 = vset.pattern.permute.xlu0 0
    %1404 = vperm.xlu0 %1403, %v1286
    %v1405 = vpop.permute.xlu0 %1404
    %1408 = vset.pattern.permute.xlu0 0
    %1409 = vperm.xlu0 %1408, %v1287
    %v1410 = vpop.permute.xlu0 %1409
    %1413 = vset.pattern.permute.xlu0 0
    %1414 = vperm.xlu0 %1413, %v1288
    %v1415 = vpop.permute.xlu0 %1414
    %1418 = vset.pattern.permute.xlu0 0
    %1419 = vperm.xlu0 %1418, %v1289
    %v1420 = vpop.permute.xlu0 %1419
    %1423 = vset.pattern.permute.xlu0 0
    %1424 = vperm.xlu0 %1423, %v1290
    %v1425 = vpop.permute.xlu0 %1424
    %1428 = vset.pattern.permute.xlu0 0
    %1429 = vperm.xlu0 %1428, %v1291
    %v1430 = vpop.permute.xlu0 %1429
    %1433 = vset.pattern.permute.xlu0 0
    %1434 = vperm.xlu0 %1433, %v1292
    %v1435 = vpop.permute.xlu0 %1434
    %1438 = vset.pattern.permute.xlu0 0
    %1439 = vperm.xlu0 %1438, %v1293
    %v1440 = vpop.permute.xlu0 %1439
    %1443 = vset.pattern.permute.xlu0 0
    %1444 = vperm.xlu0 %1443, %v1294
    %v1445 = vpop.permute.xlu0 %1444
    %1448 = vset.pattern.permute.xlu0 0
    %1449 = vperm.xlu0 %1448, %v1295
    %v1450 = vpop.permute.xlu0 %1449
    %1453 = vset.pattern.permute.xlu0 0
    %1454 = vperm.xlu0 %1453, %v1296
    %v1455 = vpop.permute.xlu0 %1454
    %v1489 = vunpack.c.l.b16 %v1232
    %v1490 = vunpack.c.l.b16 %v1233
    %v1491 = vunpack.c.l.b16 %v1234
    %v1492 = vunpack.c.l.b16 %v1235
    %v1493 = vunpack.c.l.b16 %v1236
    %v1494 = vunpack.c.l.b16 %v1237
    %v1495 = vunpack.c.l.b16 %v1238
    %v1496 = vunpack.c.l.b16 %v1239
    %v1497 = vunpack.c.l.b16 %v1240
    %v1498 = vunpack.c.l.b16 %v1241
    %v1499 = vunpack.c.l.b16 %v1242
    %v1500 = vunpack.c.l.b16 %v1243
    %v1501 = vunpack.c.l.b16 %v1244
    %v1502 = vunpack.c.l.b16 %v1245
    %v1503 = vunpack.c.l.b16 %v1246
    %v1504 = vunpack.c.l.b16 %v1247
    %v1505 = vunpack.c.l.b16 %v1248
    %v1506 = vunpack.c.l.b16 %v1249
    %v1507 = vunpack.c.l.b16 %v1250
    %v1508 = vunpack.c.l.b16 %v1251
    %v1509 = vunpack.c.l.b16 %v1252
    %v1510 = vunpack.c.l.b16 %v1253
    %v1511 = vunpack.c.l.b16 %v1254
    %v1512 = vunpack.c.l.b16 %v1255
    %v1513 = vunpack.c.l.b16 %v1256
    %v1514 = vunpack.c.l.b16 %v1257
    %v1515 = vunpack.c.l.b16 %v1258
    %v1516 = vunpack.c.l.b16 %v1259
    %v1517 = vunpack.c.l.b16 %v1260
    %v1518 = vunpack.c.l.b16 %v1261
    %v1519 = vunpack.c.l.b16 %v1262
    %v1520 = vunpack.c.l.b16 %v1263
    %v1521 = vpack.c.b16 %v1490, %v1489
    %v1522 = vpack.c.b16 %v1492, %v1491
    %v1523 = vpack.c.b16 %v1494, %v1493
    %v1524 = vpack.c.b16 %v1496, %v1495
    %v1525 = vpack.c.b16 %v1498, %v1497
    %v1526 = vpack.c.b16 %v1500, %v1499
    %v1527 = vpack.c.b16 %v1502, %v1501
    %v1528 = vpack.c.b16 %v1504, %v1503
    %v1529 = vpack.c.b16 %v1506, %v1505
    %v1530 = vpack.c.b16 %v1508, %v1507
    %v1531 = vpack.c.b16 %v1510, %v1509
    %v1532 = vpack.c.b16 %v1512, %v1511
    %v1533 = vpack.c.b16 %v1514, %v1513
    %v1534 = vpack.c.b16 %v1516, %v1515
    %v1535 = vpack.c.b16 %v1518, %v1517
    %v1536 = vpack.c.b16 %v1520, %v1519
    %v1538 = vsel %vm651, %v1521, 0
    %v1541 = vsel %vm651, %v1522, 0
    %v1544 = vsel %vm651, %v1523, 0
    %v1547 = vsel %vm651, %v1524, 0
    %v1550 = vsel %vm651, %v1525, 0
    %v1553 = vsel %vm651, %v1526, 0
    %v1556 = vsel %vm651, %v1527, 0
    %v1559 = vsel %vm651, %v1528, 0
    %v1562 = vsel %vm651, %v1529, 0
    %v1565 = vsel %vm651, %v1530, 0
    %v1568 = vsel %vm651, %v1531, 0
    %v1571 = vsel %vm651, %v1532, 0
    %v1574 = vsel %vm651, %v1533, 0
    %v1577 = vsel %vm651, %v1534, 0
    %v1580 = vsel %vm651, %v1535, 0
    %v1583 = vsel %vm651, %v1536, 0
    %1585 = vmatpush.bf16.msra.mxu0 0
    %1586 = vmatpush.bf16.msra.mxu0 0
    %1587 = vmatpush.bf16.msra.mxu0 0
    %1588 = vmatpush.bf16.msra.mxu0 %v645
    %1589 = vmatpush.bf16.msra.mxu0 %v644
    %1590 = vmatpush.bf16.msra.mxu0 %v643
    %1591 = vmatpush.bf16.msra.mxu0 %v642
    %1592 = vmatpush.bf16.msra.mxu0 %v641
    %1593 = vmatmul.bf16.gmra.mxu0 %v1538
    %v1594 = vpop.f32.mrf.mxu0
    %v1595 = vadd.f32 %v1300, %v1594
    %v1596 = vpop.f32.mrf.mxu0
    %v1597 = vadd.f32 %v1305, %v1596
    %1598 = vmatmul.bf16.gmra.mxu0 %v1541
    %v1599 = vpop.f32.mrf.mxu0
    %v1600 = vadd.f32 %v1310, %v1599
    %v1601 = vpop.f32.mrf.mxu0
    %v1602 = vadd.f32 %v1315, %v1601
    %1603 = vmatmul.bf16.gmra.mxu0 %v1544
    %v1604 = vpop.f32.mrf.mxu0
    %v1605 = vadd.f32 %v1320, %v1604
    %v1606 = vpop.f32.mrf.mxu0
    %v1607 = vadd.f32 %v1325, %v1606
    %1608 = vmatmul.bf16.gmra.mxu0 %v1547
    %v1609 = vpop.f32.mrf.mxu0
    %v1610 = vadd.f32 %v1330, %v1609
    %v1611 = vpop.f32.mrf.mxu0
    %v1612 = vadd.f32 %v1335, %v1611
    %1613 = vmatmul.bf16.gmra.mxu0 %v1550
    %v1614 = vpop.f32.mrf.mxu0
    %v1615 = vadd.f32 %v1340, %v1614
    %v1616 = vpop.f32.mrf.mxu0
    %v1617 = vadd.f32 %v1345, %v1616
    %1618 = vmatmul.bf16.gmra.mxu0 %v1553
    %v1619 = vpop.f32.mrf.mxu0
    %v1620 = vadd.f32 %v1350, %v1619
    %v1621 = vpop.f32.mrf.mxu0
    %v1622 = vadd.f32 %v1355, %v1621
    %1623 = vmatmul.bf16.gmra.mxu0 %v1556
    %v1624 = vpop.f32.mrf.mxu0
    %v1625 = vadd.f32 %v1360, %v1624
    %v1626 = vpop.f32.mrf.mxu0
    %v1627 = vadd.f32 %v1365, %v1626
    %1628 = vmatmul.bf16.gmra.mxu0 %v1559
    %v1629 = vpop.f32.mrf.mxu0
    %v1630 = vadd.f32 %v1370, %v1629
    %v1631 = vpop.f32.mrf.mxu0
    %v1632 = vadd.f32 %v1375, %v1631
    %1633 = vmatmul.bf16.gmra.mxu0 %v1562
    %v1634 = vpop.f32.mrf.mxu0
    %v1635 = vadd.f32 %v1380, %v1634
    %v1636 = vpop.f32.mrf.mxu0
    %v1637 = vadd.f32 %v1385, %v1636
    %1638 = vmatmul.bf16.gmra.mxu0 %v1565
    %v1639 = vpop.f32.mrf.mxu0
    %v1640 = vadd.f32 %v1390, %v1639
    %v1641 = vpop.f32.mrf.mxu0
    %v1642 = vadd.f32 %v1395, %v1641
    %1643 = vmatmul.bf16.gmra.mxu0 %v1568
    %v1644 = vpop.f32.mrf.mxu0
    %v1645 = vadd.f32 %v1400, %v1644
    %v1646 = vpop.f32.mrf.mxu0
    %v1647 = vadd.f32 %v1405, %v1646
    %1648 = vmatmul.bf16.gmra.mxu0 %v1571
    %v1649 = vpop.f32.mrf.mxu0
    %v1650 = vadd.f32 %v1410, %v1649
    %v1651 = vpop.f32.mrf.mxu0
    %v1652 = vadd.f32 %v1415, %v1651
    %1653 = vmatmul.bf16.gmra.mxu0 %v1574
    %v1654 = vpop.f32.mrf.mxu0
    %v1655 = vadd.f32 %v1420, %v1654
    %v1656 = vpop.f32.mrf.mxu0
    %v1657 = vadd.f32 %v1425, %v1656
    %1658 = vmatmul.bf16.gmra.mxu0 %v1577
    %v1659 = vpop.f32.mrf.mxu0
    %v1660 = vadd.f32 %v1430, %v1659
    %v1661 = vpop.f32.mrf.mxu0
    %v1662 = vadd.f32 %v1435, %v1661
    %1663 = vmatmul.bf16.gmra.mxu0 %v1580
    %v1664 = vpop.f32.mrf.mxu0
    %v1665 = vadd.f32 %v1440, %v1664
    %v1666 = vpop.f32.mrf.mxu0
    %v1667 = vadd.f32 %v1445, %v1666
    %1668 = vmatmul.bf16.gmra.mxu0 %v1583
    %v1669 = vpop.f32.mrf.mxu0
    %v1670 = vadd.f32 %v1450, %v1669
    %v1671 = vpop.f32.mrf.mxu0
    %v1672 = vadd.f32 %v1455, %v1671
    %1673 = vdwg.mxu0
    %v1674 = vmax.f32 %v1595, 0.0
    %v1675 = vmax.f32 %v1597, 0.0
    %v1676 = vmax.f32 %v1600, 0.0
    %v1677 = vmax.f32 %v1602, 0.0
    %v1678 = vmax.f32 %v1605, 0.0
    %v1679 = vmax.f32 %v1607, 0.0
    %v1680 = vmax.f32 %v1610, 0.0
    %v1681 = vmax.f32 %v1612, 0.0
    %v1682 = vmax.f32 %v1615, 0.0
    %v1683 = vmax.f32 %v1617, 0.0
    %v1684 = vmax.f32 %v1620, 0.0
    %v1685 = vmax.f32 %v1622, 0.0
    %v1686 = vmax.f32 %v1625, 0.0
    %v1687 = vmax.f32 %v1627, 0.0
    %v1688 = vmax.f32 %v1630, 0.0
    %v1689 = vmax.f32 %v1632, 0.0
    %v1690 = vmax.f32 %v1635, 0.0
    %v1691 = vmax.f32 %v1637, 0.0
    %v1692 = vmax.f32 %v1640, 0.0
    %v1693 = vmax.f32 %v1642, 0.0
    %v1694 = vmax.f32 %v1645, 0.0
    %v1695 = vmax.f32 %v1647, 0.0
    %v1696 = vmax.f32 %v1650, 0.0
    %v1697 = vmax.f32 %v1652, 0.0
    %v1698 = vmax.f32 %v1655, 0.0
    %v1699 = vmax.f32 %v1657, 0.0
    %v1700 = vmax.f32 %v1660, 0.0
    %v1701 = vmax.f32 %v1662, 0.0
    %v1702 = vmax.f32 %v1665, 0.0
    %v1703 = vmax.f32 %v1667, 0.0
    %v1704 = vmax.f32 %v1670, 0.0
    %v1705 = vmax.f32 %v1672, 0.0
    %s1706 = scalar_lea.vmem %s6, 256
    %v1707 = vld [vmem:[%s1706] sm:$0xff]
    %v1708 = vld [vmem:[%s1706 + $0x8] sm:$0xff]
    %v1709 = vld [vmem:[%s1706 + $0x10] sm:$0xff]
    %v1710 = vld [vmem:[%s1706 + $0x18] sm:$0xff]
    %v1711 = vld [vmem:[%s1706 + $0x20] sm:$0xff]
    %v1712 = vld [vmem:[%s1706 + $0x28] sm:$0xff]
    %v1713 = vld [vmem:[%s1706 + $0x30] sm:$0xff]
    %v1714 = vld [vmem:[%s1706 + $0x38] sm:$0xff]
    %v1715 = vld [vmem:[%s1706 + $0x40] sm:$0xff]
    %v1716 = vld [vmem:[%s1706 + $0x48] sm:$0xff]
    %v1717 = vld [vmem:[%s1706 + $0x50] sm:$0xff]
    %v1718 = vld [vmem:[%s1706 + $0x58] sm:$0xff]
    %v1719 = vld [vmem:[%s1706 + $0x60] sm:$0xff]
    %v1720 = vld [vmem:[%s1706 + $0x68] sm:$0xff]
    %v1721 = vld [vmem:[%s1706 + $0x70] sm:$0xff]
    %v1722 = vld [vmem:[%s1706 + $0x78] sm:$0xff]
    %v1723 = vld [vmem:[%s1706 + $0x80] sm:$0xff]
    %v1724 = vld [vmem:[%s1706 + $0x88] sm:$0xff]
    %v1725 = vld [vmem:[%s1706 + $0x90] sm:$0xff]
    %v1726 = vld [vmem:[%s1706 + $0x98] sm:$0xff]
    %v1727 = vld [vmem:[%s1706 + $0xa0] sm:$0xff]
    %v1728 = vld [vmem:[%s1706 + $0xa8] sm:$0xff]
    %v1729 = vld [vmem:[%s1706 + $0xb0] sm:$0xff]
    %v1730 = vld [vmem:[%s1706 + $0xb8] sm:$0xff]
    %v1731 = vld [vmem:[%s1706 + $0xc0] sm:$0xff]
    %v1732 = vld [vmem:[%s1706 + $0xc8] sm:$0xff]
    %v1733 = vld [vmem:[%s1706 + $0xd0] sm:$0xff]
    %v1734 = vld [vmem:[%s1706 + $0xd8] sm:$0xff]
    %v1735 = vld [vmem:[%s1706 + $0xe0] sm:$0xff]
    %v1736 = vld [vmem:[%s1706 + $0xe8] sm:$0xff]
    %v1737 = vld [vmem:[%s1706 + $0xf0] sm:$0xff]
    %v1738 = vld [vmem:[%s1706 + $0xf8] sm:$0xff]
    %1740 = vset.pattern.permute.xlu0 0
    %1741 = vperm.xlu0 %1740, %v1707
    %v1742 = vpop.permute.xlu0 %1741
    %1745 = vset.pattern.permute.xlu0 0
    %1746 = vperm.xlu0 %1745, %v1708
    %v1747 = vpop.permute.xlu0 %1746
    %1750 = vset.pattern.permute.xlu0 0
    %1751 = vperm.xlu0 %1750, %v1709
    %v1752 = vpop.permute.xlu0 %1751
    %1755 = vset.pattern.permute.xlu0 0
    %1756 = vperm.xlu0 %1755, %v1710
    %v1757 = vpop.permute.xlu0 %1756
    %1760 = vset.pattern.permute.xlu0 0
    %1761 = vperm.xlu0 %1760, %v1711
    %v1762 = vpop.permute.xlu0 %1761
    %1765 = vset.pattern.permute.xlu0 0
    %1766 = vperm.xlu0 %1765, %v1712
    %v1767 = vpop.permute.xlu0 %1766
    %1770 = vset.pattern.permute.xlu0 0
    %1771 = vperm.xlu0 %1770, %v1713
    %v1772 = vpop.permute.xlu0 %1771
    %1775 = vset.pattern.permute.xlu0 0
    %1776 = vperm.xlu0 %1775, %v1714
    %v1777 = vpop.permute.xlu0 %1776
    %1780 = vset.pattern.permute.xlu0 0
    %1781 = vperm.xlu0 %1780, %v1715
    %v1782 = vpop.permute.xlu0 %1781
    %1785 = vset.pattern.permute.xlu0 0
    %1786 = vperm.xlu0 %1785, %v1716
    %v1787 = vpop.permute.xlu0 %1786
    %1790 = vset.pattern.permute.xlu0 0
    %1791 = vperm.xlu0 %1790, %v1717
    %v1792 = vpop.permute.xlu0 %1791
    %1795 = vset.pattern.permute.xlu0 0
    %1796 = vperm.xlu0 %1795, %v1718
    %v1797 = vpop.permute.xlu0 %1796
    %1800 = vset.pattern.permute.xlu0 0
    %1801 = vperm.xlu0 %1800, %v1719
    %v1802 = vpop.permute.xlu0 %1801
    %1805 = vset.pattern.permute.xlu0 0
    %1806 = vperm.xlu0 %1805, %v1720
    %v1807 = vpop.permute.xlu0 %1806
    %1810 = vset.pattern.permute.xlu0 0
    %1811 = vperm.xlu0 %1810, %v1721
    %v1812 = vpop.permute.xlu0 %1811
    %1815 = vset.pattern.permute.xlu0 0
    %1816 = vperm.xlu0 %1815, %v1722
    %v1817 = vpop.permute.xlu0 %1816
    %1820 = vset.pattern.permute.xlu0 0
    %1821 = vperm.xlu0 %1820, %v1723
    %v1822 = vpop.permute.xlu0 %1821
    %1825 = vset.pattern.permute.xlu0 0
    %1826 = vperm.xlu0 %1825, %v1724
    %v1827 = vpop.permute.xlu0 %1826
    %1830 = vset.pattern.permute.xlu0 0
    %1831 = vperm.xlu0 %1830, %v1725
    %v1832 = vpop.permute.xlu0 %1831
    %1835 = vset.pattern.permute.xlu0 0
    %1836 = vperm.xlu0 %1835, %v1726
    %v1837 = vpop.permute.xlu0 %1836
    %1840 = vset.pattern.permute.xlu0 0
    %1841 = vperm.xlu0 %1840, %v1727
    %v1842 = vpop.permute.xlu0 %1841
    %1845 = vset.pattern.permute.xlu0 0
    %1846 = vperm.xlu0 %1845, %v1728
    %v1847 = vpop.permute.xlu0 %1846
    %1850 = vset.pattern.permute.xlu0 0
    %1851 = vperm.xlu0 %1850, %v1729
    %v1852 = vpop.permute.xlu0 %1851
    %1855 = vset.pattern.permute.xlu0 0
    %1856 = vperm.xlu0 %1855, %v1730
    %v1857 = vpop.permute.xlu0 %1856
    %1860 = vset.pattern.permute.xlu0 0
    %1861 = vperm.xlu0 %1860, %v1731
    %v1862 = vpop.permute.xlu0 %1861
    %1865 = vset.pattern.permute.xlu0 0
    %1866 = vperm.xlu0 %1865, %v1732
    %v1867 = vpop.permute.xlu0 %1866
    %1870 = vset.pattern.permute.xlu0 0
    %1871 = vperm.xlu0 %1870, %v1733
    %v1872 = vpop.permute.xlu0 %1871
    %1875 = vset.pattern.permute.xlu0 0
    %1876 = vperm.xlu0 %1875, %v1734
    %v1877 = vpop.permute.xlu0 %1876
    %1880 = vset.pattern.permute.xlu0 0
    %1881 = vperm.xlu0 %1880, %v1735
    %v1882 = vpop.permute.xlu0 %1881
    %1885 = vset.pattern.permute.xlu0 0
    %1886 = vperm.xlu0 %1885, %v1736
    %v1887 = vpop.permute.xlu0 %1886
    %1890 = vset.pattern.permute.xlu0 0
    %1891 = vperm.xlu0 %1890, %v1737
    %v1892 = vpop.permute.xlu0 %1891
    %1895 = vset.pattern.permute.xlu0 0
    %1896 = vperm.xlu0 %1895, %v1738
    %v1897 = vpop.permute.xlu0 %1896
    %v1899 = vmul.f32 %v1674, %v1742
    %v1900 = vmul.f32 %v1675, %v1747
    %v1901 = vmul.f32 %v1676, %v1752
    %v1902 = vmul.f32 %v1677, %v1757
    %v1903 = vmul.f32 %v1678, %v1762
    %v1904 = vmul.f32 %v1679, %v1767
    %v1905 = vmul.f32 %v1680, %v1772
    %v1906 = vmul.f32 %v1681, %v1777
    %v1907 = vmul.f32 %v1682, %v1782
    %v1908 = vmul.f32 %v1683, %v1787
    %v1909 = vmul.f32 %v1684, %v1792
    %v1910 = vmul.f32 %v1685, %v1797
    %v1911 = vmul.f32 %v1686, %v1802
    %v1912 = vmul.f32 %v1687, %v1807
    %v1913 = vmul.f32 %v1688, %v1812
    %v1914 = vmul.f32 %v1689, %v1817
    %v1915 = vmul.f32 %v1690, %v1822
    %v1916 = vmul.f32 %v1691, %v1827
    %v1917 = vmul.f32 %v1692, %v1832
    %v1918 = vmul.f32 %v1693, %v1837
    %v1919 = vmul.f32 %v1694, %v1842
    %v1920 = vmul.f32 %v1695, %v1847
    %v1921 = vmul.f32 %v1696, %v1852
    %v1922 = vmul.f32 %v1697, %v1857
    %v1923 = vmul.f32 %v1698, %v1862
    %v1924 = vmul.f32 %v1699, %v1867
    %v1925 = vmul.f32 %v1700, %v1872
    %v1926 = vmul.f32 %v1701, %v1877
    %v1927 = vmul.f32 %v1702, %v1882
    %v1928 = vmul.f32 %v1703, %v1887
    %v1929 = vmul.f32 %v1704, %v1892
    %v1930 = vmul.f32 %v1705, %v1897
    %1931 = vmatpush.msra.mxu0 %v1914
    %1932 = vmatpush.msra.mxu0 %v1913
    %1933 = vmatpush.msra.mxu0 %v1912
    %1934 = vmatpush.msra.mxu0 %v1911
    %1935 = vmatpush.msra.mxu0 %v1910
    %1936 = vmatpush.msra.mxu0 %v1909
    %1937 = vmatpush.msra.mxu0 %v1908
    %1938 = vmatpush.msra.mxu0 %v1907
    %1939 = vmatpush.msra.mxu0 %v1906
    %1940 = vmatpush.msra.mxu0 %v1905
    %1941 = vmatpush.msra.mxu0 %v1904
    %1942 = vmatpush.msra.mxu0 %v1903
    %1943 = vmatpush.msra.mxu0 %v1902
    %1944 = vmatpush.msra.mxu0 %v1901
    %1945 = vmatpush.msra.mxu0 %v1900
    %1946 = vmatpush.msra.mxu0 %v1899
    %1947 = vmatmul.f32.gmra.mxu0 %v1199
    %v1948 = vpop.f32.mrf.mxu0
    %v1949 = vadd.f32 0.0, %v1948
    %1950 = vmatmul.f32.gmra.mxu0 %v1201
    %v1951 = vpop.f32.mrf.mxu0
    %v1952 = vadd.f32 0.0, %v1951
    %1953 = vmatmul.f32.gmra.mxu0 %v1203
    %v1954 = vpop.f32.mrf.mxu0
    %v1955 = vadd.f32 0.0, %v1954
    %1956 = vmatmul.f32.gmra.mxu0 %v1205
    %v1957 = vpop.f32.mrf.mxu0
    %v1958 = vadd.f32 0.0, %v1957
    %1959 = vmatmul.f32.gmra.mxu0 %v1207
    %v1960 = vpop.f32.mrf.mxu0
    %v1961 = vadd.f32 0.0, %v1960
    %1962 = vmatmul.f32.gmra.mxu0 %v1209
    %v1963 = vpop.f32.mrf.mxu0
    %v1964 = vadd.f32 0.0, %v1963
    %1965 = vmatmul.f32.gmra.mxu0 %v1211
    %v1966 = vpop.f32.mrf.mxu0
    %v1967 = vadd.f32 0.0, %v1966
    %1968 = vmatmul.f32.gmra.mxu0 %v1213
    %v1969 = vpop.f32.mrf.mxu0
    %v1970 = vadd.f32 0.0, %v1969
    %1971 = vmatmul.f32.gmra.mxu0 %v1215
    %v1972 = vpop.f32.mrf.mxu0
    %v1973 = vadd.f32 0.0, %v1972
    %1974 = vmatmul.f32.gmra.mxu0 %v1217
    %v1975 = vpop.f32.mrf.mxu0
    %v1976 = vadd.f32 0.0, %v1975
    %1977 = vmatmul.f32.gmra.mxu0 %v1219
    %v1978 = vpop.f32.mrf.mxu0
    %v1979 = vadd.f32 0.0, %v1978
    %1980 = vmatmul.f32.gmra.mxu0 %v1221
    %v1981 = vpop.f32.mrf.mxu0
    %v1982 = vadd.f32 0.0, %v1981
    %1983 = vmatmul.f32.gmra.mxu0 %v1223
    %v1984 = vpop.f32.mrf.mxu0
    %v1985 = vadd.f32 0.0, %v1984
    %1986 = vmatmul.f32.gmra.mxu0 %v1225
    %v1987 = vpop.f32.mrf.mxu0
    %v1988 = vadd.f32 0.0, %v1987
    %1989 = vmatmul.f32.gmra.mxu0 %v1227
    %v1990 = vpop.f32.mrf.mxu0
    %v1991 = vadd.f32 0.0, %v1990
    %1992 = vmatmul.f32.gmra.mxu0 %v1229
    %v1993 = vpop.f32.mrf.mxu0
    %v1994 = vadd.f32 0.0, %v1993
    %1995 = vdwg.mxu0
    %1996 = vmatpush.msra.mxu0 %v1930
    %1997 = vmatpush.msra.mxu0 %v1929
    %1998 = vmatpush.msra.mxu0 %v1928
    %1999 = vmatpush.msra.mxu0 %v1927
    %2000 = vmatpush.msra.mxu0 %v1926
    %2001 = vmatpush.msra.mxu0 %v1925
    %2002 = vmatpush.msra.mxu0 %v1924
    %2003 = vmatpush.msra.mxu0 %v1923
    %2004 = vmatpush.msra.mxu0 %v1922
    %2005 = vmatpush.msra.mxu0 %v1921
    %2006 = vmatpush.msra.mxu0 %v1920
    %2007 = vmatpush.msra.mxu0 %v1919
    %2008 = vmatpush.msra.mxu0 %v1918
    %2009 = vmatpush.msra.mxu0 %v1917
    %2010 = vmatpush.msra.mxu0 %v1916
    %2011 = vmatpush.msra.mxu0 %v1915
    %2012 = vmatmul.f32.gmra.mxu0 %v1200
    %v2013 = vpop.f32.mrf.mxu0
    %v2014 = vadd.f32 %v1949, %v2013
    %2015 = vmatmul.f32.gmra.mxu0 %v1202
    %v2016 = vpop.f32.mrf.mxu0
    %v2017 = vadd.f32 %v1952, %v2016
    %2018 = vmatmul.f32.gmra.mxu0 %v1204
    %v2019 = vpop.f32.mrf.mxu0
    %v2020 = vadd.f32 %v1955, %v2019
    %2021 = vmatmul.f32.gmra.mxu0 %v1206
    %v2022 = vpop.f32.mrf.mxu0
    %v2023 = vadd.f32 %v1958, %v2022
    %2024 = vmatmul.f32.gmra.mxu0 %v1208
    %v2025 = vpop.f32.mrf.mxu0
    %v2026 = vadd.f32 %v1961, %v2025
    %2027 = vmatmul.f32.gmra.mxu0 %v1210
    %v2028 = vpop.f32.mrf.mxu0
    %v2029 = vadd.f32 %v1964, %v2028
    %2030 = vmatmul.f32.gmra.mxu0 %v1212
    %v2031 = vpop.f32.mrf.mxu0
    %v2032 = vadd.f32 %v1967, %v2031
    %2033 = vmatmul.f32.gmra.mxu0 %v1214
    %v2034 = vpop.f32.mrf.mxu0
    %v2035 = vadd.f32 %v1970, %v2034
    %2036 = vmatmul.f32.gmra.mxu0 %v1216
    %v2037 = vpop.f32.mrf.mxu0
    %v2038 = vadd.f32 %v1973, %v2037
    %2039 = vmatmul.f32.gmra.mxu0 %v1218
    %v2040 = vpop.f32.mrf.mxu0
    %v2041 = vadd.f32 %v1976, %v2040
    %2042 = vmatmul.f32.gmra.mxu0 %v1220
    %v2043 = vpop.f32.mrf.mxu0
    %v2044 = vadd.f32 %v1979, %v2043
    %2045 = vmatmul.f32.gmra.mxu0 %v1222
    %v2046 = vpop.f32.mrf.mxu0
    %v2047 = vadd.f32 %v1982, %v2046
    %2048 = vmatmul.f32.gmra.mxu0 %v1224
    %v2049 = vpop.f32.mrf.mxu0
    %v2050 = vadd.f32 %v1985, %v2049
    %2051 = vmatmul.f32.gmra.mxu0 %v1226
    %v2052 = vpop.f32.mrf.mxu0
    %v2053 = vadd.f32 %v1988, %v2052
    %2054 = vmatmul.f32.gmra.mxu0 %v1228
    %v2055 = vpop.f32.mrf.mxu0
    %v2056 = vadd.f32 %v1991, %v2055
    %2057 = vmatmul.f32.gmra.mxu0 %v1230
    %v2058 = vpop.f32.mrf.mxu0
    %v2059 = vadd.f32 %v1994, %v2058
    %2060 = vdwg.mxu0
    %2061 = vmatpush.msra.mxu0 %v1028
    %2062 = vmatpush.msra.mxu0 %v1027
    %2063 = vmatpush.msra.mxu0 %v1026
    %2064 = vmatpush.msra.mxu0 %v1025
    %2065 = vmatpush.msra.mxu0 %v1024
    %2066 = vmatpush.msra.mxu0 %v1023
    %2067 = vmatpush.msra.mxu0 %v1022
    %2068 = vmatpush.msra.mxu0 %v1021
    %2069 = vmatpush.msra.mxu0 %v1020
    %2070 = vmatpush.msra.mxu0 %v1019
    %2071 = vmatpush.msra.mxu0 %v1018
    %2072 = vmatpush.msra.mxu0 %v1017
    %2073 = vmatpush.msra.mxu0 %v1016
    %2074 = vmatpush.msra.mxu0 %v1015
    %2075 = vmatpush.msra.mxu0 %v1014
    %2076 = vmatpush.msra.mxu0 %v1013
    %2077 = vmatmul.f32.gmra.mxu0 %v275
    %v2078 = vpop.f32.mrf.mxu0
    %v2079 = vadd.f32 %v2014, %v2078
    %2080 = vmatmul.f32.gmra.mxu0 %v277
    %v2081 = vpop.f32.mrf.mxu0
    %v2082 = vadd.f32 %v2017, %v2081
    %2083 = vmatmul.f32.gmra.mxu0 %v279
    %v2084 = vpop.f32.mrf.mxu0
    %v2085 = vadd.f32 %v2020, %v2084
    %2086 = vmatmul.f32.gmra.mxu0 %v281
    %v2087 = vpop.f32.mrf.mxu0
    %v2088 = vadd.f32 %v2023, %v2087
    %2089 = vmatmul.f32.gmra.mxu0 %v283
    %v2090 = vpop.f32.mrf.mxu0
    %v2091 = vadd.f32 %v2026, %v2090
    %2092 = vmatmul.f32.gmra.mxu0 %v285
    %v2093 = vpop.f32.mrf.mxu0
    %v2094 = vadd.f32 %v2029, %v2093
    %2095 = vmatmul.f32.gmra.mxu0 %v287
    %v2096 = vpop.f32.mrf.mxu0
    %v2097 = vadd.f32 %v2032, %v2096
    %2098 = vmatmul.f32.gmra.mxu0 %v289
    %v2099 = vpop.f32.mrf.mxu0
    %v2100 = vadd.f32 %v2035, %v2099
    %2101 = vmatmul.f32.gmra.mxu0 %v291
    %v2102 = vpop.f32.mrf.mxu0
    %v2103 = vadd.f32 %v2038, %v2102
    %2104 = vmatmul.f32.gmra.mxu0 %v293
    %v2105 = vpop.f32.mrf.mxu0
    %v2106 = vadd.f32 %v2041, %v2105
    %2107 = vmatmul.f32.gmra.mxu0 %v295
    %v2108 = vpop.f32.mrf.mxu0
    %v2109 = vadd.f32 %v2044, %v2108
    %2110 = vmatmul.f32.gmra.mxu0 %v297
    %v2111 = vpop.f32.mrf.mxu0
    %v2112 = vadd.f32 %v2047, %v2111
    %2113 = vmatmul.f32.gmra.mxu0 %v299
    %v2114 = vpop.f32.mrf.mxu0
    %v2115 = vadd.f32 %v2050, %v2114
    %2116 = vmatmul.f32.gmra.mxu0 %v301
    %v2117 = vpop.f32.mrf.mxu0
    %v2118 = vadd.f32 %v2053, %v2117
    %2119 = vmatmul.f32.gmra.mxu0 %v303
    %v2120 = vpop.f32.mrf.mxu0
    %v2121 = vadd.f32 %v2056, %v2120
    %2122 = vmatmul.f32.gmra.mxu0 %v305
    %v2123 = vpop.f32.mrf.mxu0
    %v2124 = vadd.f32 %v2059, %v2123
    %2125 = vdwg.mxu0
    %2126 = vmatpush.msra.mxu0 %v1044
    %2127 = vmatpush.msra.mxu0 %v1043
    %2128 = vmatpush.msra.mxu0 %v1042
    %2129 = vmatpush.msra.mxu0 %v1041
    %2130 = vmatpush.msra.mxu0 %v1040
    %2131 = vmatpush.msra.mxu0 %v1039
    %2132 = vmatpush.msra.mxu0 %v1038
    %2133 = vmatpush.msra.mxu0 %v1037
    %2134 = vmatpush.msra.mxu0 %v1036
    %2135 = vmatpush.msra.mxu0 %v1035
    %2136 = vmatpush.msra.mxu0 %v1034
    %2137 = vmatpush.msra.mxu0 %v1033
    %2138 = vmatpush.msra.mxu0 %v1032
    %2139 = vmatpush.msra.mxu0 %v1031
    %2140 = vmatpush.msra.mxu0 %v1030
    %2141 = vmatpush.msra.mxu0 %v1029
    %2142 = vmatmul.f32.gmra.mxu0 %v276
    %v2143 = vpop.f32.mrf.mxu0
    %v2144 = vadd.f32 %v2079, %v2143
    %2145 = vmatmul.f32.gmra.mxu0 %v278
    %v2146 = vpop.f32.mrf.mxu0
    %v2147 = vadd.f32 %v2082, %v2146
    %2148 = vmatmul.f32.gmra.mxu0 %v280
    %v2149 = vpop.f32.mrf.mxu0
    %v2150 = vadd.f32 %v2085, %v2149
    %2151 = vmatmul.f32.gmra.mxu0 %v282
    %v2152 = vpop.f32.mrf.mxu0
    %v2153 = vadd.f32 %v2088, %v2152
    %2154 = vmatmul.f32.gmra.mxu0 %v284
    %v2155 = vpop.f32.mrf.mxu0
    %v2156 = vadd.f32 %v2091, %v2155
    %2157 = vmatmul.f32.gmra.mxu0 %v286
    %v2158 = vpop.f32.mrf.mxu0
    %v2159 = vadd.f32 %v2094, %v2158
    %2160 = vmatmul.f32.gmra.mxu0 %v288
    %v2161 = vpop.f32.mrf.mxu0
    %v2162 = vadd.f32 %v2097, %v2161
    %2163 = vmatmul.f32.gmra.mxu0 %v290
    %v2164 = vpop.f32.mrf.mxu0
    %v2165 = vadd.f32 %v2100, %v2164
    %2166 = vmatmul.f32.gmra.mxu0 %v292
    %v2167 = vpop.f32.mrf.mxu0
    %v2168 = vadd.f32 %v2103, %v2167
    %2169 = vmatmul.f32.gmra.mxu0 %v294
    %v2170 = vpop.f32.mrf.mxu0
    %v2171 = vadd.f32 %v2106, %v2170
    %2172 = vmatmul.f32.gmra.mxu0 %v296
    %v2173 = vpop.f32.mrf.mxu0
    %v2174 = vadd.f32 %v2109, %v2173
    %2175 = vmatmul.f32.gmra.mxu0 %v298
    %v2176 = vpop.f32.mrf.mxu0
    %v2177 = vadd.f32 %v2112, %v2176
    %2178 = vmatmul.f32.gmra.mxu0 %v300
    %v2179 = vpop.f32.mrf.mxu0
    %v2180 = vadd.f32 %v2115, %v2179
    %2181 = vmatmul.f32.gmra.mxu0 %v302
    %v2182 = vpop.f32.mrf.mxu0
    %v2183 = vadd.f32 %v2118, %v2182
    %2184 = vmatmul.f32.gmra.mxu0 %v304
    %v2185 = vpop.f32.mrf.mxu0
    %v2186 = vadd.f32 %v2121, %v2185
    %2187 = vmatmul.f32.gmra.mxu0 %v306
    %v2188 = vpop.f32.mrf.mxu0
    %v2189 = vadd.f32 %v2124, %v2188
    %2190 = vdwg.mxu0
    %s2191 = scalar_lea.vmem %s2, 128
    %v2192 = vld [vmem:[%s2191] sm:$0xff]
    %v2193 = vld [vmem:[%s2191 + $0x8] sm:$0xff]
    %v2194 = vld [vmem:[%s2191 + $0x10] sm:$0xff]
    %v2195 = vld [vmem:[%s2191 + $0x18] sm:$0xff]
    %v2196 = vld [vmem:[%s2191 + $0x20] sm:$0xff]
    %v2197 = vld [vmem:[%s2191 + $0x28] sm:$0xff]
    %v2198 = vld [vmem:[%s2191 + $0x30] sm:$0xff]
    %v2199 = vld [vmem:[%s2191 + $0x38] sm:$0xff]
    %s2200 = scalar_lea.vmem %s3, 4
    %v2201 = vld [vmem:[%s2200] sm:$0x3]
    %v2203 = vperm.slane %v2201, 0
    %v2204 = vperm.slane %v2201, 1
    %v2215 = vunpack.c.l.b16 %v2192
    %v2216 = vunpack.c.h.b16 %v2192
    %v2217 = vunpack.c.l.b16 %v2193
    %v2218 = vunpack.c.h.b16 %v2193
    %v2219 = vunpack.c.l.b16 %v2194
    %v2220 = vunpack.c.h.b16 %v2194
    %v2221 = vunpack.c.l.b16 %v2195
    %v2222 = vunpack.c.h.b16 %v2195
    %v2223 = vunpack.c.l.b16 %v2196
    %v2224 = vunpack.c.h.b16 %v2196
    %v2225 = vunpack.c.l.b16 %v2197
    %v2226 = vunpack.c.h.b16 %v2197
    %v2227 = vunpack.c.l.b16 %v2198
    %v2228 = vunpack.c.h.b16 %v2198
    %v2229 = vunpack.c.l.b16 %v2199
    %v2230 = vunpack.c.h.b16 %v2199
    %v2231 = vpack.c.b16 %v2217, %v2215
    %v2232 = vpack.c.b16 %v2218, %v2216
    %v2233 = vpack.c.b16 %v2221, %v2219
    %v2234 = vpack.c.b16 %v2222, %v2220
    %v2235 = vpack.c.b16 %v2225, %v2223
    %v2236 = vpack.c.b16 %v2226, %v2224
    %v2237 = vpack.c.b16 %v2229, %v2227
    %v2238 = vpack.c.b16 %v2230, %v2228
    %2247 = vmatpush.bf16.msra.mxu0 0
    %2248 = vmatpush.bf16.msra.mxu0 0
    %2249 = vmatpush.bf16.msra.mxu0 0
    %2250 = vmatpush.bf16.msra.mxu0 0
    %2251 = vmatpush.bf16.msra.mxu0 %v2237
    %2252 = vmatpush.bf16.msra.mxu0 %v2235
    %2253 = vmatpush.bf16.msra.mxu0 %v2233
    %2254 = vmatpush.bf16.msra.mxu0 %v2231
    %2255 = vmatmul.bf16.gmra.mxu0 %v154
    %v2256 = vpop.f32.mrf.mxu0
    %v2257 = vadd.f32 %v2203, %v2256
    %v2258 = vpop.f32.mrf.mxu0
    %v2259 = vadd.f32 %v2203, %v2258
    %2260 = vmatmul.bf16.gmra.mxu0 %v157
    %v2261 = vpop.f32.mrf.mxu0
    %v2262 = vadd.f32 %v2203, %v2261
    %v2263 = vpop.f32.mrf.mxu0
    %v2264 = vadd.f32 %v2203, %v2263
    %2265 = vmatmul.bf16.gmra.mxu0 %v160
    %v2266 = vpop.f32.mrf.mxu0
    %v2267 = vadd.f32 %v2203, %v2266
    %v2268 = vpop.f32.mrf.mxu0
    %v2269 = vadd.f32 %v2203, %v2268
    %2270 = vmatmul.bf16.gmra.mxu0 %v163
    %v2271 = vpop.f32.mrf.mxu0
    %v2272 = vadd.f32 %v2203, %v2271
    %v2273 = vpop.f32.mrf.mxu0
    %v2274 = vadd.f32 %v2203, %v2273
    %2275 = vmatmul.bf16.gmra.mxu0 %v166
    %v2276 = vpop.f32.mrf.mxu0
    %v2277 = vadd.f32 %v2203, %v2276
    %v2278 = vpop.f32.mrf.mxu0
    %v2279 = vadd.f32 %v2203, %v2278
    %2280 = vmatmul.bf16.gmra.mxu0 %v169
    %v2281 = vpop.f32.mrf.mxu0
    %v2282 = vadd.f32 %v2203, %v2281
    %v2283 = vpop.f32.mrf.mxu0
    %v2284 = vadd.f32 %v2203, %v2283
    %2285 = vmatmul.bf16.gmra.mxu0 %v172
    %v2286 = vpop.f32.mrf.mxu0
    %v2287 = vadd.f32 %v2203, %v2286
    %v2288 = vpop.f32.mrf.mxu0
    %v2289 = vadd.f32 %v2203, %v2288
    %2290 = vmatmul.bf16.gmra.mxu0 %v175
    %v2291 = vpop.f32.mrf.mxu0
    %v2292 = vadd.f32 %v2203, %v2291
    %v2293 = vpop.f32.mrf.mxu0
    %v2294 = vadd.f32 %v2203, %v2293
    %2295 = vdwg.mxu0
    %2296 = vmatpush.bf16.msra.mxu0 0
    %2297 = vmatpush.bf16.msra.mxu0 0
    %2298 = vmatpush.bf16.msra.mxu0 0
    %2299 = vmatpush.bf16.msra.mxu0 0
    %2300 = vmatpush.bf16.msra.mxu0 %v2238
    %2301 = vmatpush.bf16.msra.mxu0 %v2236
    %2302 = vmatpush.bf16.msra.mxu0 %v2234
    %2303 = vmatpush.bf16.msra.mxu0 %v2232
    %2304 = vmatmul.bf16.gmra.mxu0 %v154
    %v2305 = vpop.f32.mrf.mxu0
    %v2306 = vadd.f32 %v2204, %v2305
    %v2307 = vpop.f32.mrf.mxu0
    %v2308 = vadd.f32 %v2204, %v2307
    %2309 = vmatmul.bf16.gmra.mxu0 %v157
    %v2310 = vpop.f32.mrf.mxu0
    %v2311 = vadd.f32 %v2204, %v2310
    %v2312 = vpop.f32.mrf.mxu0
    %v2313 = vadd.f32 %v2204, %v2312
    %2314 = vmatmul.bf16.gmra.mxu0 %v160
    %v2315 = vpop.f32.mrf.mxu0
    %v2316 = vadd.f32 %v2204, %v2315
    %v2317 = vpop.f32.mrf.mxu0
    %v2318 = vadd.f32 %v2204, %v2317
    %2319 = vmatmul.bf16.gmra.mxu0 %v163
    %v2320 = vpop.f32.mrf.mxu0
    %v2321 = vadd.f32 %v2204, %v2320
    %v2322 = vpop.f32.mrf.mxu0
    %v2323 = vadd.f32 %v2204, %v2322
    %2324 = vmatmul.bf16.gmra.mxu0 %v166
    %v2325 = vpop.f32.mrf.mxu0
    %v2326 = vadd.f32 %v2204, %v2325
    %v2327 = vpop.f32.mrf.mxu0
    %v2328 = vadd.f32 %v2204, %v2327
    %2329 = vmatmul.bf16.gmra.mxu0 %v169
    %v2330 = vpop.f32.mrf.mxu0
    %v2331 = vadd.f32 %v2204, %v2330
    %v2332 = vpop.f32.mrf.mxu0
    %v2333 = vadd.f32 %v2204, %v2332
    %2334 = vmatmul.bf16.gmra.mxu0 %v172
    %v2335 = vpop.f32.mrf.mxu0
    %v2336 = vadd.f32 %v2204, %v2335
    %v2337 = vpop.f32.mrf.mxu0
    %v2338 = vadd.f32 %v2204, %v2337
    %2339 = vmatmul.bf16.gmra.mxu0 %v175
    %v2340 = vpop.f32.mrf.mxu0
    %v2341 = vadd.f32 %v2204, %v2340
    %v2342 = vpop.f32.mrf.mxu0
    %v2343 = vadd.f32 %v2204, %v2342
    %2344 = vdwg.mxu0
    %v2345 = vmax.f32 %v2257, 0.0
    %v2346 = vmax.f32 %v2306, 0.0
    %v2347 = vmax.f32 %v2259, 0.0
    %v2348 = vmax.f32 %v2308, 0.0
    %v2349 = vmax.f32 %v2262, 0.0
    %v2350 = vmax.f32 %v2311, 0.0
    %v2351 = vmax.f32 %v2264, 0.0
    %v2352 = vmax.f32 %v2313, 0.0
    %v2353 = vmax.f32 %v2267, 0.0
    %v2354 = vmax.f32 %v2316, 0.0
    %v2355 = vmax.f32 %v2269, 0.0
    %v2356 = vmax.f32 %v2318, 0.0
    %v2357 = vmax.f32 %v2272, 0.0
    %v2358 = vmax.f32 %v2321, 0.0
    %v2359 = vmax.f32 %v2274, 0.0
    %v2360 = vmax.f32 %v2323, 0.0
    %v2361 = vmax.f32 %v2277, 0.0
    %v2362 = vmax.f32 %v2326, 0.0
    %v2363 = vmax.f32 %v2279, 0.0
    %v2364 = vmax.f32 %v2328, 0.0
    %v2365 = vmax.f32 %v2282, 0.0
    %v2366 = vmax.f32 %v2331, 0.0
    %v2367 = vmax.f32 %v2284, 0.0
    %v2368 = vmax.f32 %v2333, 0.0
    %v2369 = vmax.f32 %v2287, 0.0
    %v2370 = vmax.f32 %v2336, 0.0
    %v2371 = vmax.f32 %v2289, 0.0
    %v2372 = vmax.f32 %v2338, 0.0
    %v2373 = vmax.f32 %v2292, 0.0
    %v2374 = vmax.f32 %v2341, 0.0
    %v2375 = vmax.f32 %v2294, 0.0
    %v2376 = vmax.f32 %v2343, 0.0
    %s2377 = scalar_lea.vmem %s4, 256
    %v2378 = vld [vmem:[%s2377] sm:$0xf]
    %v2379 = vld [vmem:[%s2377 + $0x4] sm:$0xf]
    %v2380 = vld [vmem:[%s2377 + $0x8] sm:$0xf]
    %v2381 = vld [vmem:[%s2377 + $0xc] sm:$0xf]
    %v2382 = vld [vmem:[%s2377 + $0x10] sm:$0xf]
    %v2383 = vld [vmem:[%s2377 + $0x14] sm:$0xf]
    %v2384 = vld [vmem:[%s2377 + $0x18] sm:$0xf]
    %v2385 = vld [vmem:[%s2377 + $0x1c] sm:$0xf]
    %v2386 = vld [vmem:[%s2377 + $0x20] sm:$0xf]
    %v2387 = vld [vmem:[%s2377 + $0x24] sm:$0xf]
    %v2388 = vld [vmem:[%s2377 + $0x28] sm:$0xf]
    %v2389 = vld [vmem:[%s2377 + $0x2c] sm:$0xf]
    %v2390 = vld [vmem:[%s2377 + $0x30] sm:$0xf]
    %v2391 = vld [vmem:[%s2377 + $0x34] sm:$0xf]
    %v2392 = vld [vmem:[%s2377 + $0x38] sm:$0xf]
    %v2393 = vld [vmem:[%s2377 + $0x3c] sm:$0xf]
    %v2394 = vld [vmem:[%s2377 + $0x40] sm:$0xf]
    %v2395 = vld [vmem:[%s2377 + $0x44] sm:$0xf]
    %v2396 = vld [vmem:[%s2377 + $0x48] sm:$0xf]
    %v2397 = vld [vmem:[%s2377 + $0x4c] sm:$0xf]
    %v2398 = vld [vmem:[%s2377 + $0x50] sm:$0xf]
    %v2399 = vld [vmem:[%s2377 + $0x54] sm:$0xf]
    %v2400 = vld [vmem:[%s2377 + $0x58] sm:$0xf]
    %v2401 = vld [vmem:[%s2377 + $0x5c] sm:$0xf]
    %v2402 = vld [vmem:[%s2377 + $0x60] sm:$0xf]
    %v2403 = vld [vmem:[%s2377 + $0x64] sm:$0xf]
    %v2404 = vld [vmem:[%s2377 + $0x68] sm:$0xf]
    %v2405 = vld [vmem:[%s2377 + $0x6c] sm:$0xf]
    %v2406 = vld [vmem:[%s2377 + $0x70] sm:$0xf]
    %v2407 = vld [vmem:[%s2377 + $0x74] sm:$0xf]
    %v2408 = vld [vmem:[%s2377 + $0x78] sm:$0xf]
    %v2409 = vld [vmem:[%s2377 + $0x7c] sm:$0xf]
    %s2410 = scalar_lea.vmem %s5, 512
    %v2411 = vld [vmem:[%s2410] sm:$0xff]
    %v2412 = vld [vmem:[%s2410 + $0x8] sm:$0xff]
    %v2413 = vld [vmem:[%s2410 + $0x10] sm:$0xff]
    %v2414 = vld [vmem:[%s2410 + $0x18] sm:$0xff]
    %v2415 = vld [vmem:[%s2410 + $0x20] sm:$0xff]
    %v2416 = vld [vmem:[%s2410 + $0x28] sm:$0xff]
    %v2417 = vld [vmem:[%s2410 + $0x30] sm:$0xff]
    %v2418 = vld [vmem:[%s2410 + $0x38] sm:$0xff]
    %v2419 = vld [vmem:[%s2410 + $0x40] sm:$0xff]
    %v2420 = vld [vmem:[%s2410 + $0x48] sm:$0xff]
    %v2421 = vld [vmem:[%s2410 + $0x50] sm:$0xff]
    %v2422 = vld [vmem:[%s2410 + $0x58] sm:$0xff]
    %v2423 = vld [vmem:[%s2410 + $0x60] sm:$0xff]
    %v2424 = vld [vmem:[%s2410 + $0x68] sm:$0xff]
    %v2425 = vld [vmem:[%s2410 + $0x70] sm:$0xff]
    %v2426 = vld [vmem:[%s2410 + $0x78] sm:$0xff]
    %v2427 = vld [vmem:[%s2410 + $0x80] sm:$0xff]
    %v2428 = vld [vmem:[%s2410 + $0x88] sm:$0xff]
    %v2429 = vld [vmem:[%s2410 + $0x90] sm:$0xff]
    %v2430 = vld [vmem:[%s2410 + $0x98] sm:$0xff]
    %v2431 = vld [vmem:[%s2410 + $0xa0] sm:$0xff]
    %v2432 = vld [vmem:[%s2410 + $0xa8] sm:$0xff]
    %v2433 = vld [vmem:[%s2410 + $0xb0] sm:$0xff]
    %v2434 = vld [vmem:[%s2410 + $0xb8] sm:$0xff]
    %v2435 = vld [vmem:[%s2410 + $0xc0] sm:$0xff]
    %v2436 = vld [vmem:[%s2410 + $0xc8] sm:$0xff]
    %v2437 = vld [vmem:[%s2410 + $0xd0] sm:$0xff]
    %v2438 = vld [vmem:[%s2410 + $0xd8] sm:$0xff]
    %v2439 = vld [vmem:[%s2410 + $0xe0] sm:$0xff]
    %v2440 = vld [vmem:[%s2410 + $0xe8] sm:$0xff]
    %v2441 = vld [vmem:[%s2410 + $0xf0] sm:$0xff]
    %v2442 = vld [vmem:[%s2410 + $0xf8] sm:$0xff]
    %2444 = vset.pattern.permute.xlu0 0
    %2445 = vperm.xlu0 %2444, %v2411
    %v2446 = vpop.permute.xlu0 %2445
    %2449 = vset.pattern.permute.xlu0 0
    %2450 = vperm.xlu0 %2449, %v2412
    %v2451 = vpop.permute.xlu0 %2450
    %2454 = vset.pattern.permute.xlu0 0
    %2455 = vperm.xlu0 %2454, %v2413
    %v2456 = vpop.permute.xlu0 %2455
    %2459 = vset.pattern.permute.xlu0 0
    %2460 = vperm.xlu0 %2459, %v2414
    %v2461 = vpop.permute.xlu0 %2460
    %2464 = vset.pattern.permute.xlu0 0
    %2465 = vperm.xlu0 %2464, %v2415
    %v2466 = vpop.permute.xlu0 %2465
    %2469 = vset.pattern.permute.xlu0 0
    %2470 = vperm.xlu0 %2469, %v2416
    %v2471 = vpop.permute.xlu0 %2470
    %2474 = vset.pattern.permute.xlu0 0
    %2475 = vperm.xlu0 %2474, %v2417
    %v2476 = vpop.permute.xlu0 %2475
    %2479 = vset.pattern.permute.xlu0 0
    %2480 = vperm.xlu0 %2479, %v2418
    %v2481 = vpop.permute.xlu0 %2480
    %2484 = vset.pattern.permute.xlu0 0
    %2485 = vperm.xlu0 %2484, %v2419
    %v2486 = vpop.permute.xlu0 %2485
    %2489 = vset.pattern.permute.xlu0 0
    %2490 = vperm.xlu0 %2489, %v2420
    %v2491 = vpop.permute.xlu0 %2490
    %2494 = vset.pattern.permute.xlu0 0
    %2495 = vperm.xlu0 %2494, %v2421
    %v2496 = vpop.permute.xlu0 %2495
    %2499 = vset.pattern.permute.xlu0 0
    %2500 = vperm.xlu0 %2499, %v2422
    %v2501 = vpop.permute.xlu0 %2500
    %2504 = vset.pattern.permute.xlu0 0
    %2505 = vperm.xlu0 %2504, %v2423
    %v2506 = vpop.permute.xlu0 %2505
    %2509 = vset.pattern.permute.xlu0 0
    %2510 = vperm.xlu0 %2509, %v2424
    %v2511 = vpop.permute.xlu0 %2510
    %2514 = vset.pattern.permute.xlu0 0
    %2515 = vperm.xlu0 %2514, %v2425
    %v2516 = vpop.permute.xlu0 %2515
    %2519 = vset.pattern.permute.xlu0 0
    %2520 = vperm.xlu0 %2519, %v2426
    %v2521 = vpop.permute.xlu0 %2520
    %2524 = vset.pattern.permute.xlu0 0
    %2525 = vperm.xlu0 %2524, %v2427
    %v2526 = vpop.permute.xlu0 %2525
    %2529 = vset.pattern.permute.xlu0 0
    %2530 = vperm.xlu0 %2529, %v2428
    %v2531 = vpop.permute.xlu0 %2530
    %2534 = vset.pattern.permute.xlu0 0
    %2535 = vperm.xlu0 %2534, %v2429
    %v2536 = vpop.permute.xlu0 %2535
    %2539 = vset.pattern.permute.xlu0 0
    %2540 = vperm.xlu0 %2539, %v2430
    %v2541 = vpop.permute.xlu0 %2540
    %2544 = vset.pattern.permute.xlu0 0
    %2545 = vperm.xlu0 %2544, %v2431
    %v2546 = vpop.permute.xlu0 %2545
    %2549 = vset.pattern.permute.xlu0 0
    %2550 = vperm.xlu0 %2549, %v2432
    %v2551 = vpop.permute.xlu0 %2550
    %2554 = vset.pattern.permute.xlu0 0
    %2555 = vperm.xlu0 %2554, %v2433
    %v2556 = vpop.permute.xlu0 %2555
    %2559 = vset.pattern.permute.xlu0 0
    %2560 = vperm.xlu0 %2559, %v2434
    %v2561 = vpop.permute.xlu0 %2560
    %2564 = vset.pattern.permute.xlu0 0
    %2565 = vperm.xlu0 %2564, %v2435
    %v2566 = vpop.permute.xlu0 %2565
    %2569 = vset.pattern.permute.xlu0 0
    %2570 = vperm.xlu0 %2569, %v2436
    %v2571 = vpop.permute.xlu0 %2570
    %2574 = vset.pattern.permute.xlu0 0
    %2575 = vperm.xlu0 %2574, %v2437
    %v2576 = vpop.permute.xlu0 %2575
    %2579 = vset.pattern.permute.xlu0 0
    %2580 = vperm.xlu0 %2579, %v2438
    %v2581 = vpop.permute.xlu0 %2580
    %2584 = vset.pattern.permute.xlu0 0
    %2585 = vperm.xlu0 %2584, %v2439
    %v2586 = vpop.permute.xlu0 %2585
    %2589 = vset.pattern.permute.xlu0 0
    %2590 = vperm.xlu0 %2589, %v2440
    %v2591 = vpop.permute.xlu0 %2590
    %2594 = vset.pattern.permute.xlu0 0
    %2595 = vperm.xlu0 %2594, %v2441
    %v2596 = vpop.permute.xlu0 %2595
    %2599 = vset.pattern.permute.xlu0 0
    %2600 = vperm.xlu0 %2599, %v2442
    %v2601 = vpop.permute.xlu0 %2600
    %v2635 = vunpack.c.l.b16 %v2378
    %v2636 = vunpack.c.l.b16 %v2379
    %v2637 = vunpack.c.l.b16 %v2380
    %v2638 = vunpack.c.l.b16 %v2381
    %v2639 = vunpack.c.l.b16 %v2382
    %v2640 = vunpack.c.l.b16 %v2383
    %v2641 = vunpack.c.l.b16 %v2384
    %v2642 = vunpack.c.l.b16 %v2385
    %v2643 = vunpack.c.l.b16 %v2386
    %v2644 = vunpack.c.l.b16 %v2387
    %v2645 = vunpack.c.l.b16 %v2388
    %v2646 = vunpack.c.l.b16 %v2389
    %v2647 = vunpack.c.l.b16 %v2390
    %v2648 = vunpack.c.l.b16 %v2391
    %v2649 = vunpack.c.l.b16 %v2392
    %v2650 = vunpack.c.l.b16 %v2393
    %v2651 = vunpack.c.l.b16 %v2394
    %v2652 = vunpack.c.l.b16 %v2395
    %v2653 = vunpack.c.l.b16 %v2396
    %v2654 = vunpack.c.l.b16 %v2397
    %v2655 = vunpack.c.l.b16 %v2398
    %v2656 = vunpack.c.l.b16 %v2399
    %v2657 = vunpack.c.l.b16 %v2400
    %v2658 = vunpack.c.l.b16 %v2401
    %v2659 = vunpack.c.l.b16 %v2402
    %v2660 = vunpack.c.l.b16 %v2403
    %v2661 = vunpack.c.l.b16 %v2404
    %v2662 = vunpack.c.l.b16 %v2405
    %v2663 = vunpack.c.l.b16 %v2406
    %v2664 = vunpack.c.l.b16 %v2407
    %v2665 = vunpack.c.l.b16 %v2408
    %v2666 = vunpack.c.l.b16 %v2409
    %v2667 = vpack.c.b16 %v2636, %v2635
    %v2668 = vpack.c.b16 %v2638, %v2637
    %v2669 = vpack.c.b16 %v2640, %v2639
    %v2670 = vpack.c.b16 %v2642, %v2641
    %v2671 = vpack.c.b16 %v2644, %v2643
    %v2672 = vpack.c.b16 %v2646, %v2645
    %v2673 = vpack.c.b16 %v2648, %v2647
    %v2674 = vpack.c.b16 %v2650, %v2649
    %v2675 = vpack.c.b16 %v2652, %v2651
    %v2676 = vpack.c.b16 %v2654, %v2653
    %v2677 = vpack.c.b16 %v2656, %v2655
    %v2678 = vpack.c.b16 %v2658, %v2657
    %v2679 = vpack.c.b16 %v2660, %v2659
    %v2680 = vpack.c.b16 %v2662, %v2661
    %v2681 = vpack.c.b16 %v2664, %v2663
    %v2682 = vpack.c.b16 %v2666, %v2665
    %v2684 = vsel %vm651, %v2667, 0
    %v2687 = vsel %vm651, %v2668, 0
    %v2690 = vsel %vm651, %v2669, 0
    %v2693 = vsel %vm651, %v2670, 0
    %v2696 = vsel %vm651, %v2671, 0
    %v2699 = vsel %vm651, %v2672, 0
    %v2702 = vsel %vm651, %v2673, 0
    %v2705 = vsel %vm651, %v2674, 0
    %v2708 = vsel %vm651, %v2675, 0
    %v2711 = vsel %vm651, %v2676, 0
    %v2714 = vsel %vm651, %v2677, 0
    %v2717 = vsel %vm651, %v2678, 0
    %v2720 = vsel %vm651, %v2679, 0
    %v2723 = vsel %vm651, %v2680, 0
    %v2726 = vsel %vm651, %v2681, 0
    %v2729 = vsel %vm651, %v2682, 0
    %2731 = vmatpush.bf16.msra.mxu0 0
    %2732 = vmatpush.bf16.msra.mxu0 0
    %2733 = vmatpush.bf16.msra.mxu0 0
    %2734 = vmatpush.bf16.msra.mxu0 %v645
    %2735 = vmatpush.bf16.msra.mxu0 %v644
    %2736 = vmatpush.bf16.msra.mxu0 %v643
    %2737 = vmatpush.bf16.msra.mxu0 %v642
    %2738 = vmatpush.bf16.msra.mxu0 %v641
    %2739 = vmatmul.bf16.gmra.mxu0 %v2684
    %v2740 = vpop.f32.mrf.mxu0
    %v2741 = vadd.f32 %v2446, %v2740
    %v2742 = vpop.f32.mrf.mxu0
    %v2743 = vadd.f32 %v2451, %v2742
    %2744 = vmatmul.bf16.gmra.mxu0 %v2687
    %v2745 = vpop.f32.mrf.mxu0
    %v2746 = vadd.f32 %v2456, %v2745
    %v2747 = vpop.f32.mrf.mxu0
    %v2748 = vadd.f32 %v2461, %v2747
    %2749 = vmatmul.bf16.gmra.mxu0 %v2690
    %v2750 = vpop.f32.mrf.mxu0
    %v2751 = vadd.f32 %v2466, %v2750
    %v2752 = vpop.f32.mrf.mxu0
    %v2753 = vadd.f32 %v2471, %v2752
    %2754 = vmatmul.bf16.gmra.mxu0 %v2693
    %v2755 = vpop.f32.mrf.mxu0
    %v2756 = vadd.f32 %v2476, %v2755
    %v2757 = vpop.f32.mrf.mxu0
    %v2758 = vadd.f32 %v2481, %v2757
    %2759 = vmatmul.bf16.gmra.mxu0 %v2696
    %v2760 = vpop.f32.mrf.mxu0
    %v2761 = vadd.f32 %v2486, %v2760
    %v2762 = vpop.f32.mrf.mxu0
    %v2763 = vadd.f32 %v2491, %v2762
    %2764 = vmatmul.bf16.gmra.mxu0 %v2699
    %v2765 = vpop.f32.mrf.mxu0
    %v2766 = vadd.f32 %v2496, %v2765
    %v2767 = vpop.f32.mrf.mxu0
    %v2768 = vadd.f32 %v2501, %v2767
    %2769 = vmatmul.bf16.gmra.mxu0 %v2702
    %v2770 = vpop.f32.mrf.mxu0
    %v2771 = vadd.f32 %v2506, %v2770
    %v2772 = vpop.f32.mrf.mxu0
    %v2773 = vadd.f32 %v2511, %v2772
    %2774 = vmatmul.bf16.gmra.mxu0 %v2705
    %v2775 = vpop.f32.mrf.mxu0
    %v2776 = vadd.f32 %v2516, %v2775
    %v2777 = vpop.f32.mrf.mxu0
    %v2778 = vadd.f32 %v2521, %v2777
    %2779 = vmatmul.bf16.gmra.mxu0 %v2708
    %v2780 = vpop.f32.mrf.mxu0
    %v2781 = vadd.f32 %v2526, %v2780
    %v2782 = vpop.f32.mrf.mxu0
    %v2783 = vadd.f32 %v2531, %v2782
    %2784 = vmatmul.bf16.gmra.mxu0 %v2711
    %v2785 = vpop.f32.mrf.mxu0
    %v2786 = vadd.f32 %v2536, %v2785
    %v2787 = vpop.f32.mrf.mxu0
    %v2788 = vadd.f32 %v2541, %v2787
    %2789 = vmatmul.bf16.gmra.mxu0 %v2714
    %v2790 = vpop.f32.mrf.mxu0
    %v2791 = vadd.f32 %v2546, %v2790
    %v2792 = vpop.f32.mrf.mxu0
    %v2793 = vadd.f32 %v2551, %v2792
    %2794 = vmatmul.bf16.gmra.mxu0 %v2717
    %v2795 = vpop.f32.mrf.mxu0
    %v2796 = vadd.f32 %v2556, %v2795
    %v2797 = vpop.f32.mrf.mxu0
    %v2798 = vadd.f32 %v2561, %v2797
    %2799 = vmatmul.bf16.gmra.mxu0 %v2720
    %v2800 = vpop.f32.mrf.mxu0
    %v2801 = vadd.f32 %v2566, %v2800
    %v2802 = vpop.f32.mrf.mxu0
    %v2803 = vadd.f32 %v2571, %v2802
    %2804 = vmatmul.bf16.gmra.mxu0 %v2723
    %v2805 = vpop.f32.mrf.mxu0
    %v2806 = vadd.f32 %v2576, %v2805
    %v2807 = vpop.f32.mrf.mxu0
    %v2808 = vadd.f32 %v2581, %v2807
    %2809 = vmatmul.bf16.gmra.mxu0 %v2726
    %v2810 = vpop.f32.mrf.mxu0
    %v2811 = vadd.f32 %v2586, %v2810
    %v2812 = vpop.f32.mrf.mxu0
    %v2813 = vadd.f32 %v2591, %v2812
    %2814 = vmatmul.bf16.gmra.mxu0 %v2729
    %v2815 = vpop.f32.mrf.mxu0
    %v2816 = vadd.f32 %v2596, %v2815
    %v2817 = vpop.f32.mrf.mxu0
    %v2818 = vadd.f32 %v2601, %v2817
    %2819 = vdwg.mxu0
    %v2820 = vmax.f32 %v2741, 0.0
    %v2821 = vmax.f32 %v2743, 0.0
    %v2822 = vmax.f32 %v2746, 0.0
    %v2823 = vmax.f32 %v2748, 0.0
    %v2824 = vmax.f32 %v2751, 0.0
    %v2825 = vmax.f32 %v2753, 0.0
    %v2826 = vmax.f32 %v2756, 0.0
    %v2827 = vmax.f32 %v2758, 0.0
    %v2828 = vmax.f32 %v2761, 0.0
    %v2829 = vmax.f32 %v2763, 0.0
    %v2830 = vmax.f32 %v2766, 0.0
    %v2831 = vmax.f32 %v2768, 0.0
    %v2832 = vmax.f32 %v2771, 0.0
    %v2833 = vmax.f32 %v2773, 0.0
    %v2834 = vmax.f32 %v2776, 0.0
    %v2835 = vmax.f32 %v2778, 0.0
    %v2836 = vmax.f32 %v2781, 0.0
    %v2837 = vmax.f32 %v2783, 0.0
    %v2838 = vmax.f32 %v2786, 0.0
    %v2839 = vmax.f32 %v2788, 0.0
    %v2840 = vmax.f32 %v2791, 0.0
    %v2841 = vmax.f32 %v2793, 0.0
    %v2842 = vmax.f32 %v2796, 0.0
    %v2843 = vmax.f32 %v2798, 0.0
    %v2844 = vmax.f32 %v2801, 0.0
    %v2845 = vmax.f32 %v2803, 0.0
    %v2846 = vmax.f32 %v2806, 0.0
    %v2847 = vmax.f32 %v2808, 0.0
    %v2848 = vmax.f32 %v2811, 0.0
    %v2849 = vmax.f32 %v2813, 0.0
    %v2850 = vmax.f32 %v2816, 0.0
    %v2851 = vmax.f32 %v2818, 0.0
    %s2852 = scalar_lea.vmem %s6, 512
    %v2853 = vld [vmem:[%s2852] sm:$0xff]
    %v2854 = vld [vmem:[%s2852 + $0x8] sm:$0xff]
    %v2855 = vld [vmem:[%s2852 + $0x10] sm:$0xff]
    %v2856 = vld [vmem:[%s2852 + $0x18] sm:$0xff]
    %v2857 = vld [vmem:[%s2852 + $0x20] sm:$0xff]
    %v2858 = vld [vmem:[%s2852 + $0x28] sm:$0xff]
    %v2859 = vld [vmem:[%s2852 + $0x30] sm:$0xff]
    %v2860 = vld [vmem:[%s2852 + $0x38] sm:$0xff]
    %v2861 = vld [vmem:[%s2852 + $0x40] sm:$0xff]
    %v2862 = vld [vmem:[%s2852 + $0x48] sm:$0xff]
    %v2863 = vld [vmem:[%s2852 + $0x50] sm:$0xff]
    %v2864 = vld [vmem:[%s2852 + $0x58] sm:$0xff]
    %v2865 = vld [vmem:[%s2852 + $0x60] sm:$0xff]
    %v2866 = vld [vmem:[%s2852 + $0x68] sm:$0xff]
    %v2867 = vld [vmem:[%s2852 + $0x70] sm:$0xff]
    %v2868 = vld [vmem:[%s2852 + $0x78] sm:$0xff]
    %v2869 = vld [vmem:[%s2852 + $0x80] sm:$0xff]
    %v2870 = vld [vmem:[%s2852 + $0x88] sm:$0xff]
    %v2871 = vld [vmem:[%s2852 + $0x90] sm:$0xff]
    %v2872 = vld [vmem:[%s2852 + $0x98] sm:$0xff]
    %v2873 = vld [vmem:[%s2852 + $0xa0] sm:$0xff]
    %v2874 = vld [vmem:[%s2852 + $0xa8] sm:$0xff]
    %v2875 = vld [vmem:[%s2852 + $0xb0] sm:$0xff]
    %v2876 = vld [vmem:[%s2852 + $0xb8] sm:$0xff]
    %v2877 = vld [vmem:[%s2852 + $0xc0] sm:$0xff]
    %v2878 = vld [vmem:[%s2852 + $0xc8] sm:$0xff]
    %v2879 = vld [vmem:[%s2852 + $0xd0] sm:$0xff]
    %v2880 = vld [vmem:[%s2852 + $0xd8] sm:$0xff]
    %v2881 = vld [vmem:[%s2852 + $0xe0] sm:$0xff]
    %v2882 = vld [vmem:[%s2852 + $0xe8] sm:$0xff]
    %v2883 = vld [vmem:[%s2852 + $0xf0] sm:$0xff]
    %v2884 = vld [vmem:[%s2852 + $0xf8] sm:$0xff]
    %2886 = vset.pattern.permute.xlu0 0
    %2887 = vperm.xlu0 %2886, %v2853
    %v2888 = vpop.permute.xlu0 %2887
    %2891 = vset.pattern.permute.xlu0 0
    %2892 = vperm.xlu0 %2891, %v2854
    %v2893 = vpop.permute.xlu0 %2892
    %2896 = vset.pattern.permute.xlu0 0
    %2897 = vperm.xlu0 %2896, %v2855
    %v2898 = vpop.permute.xlu0 %2897
    %2901 = vset.pattern.permute.xlu0 0
    %2902 = vperm.xlu0 %2901, %v2856
    %v2903 = vpop.permute.xlu0 %2902
    %2906 = vset.pattern.permute.xlu0 0
    %2907 = vperm.xlu0 %2906, %v2857
    %v2908 = vpop.permute.xlu0 %2907
    %2911 = vset.pattern.permute.xlu0 0
    %2912 = vperm.xlu0 %2911, %v2858
    %v2913 = vpop.permute.xlu0 %2912
    %2916 = vset.pattern.permute.xlu0 0
    %2917 = vperm.xlu0 %2916, %v2859
    %v2918 = vpop.permute.xlu0 %2917
    %2921 = vset.pattern.permute.xlu0 0
    %2922 = vperm.xlu0 %2921, %v2860
    %v2923 = vpop.permute.xlu0 %2922
    %2926 = vset.pattern.permute.xlu0 0
    %2927 = vperm.xlu0 %2926, %v2861
    %v2928 = vpop.permute.xlu0 %2927
    %2931 = vset.pattern.permute.xlu0 0
    %2932 = vperm.xlu0 %2931, %v2862
    %v2933 = vpop.permute.xlu0 %2932
    %2936 = vset.pattern.permute.xlu0 0
    %2937 = vperm.xlu0 %2936, %v2863
    %v2938 = vpop.permute.xlu0 %2937
    %2941 = vset.pattern.permute.xlu0 0
    %2942 = vperm.xlu0 %2941, %v2864
    %v2943 = vpop.permute.xlu0 %2942
    %2946 = vset.pattern.permute.xlu0 0
    %2947 = vperm.xlu0 %2946, %v2865
    %v2948 = vpop.permute.xlu0 %2947
    %2951 = vset.pattern.permute.xlu0 0
    %2952 = vperm.xlu0 %2951, %v2866
    %v2953 = vpop.permute.xlu0 %2952
    %2956 = vset.pattern.permute.xlu0 0
    %2957 = vperm.xlu0 %2956, %v2867
    %v2958 = vpop.permute.xlu0 %2957
    %2961 = vset.pattern.permute.xlu0 0
    %2962 = vperm.xlu0 %2961, %v2868
    %v2963 = vpop.permute.xlu0 %2962
    %2966 = vset.pattern.permute.xlu0 0
    %2967 = vperm.xlu0 %2966, %v2869
    %v2968 = vpop.permute.xlu0 %2967
    %2971 = vset.pattern.permute.xlu0 0
    %2972 = vperm.xlu0 %2971, %v2870
    %v2973 = vpop.permute.xlu0 %2972
    %2976 = vset.pattern.permute.xlu0 0
    %2977 = vperm.xlu0 %2976, %v2871
    %v2978 = vpop.permute.xlu0 %2977
    %2981 = vset.pattern.permute.xlu0 0
    %2982 = vperm.xlu0 %2981, %v2872
    %v2983 = vpop.permute.xlu0 %2982
    %2986 = vset.pattern.permute.xlu0 0
    %2987 = vperm.xlu0 %2986, %v2873
    %v2988 = vpop.permute.xlu0 %2987
    %2991 = vset.pattern.permute.xlu0 0
    %2992 = vperm.xlu0 %2991, %v2874
    %v2993 = vpop.permute.xlu0 %2992
    %2996 = vset.pattern.permute.xlu0 0
    %2997 = vperm.xlu0 %2996, %v2875
    %v2998 = vpop.permute.xlu0 %2997
    %3001 = vset.pattern.permute.xlu0 0
    %3002 = vperm.xlu0 %3001, %v2876
    %v3003 = vpop.permute.xlu0 %3002
    %3006 = vset.pattern.permute.xlu0 0
    %3007 = vperm.xlu0 %3006, %v2877
    %v3008 = vpop.permute.xlu0 %3007
    %3011 = vset.pattern.permute.xlu0 0
    %3012 = vperm.xlu0 %3011, %v2878
    %v3013 = vpop.permute.xlu0 %3012
    %3016 = vset.pattern.permute.xlu0 0
    %3017 = vperm.xlu0 %3016, %v2879
    %v3018 = vpop.permute.xlu0 %3017
    %3021 = vset.pattern.permute.xlu0 0
    %3022 = vperm.xlu0 %3021, %v2880
    %v3023 = vpop.permute.xlu0 %3022
    %3026 = vset.pattern.permute.xlu0 0
    %3027 = vperm.xlu0 %3026, %v2881
    %v3028 = vpop.permute.xlu0 %3027
    %3031 = vset.pattern.permute.xlu0 0
    %3032 = vperm.xlu0 %3031, %v2882
    %v3033 = vpop.permute.xlu0 %3032
    %3036 = vset.pattern.permute.xlu0 0
    %3037 = vperm.xlu0 %3036, %v2883
    %v3038 = vpop.permute.xlu0 %3037
    %3041 = vset.pattern.permute.xlu0 0
    %3042 = vperm.xlu0 %3041, %v2884
    %v3043 = vpop.permute.xlu0 %3042
    %v3045 = vmul.f32 %v2820, %v2888
    %v3046 = vmul.f32 %v2821, %v2893
    %v3047 = vmul.f32 %v2822, %v2898
    %v3048 = vmul.f32 %v2823, %v2903
    %v3049 = vmul.f32 %v2824, %v2908
    %v3050 = vmul.f32 %v2825, %v2913
    %v3051 = vmul.f32 %v2826, %v2918
    %v3052 = vmul.f32 %v2827, %v2923
    %v3053 = vmul.f32 %v2828, %v2928
    %v3054 = vmul.f32 %v2829, %v2933
    %v3055 = vmul.f32 %v2830, %v2938
    %v3056 = vmul.f32 %v2831, %v2943
    %v3057 = vmul.f32 %v2832, %v2948
    %v3058 = vmul.f32 %v2833, %v2953
    %v3059 = vmul.f32 %v2834, %v2958
    %v3060 = vmul.f32 %v2835, %v2963
    %v3061 = vmul.f32 %v2836, %v2968
    %v3062 = vmul.f32 %v2837, %v2973
    %v3063 = vmul.f32 %v2838, %v2978
    %v3064 = vmul.f32 %v2839, %v2983
    %v3065 = vmul.f32 %v2840, %v2988
    %v3066 = vmul.f32 %v2841, %v2993
    %v3067 = vmul.f32 %v2842, %v2998
    %v3068 = vmul.f32 %v2843, %v3003
    %v3069 = vmul.f32 %v2844, %v3008
    %v3070 = vmul.f32 %v2845, %v3013
    %v3071 = vmul.f32 %v2846, %v3018
    %v3072 = vmul.f32 %v2847, %v3023
    %v3073 = vmul.f32 %v2848, %v3028
    %v3074 = vmul.f32 %v2849, %v3033
    %v3075 = vmul.f32 %v2850, %v3038
    %v3076 = vmul.f32 %v2851, %v3043
    %3077 = vmatpush.msra.mxu0 %v3060
    %3078 = vmatpush.msra.mxu0 %v3059
    %3079 = vmatpush.msra.mxu0 %v3058
    %3080 = vmatpush.msra.mxu0 %v3057
    %3081 = vmatpush.msra.mxu0 %v3056
    %3082 = vmatpush.msra.mxu0 %v3055
    %3083 = vmatpush.msra.mxu0 %v3054
    %3084 = vmatpush.msra.mxu0 %v3053
    %3085 = vmatpush.msra.mxu0 %v3052
    %3086 = vmatpush.msra.mxu0 %v3051
    %3087 = vmatpush.msra.mxu0 %v3050
    %3088 = vmatpush.msra.mxu0 %v3049
    %3089 = vmatpush.msra.mxu0 %v3048
    %3090 = vmatpush.msra.mxu0 %v3047
    %3091 = vmatpush.msra.mxu0 %v3046
    %3092 = vmatpush.msra.mxu0 %v3045
    %3093 = vmatmul.f32.gmra.mxu0 %v2345
    %v3094 = vpop.f32.mrf.mxu0
    %v3095 = vadd.f32 0.0, %v3094
    %3096 = vmatmul.f32.gmra.mxu0 %v2347
    %v3097 = vpop.f32.mrf.mxu0
    %v3098 = vadd.f32 0.0, %v3097
    %3099 = vmatmul.f32.gmra.mxu0 %v2349
    %v3100 = vpop.f32.mrf.mxu0
    %v3101 = vadd.f32 0.0, %v3100
    %3102 = vmatmul.f32.gmra.mxu0 %v2351
    %v3103 = vpop.f32.mrf.mxu0
    %v3104 = vadd.f32 0.0, %v3103
    %3105 = vmatmul.f32.gmra.mxu0 %v2353
    %v3106 = vpop.f32.mrf.mxu0
    %v3107 = vadd.f32 0.0, %v3106
    %3108 = vmatmul.f32.gmra.mxu0 %v2355
    %v3109 = vpop.f32.mrf.mxu0
    %v3110 = vadd.f32 0.0, %v3109
    %3111 = vmatmul.f32.gmra.mxu0 %v2357
    %v3112 = vpop.f32.mrf.mxu0
    %v3113 = vadd.f32 0.0, %v3112
    %3114 = vmatmul.f32.gmra.mxu0 %v2359
    %v3115 = vpop.f32.mrf.mxu0
    %v3116 = vadd.f32 0.0, %v3115
    %3117 = vmatmul.f32.gmra.mxu0 %v2361
    %v3118 = vpop.f32.mrf.mxu0
    %v3119 = vadd.f32 0.0, %v3118
    %3120 = vmatmul.f32.gmra.mxu0 %v2363
    %v3121 = vpop.f32.mrf.mxu0
    %v3122 = vadd.f32 0.0, %v3121
    %3123 = vmatmul.f32.gmra.mxu0 %v2365
    %v3124 = vpop.f32.mrf.mxu0
    %v3125 = vadd.f32 0.0, %v3124
    %3126 = vmatmul.f32.gmra.mxu0 %v2367
    %v3127 = vpop.f32.mrf.mxu0
    %v3128 = vadd.f32 0.0, %v3127
    %3129 = vmatmul.f32.gmra.mxu0 %v2369
    %v3130 = vpop.f32.mrf.mxu0
    %v3131 = vadd.f32 0.0, %v3130
    %3132 = vmatmul.f32.gmra.mxu0 %v2371
    %v3133 = vpop.f32.mrf.mxu0
    %v3134 = vadd.f32 0.0, %v3133
    %3135 = vmatmul.f32.gmra.mxu0 %v2373
    %v3136 = vpop.f32.mrf.mxu0
    %v3137 = vadd.f32 0.0, %v3136
    %3138 = vmatmul.f32.gmra.mxu0 %v2375
    %v3139 = vpop.f32.mrf.mxu0
    %v3140 = vadd.f32 0.0, %v3139
    %3141 = vdwg.mxu0
    %3142 = vmatpush.msra.mxu0 %v3076
    %3143 = vmatpush.msra.mxu0 %v3075
    %3144 = vmatpush.msra.mxu0 %v3074
    %3145 = vmatpush.msra.mxu0 %v3073
    %3146 = vmatpush.msra.mxu0 %v3072
    %3147 = vmatpush.msra.mxu0 %v3071
    %3148 = vmatpush.msra.mxu0 %v3070
    %3149 = vmatpush.msra.mxu0 %v3069
    %3150 = vmatpush.msra.mxu0 %v3068
    %3151 = vmatpush.msra.mxu0 %v3067
    %3152 = vmatpush.msra.mxu0 %v3066
    %3153 = vmatpush.msra.mxu0 %v3065
    %3154 = vmatpush.msra.mxu0 %v3064
    %3155 = vmatpush.msra.mxu0 %v3063
    %3156 = vmatpush.msra.mxu0 %v3062
    %3157 = vmatpush.msra.mxu0 %v3061
    %3158 = vmatmul.f32.gmra.mxu0 %v2346
    %v3159 = vpop.f32.mrf.mxu0
    %v3160 = vadd.f32 %v3095, %v3159
    %3161 = vmatmul.f32.gmra.mxu0 %v2348
    %v3162 = vpop.f32.mrf.mxu0
    %v3163 = vadd.f32 %v3098, %v3162
    %3164 = vmatmul.f32.gmra.mxu0 %v2350
    %v3165 = vpop.f32.mrf.mxu0
    %v3166 = vadd.f32 %v3101, %v3165
    %3167 = vmatmul.f32.gmra.mxu0 %v2352
    %v3168 = vpop.f32.mrf.mxu0
    %v3169 = vadd.f32 %v3104, %v3168
    %3170 = vmatmul.f32.gmra.mxu0 %v2354
    %v3171 = vpop.f32.mrf.mxu0
    %v3172 = vadd.f32 %v3107, %v3171
    %3173 = vmatmul.f32.gmra.mxu0 %v2356
    %v3174 = vpop.f32.mrf.mxu0
    %v3175 = vadd.f32 %v3110, %v3174
    %3176 = vmatmul.f32.gmra.mxu0 %v2358
    %v3177 = vpop.f32.mrf.mxu0
    %v3178 = vadd.f32 %v3113, %v3177
    %3179 = vmatmul.f32.gmra.mxu0 %v2360
    %v3180 = vpop.f32.mrf.mxu0
    %v3181 = vadd.f32 %v3116, %v3180
    %3182 = vmatmul.f32.gmra.mxu0 %v2362
    %v3183 = vpop.f32.mrf.mxu0
    %v3184 = vadd.f32 %v3119, %v3183
    %3185 = vmatmul.f32.gmra.mxu0 %v2364
    %v3186 = vpop.f32.mrf.mxu0
    %v3187 = vadd.f32 %v3122, %v3186
    %3188 = vmatmul.f32.gmra.mxu0 %v2366
    %v3189 = vpop.f32.mrf.mxu0
    %v3190 = vadd.f32 %v3125, %v3189
    %3191 = vmatmul.f32.gmra.mxu0 %v2368
    %v3192 = vpop.f32.mrf.mxu0
    %v3193 = vadd.f32 %v3128, %v3192
    %3194 = vmatmul.f32.gmra.mxu0 %v2370
    %v3195 = vpop.f32.mrf.mxu0
    %v3196 = vadd.f32 %v3131, %v3195
    %3197 = vmatmul.f32.gmra.mxu0 %v2372
    %v3198 = vpop.f32.mrf.mxu0
    %v3199 = vadd.f32 %v3134, %v3198
    %3200 = vmatmul.f32.gmra.mxu0 %v2374
    %v3201 = vpop.f32.mrf.mxu0
    %v3202 = vadd.f32 %v3137, %v3201
    %3203 = vmatmul.f32.gmra.mxu0 %v2376
    %v3204 = vpop.f32.mrf.mxu0
    %v3205 = vadd.f32 %v3140, %v3204
    %3206 = vdwg.mxu0
    %v3207 = vadd.f32 %v2144, %v3160
    %v3208 = vadd.f32 %v2147, %v3163
    %v3209 = vadd.f32 %v2150, %v3166
    %v3210 = vadd.f32 %v2153, %v3169
    %v3211 = vadd.f32 %v2156, %v3172
    %v3212 = vadd.f32 %v2159, %v3175
    %v3213 = vadd.f32 %v2162, %v3178
    %v3214 = vadd.f32 %v2165, %v3181
    %v3215 = vadd.f32 %v2168, %v3184
    %v3216 = vadd.f32 %v2171, %v3187
    %v3217 = vadd.f32 %v2174, %v3190
    %v3218 = vadd.f32 %v2177, %v3193
    %v3219 = vadd.f32 %v2180, %v3196
    %v3220 = vadd.f32 %v2183, %v3199
    %v3221 = vadd.f32 %v2186, %v3202
    %v3222 = vadd.f32 %v2189, %v3205
    %s3223 = scalar_lea.vmem %s2, 192
    %v3224 = vld [vmem:[%s3223] sm:$0xff]
    %v3225 = vld [vmem:[%s3223 + $0x8] sm:$0xff]
    %v3226 = vld [vmem:[%s3223 + $0x10] sm:$0xff]
    %v3227 = vld [vmem:[%s3223 + $0x18] sm:$0xff]
    %v3228 = vld [vmem:[%s3223 + $0x20] sm:$0xff]
    %v3229 = vld [vmem:[%s3223 + $0x28] sm:$0xff]
    %v3230 = vld [vmem:[%s3223 + $0x30] sm:$0xff]
    %v3231 = vld [vmem:[%s3223 + $0x38] sm:$0xff]
    %s3232 = scalar_lea.vmem %s3, 6
    %v3233 = vld [vmem:[%s3232] sm:$0x3]
    %v3235 = vperm.slane %v3233, 0
    %v3236 = vperm.slane %v3233, 1
    %v3247 = vunpack.c.l.b16 %v3224
    %v3248 = vunpack.c.h.b16 %v3224
    %v3249 = vunpack.c.l.b16 %v3225
    %v3250 = vunpack.c.h.b16 %v3225
    %v3251 = vunpack.c.l.b16 %v3226
    %v3252 = vunpack.c.h.b16 %v3226
    %v3253 = vunpack.c.l.b16 %v3227
    %v3254 = vunpack.c.h.b16 %v3227
    %v3255 = vunpack.c.l.b16 %v3228
    %v3256 = vunpack.c.h.b16 %v3228
    %v3257 = vunpack.c.l.b16 %v3229
    %v3258 = vunpack.c.h.b16 %v3229
    %v3259 = vunpack.c.l.b16 %v3230
    %v3260 = vunpack.c.h.b16 %v3230
    %v3261 = vunpack.c.l.b16 %v3231
    %v3262 = vunpack.c.h.b16 %v3231
    %v3263 = vpack.c.b16 %v3249, %v3247
    %v3264 = vpack.c.b16 %v3250, %v3248
    %v3265 = vpack.c.b16 %v3253, %v3251
    %v3266 = vpack.c.b16 %v3254, %v3252
    %v3267 = vpack.c.b16 %v3257, %v3255
    %v3268 = vpack.c.b16 %v3258, %v3256
    %v3269 = vpack.c.b16 %v3261, %v3259
    %v3270 = vpack.c.b16 %v3262, %v3260
    %3279 = vmatpush.bf16.msra.mxu0 0
    %3280 = vmatpush.bf16.msra.mxu0 0
    %3281 = vmatpush.bf16.msra.mxu0 0
    %3282 = vmatpush.bf16.msra.mxu0 0
    %3283 = vmatpush.bf16.msra.mxu0 %v3269
    %3284 = vmatpush.bf16.msra.mxu0 %v3267
    %3285 = vmatpush.bf16.msra.mxu0 %v3265
    %3286 = vmatpush.bf16.msra.mxu0 %v3263
    %3287 = vmatmul.bf16.gmra.mxu0 %v154
    %v3288 = vpop.f32.mrf.mxu0
    %v3289 = vadd.f32 %v3235, %v3288
    %v3290 = vpop.f32.mrf.mxu0
    %v3291 = vadd.f32 %v3235, %v3290
    %3292 = vmatmul.bf16.gmra.mxu0 %v157
    %v3293 = vpop.f32.mrf.mxu0
    %v3294 = vadd.f32 %v3235, %v3293
    %v3295 = vpop.f32.mrf.mxu0
    %v3296 = vadd.f32 %v3235, %v3295
    %3297 = vmatmul.bf16.gmra.mxu0 %v160
    %v3298 = vpop.f32.mrf.mxu0
    %v3299 = vadd.f32 %v3235, %v3298
    %v3300 = vpop.f32.mrf.mxu0
    %v3301 = vadd.f32 %v3235, %v3300
    %3302 = vmatmul.bf16.gmra.mxu0 %v163
    %v3303 = vpop.f32.mrf.mxu0
    %v3304 = vadd.f32 %v3235, %v3303
    %v3305 = vpop.f32.mrf.mxu0
    %v3306 = vadd.f32 %v3235, %v3305
    %3307 = vmatmul.bf16.gmra.mxu0 %v166
    %v3308 = vpop.f32.mrf.mxu0
    %v3309 = vadd.f32 %v3235, %v3308
    %v3310 = vpop.f32.mrf.mxu0
    %v3311 = vadd.f32 %v3235, %v3310
    %3312 = vmatmul.bf16.gmra.mxu0 %v169
    %v3313 = vpop.f32.mrf.mxu0
    %v3314 = vadd.f32 %v3235, %v3313
    %v3315 = vpop.f32.mrf.mxu0
    %v3316 = vadd.f32 %v3235, %v3315
    %3317 = vmatmul.bf16.gmra.mxu0 %v172
    %v3318 = vpop.f32.mrf.mxu0
    %v3319 = vadd.f32 %v3235, %v3318
    %v3320 = vpop.f32.mrf.mxu0
    %v3321 = vadd.f32 %v3235, %v3320
    %3322 = vmatmul.bf16.gmra.mxu0 %v175
    %v3323 = vpop.f32.mrf.mxu0
    %v3324 = vadd.f32 %v3235, %v3323
    %v3325 = vpop.f32.mrf.mxu0
    %v3326 = vadd.f32 %v3235, %v3325
    %3327 = vdwg.mxu0
    %3328 = vmatpush.bf16.msra.mxu0 0
    %3329 = vmatpush.bf16.msra.mxu0 0
    %3330 = vmatpush.bf16.msra.mxu0 0
    %3331 = vmatpush.bf16.msra.mxu0 0
    %3332 = vmatpush.bf16.msra.mxu0 %v3270
    %3333 = vmatpush.bf16.msra.mxu0 %v3268
    %3334 = vmatpush.bf16.msra.mxu0 %v3266
    %3335 = vmatpush.bf16.msra.mxu0 %v3264
    %3336 = vmatmul.bf16.gmra.mxu0 %v154
    %v3337 = vpop.f32.mrf.mxu0
    %v3338 = vadd.f32 %v3236, %v3337
    %v3339 = vpop.f32.mrf.mxu0
    %v3340 = vadd.f32 %v3236, %v3339
    %3341 = vmatmul.bf16.gmra.mxu0 %v157
    %v3342 = vpop.f32.mrf.mxu0
    %v3343 = vadd.f32 %v3236, %v3342
    %v3344 = vpop.f32.mrf.mxu0
    %v3345 = vadd.f32 %v3236, %v3344
    %3346 = vmatmul.bf16.gmra.mxu0 %v160
    %v3347 = vpop.f32.mrf.mxu0
    %v3348 = vadd.f32 %v3236, %v3347
    %v3349 = vpop.f32.mrf.mxu0
    %v3350 = vadd.f32 %v3236, %v3349
    %3351 = vmatmul.bf16.gmra.mxu0 %v163
    %v3352 = vpop.f32.mrf.mxu0
    %v3353 = vadd.f32 %v3236, %v3352
    %v3354 = vpop.f32.mrf.mxu0
    %v3355 = vadd.f32 %v3236, %v3354
    %3356 = vmatmul.bf16.gmra.mxu0 %v166
    %v3357 = vpop.f32.mrf.mxu0
    %v3358 = vadd.f32 %v3236, %v3357
    %v3359 = vpop.f32.mrf.mxu0
    %v3360 = vadd.f32 %v3236, %v3359
    %3361 = vmatmul.bf16.gmra.mxu0 %v169
    %v3362 = vpop.f32.mrf.mxu0
    %v3363 = vadd.f32 %v3236, %v3362
    %v3364 = vpop.f32.mrf.mxu0
    %v3365 = vadd.f32 %v3236, %v3364
    %3366 = vmatmul.bf16.gmra.mxu0 %v172
    %v3367 = vpop.f32.mrf.mxu0
    %v3368 = vadd.f32 %v3236, %v3367
    %v3369 = vpop.f32.mrf.mxu0
    %v3370 = vadd.f32 %v3236, %v3369
    %3371 = vmatmul.bf16.gmra.mxu0 %v175
    %v3372 = vpop.f32.mrf.mxu0
    %v3373 = vadd.f32 %v3236, %v3372
    %v3374 = vpop.f32.mrf.mxu0
    %v3375 = vadd.f32 %v3236, %v3374
    %3376 = vdwg.mxu0
    %v3377 = vmax.f32 %v3289, 0.0
    %v3378 = vmax.f32 %v3338, 0.0
    %v3379 = vmax.f32 %v3291, 0.0
    %v3380 = vmax.f32 %v3340, 0.0
    %v3381 = vmax.f32 %v3294, 0.0
    %v3382 = vmax.f32 %v3343, 0.0
    %v3383 = vmax.f32 %v3296, 0.0
    %v3384 = vmax.f32 %v3345, 0.0
    %v3385 = vmax.f32 %v3299, 0.0
    %v3386 = vmax.f32 %v3348, 0.0
    %v3387 = vmax.f32 %v3301, 0.0
    %v3388 = vmax.f32 %v3350, 0.0
    %v3389 = vmax.f32 %v3304, 0.0
    %v3390 = vmax.f32 %v3353, 0.0
    %v3391 = vmax.f32 %v3306, 0.0
    %v3392 = vmax.f32 %v3355, 0.0
    %v3393 = vmax.f32 %v3309, 0.0
    %v3394 = vmax.f32 %v3358, 0.0
    %v3395 = vmax.f32 %v3311, 0.0
    %v3396 = vmax.f32 %v3360, 0.0
    %v3397 = vmax.f32 %v3314, 0.0
    %v3398 = vmax.f32 %v3363, 0.0
    %v3399 = vmax.f32 %v3316, 0.0
    %v3400 = vmax.f32 %v3365, 0.0
    %v3401 = vmax.f32 %v3319, 0.0
    %v3402 = vmax.f32 %v3368, 0.0
    %v3403 = vmax.f32 %v3321, 0.0
    %v3404 = vmax.f32 %v3370, 0.0
    %v3405 = vmax.f32 %v3324, 0.0
    %v3406 = vmax.f32 %v3373, 0.0
    %v3407 = vmax.f32 %v3326, 0.0
    %v3408 = vmax.f32 %v3375, 0.0
    %s3409 = scalar_lea.vmem %s4, 384
    %v3410 = vld [vmem:[%s3409] sm:$0xf]
    %v3411 = vld [vmem:[%s3409 + $0x4] sm:$0xf]
    %v3412 = vld [vmem:[%s3409 + $0x8] sm:$0xf]
    %v3413 = vld [vmem:[%s3409 + $0xc] sm:$0xf]
    %v3414 = vld [vmem:[%s3409 + $0x10] sm:$0xf]
    %v3415 = vld [vmem:[%s3409 + $0x14] sm:$0xf]
    %v3416 = vld [vmem:[%s3409 + $0x18] sm:$0xf]
    %v3417 = vld [vmem:[%s3409 + $0x1c] sm:$0xf]
    %v3418 = vld [vmem:[%s3409 + $0x20] sm:$0xf]
    %v3419 = vld [vmem:[%s3409 + $0x24] sm:$0xf]
    %v3420 = vld [vmem:[%s3409 + $0x28] sm:$0xf]
    %v3421 = vld [vmem:[%s3409 + $0x2c] sm:$0xf]
    %v3422 = vld [vmem:[%s3409 + $0x30] sm:$0xf]
    %v3423 = vld [vmem:[%s3409 + $0x34] sm:$0xf]
    %v3424 = vld [vmem:[%s3409 + $0x38] sm:$0xf]
    %v3425 = vld [vmem:[%s3409 + $0x3c] sm:$0xf]
    %v3426 = vld [vmem:[%s3409 + $0x40] sm:$0xf]
    %v3427 = vld [vmem:[%s3409 + $0x44] sm:$0xf]
    %v3428 = vld [vmem:[%s3409 + $0x48] sm:$0xf]
    %v3429 = vld [vmem:[%s3409 + $0x4c] sm:$0xf]
    %v3430 = vld [vmem:[%s3409 + $0x50] sm:$0xf]
    %v3431 = vld [vmem:[%s3409 + $0x54] sm:$0xf]
    %v3432 = vld [vmem:[%s3409 + $0x58] sm:$0xf]
    %v3433 = vld [vmem:[%s3409 + $0x5c] sm:$0xf]
    %v3434 = vld [vmem:[%s3409 + $0x60] sm:$0xf]
    %v3435 = vld [vmem:[%s3409 + $0x64] sm:$0xf]
    %v3436 = vld [vmem:[%s3409 + $0x68] sm:$0xf]
    %v3437 = vld [vmem:[%s3409 + $0x6c] sm:$0xf]
    %v3438 = vld [vmem:[%s3409 + $0x70] sm:$0xf]
    %v3439 = vld [vmem:[%s3409 + $0x74] sm:$0xf]
    %v3440 = vld [vmem:[%s3409 + $0x78] sm:$0xf]
    %v3441 = vld [vmem:[%s3409 + $0x7c] sm:$0xf]
    %s3442 = scalar_lea.vmem %s5, 768
    %v3443 = vld [vmem:[%s3442] sm:$0xff]
    %v3444 = vld [vmem:[%s3442 + $0x8] sm:$0xff]
    %v3445 = vld [vmem:[%s3442 + $0x10] sm:$0xff]
    %v3446 = vld [vmem:[%s3442 + $0x18] sm:$0xff]
    %v3447 = vld [vmem:[%s3442 + $0x20] sm:$0xff]
    %v3448 = vld [vmem:[%s3442 + $0x28] sm:$0xff]
    %v3449 = vld [vmem:[%s3442 + $0x30] sm:$0xff]
    %v3450 = vld [vmem:[%s3442 + $0x38] sm:$0xff]
    %v3451 = vld [vmem:[%s3442 + $0x40] sm:$0xff]
    %v3452 = vld [vmem:[%s3442 + $0x48] sm:$0xff]
    %v3453 = vld [vmem:[%s3442 + $0x50] sm:$0xff]
    %v3454 = vld [vmem:[%s3442 + $0x58] sm:$0xff]
    %v3455 = vld [vmem:[%s3442 + $0x60] sm:$0xff]
    %v3456 = vld [vmem:[%s3442 + $0x68] sm:$0xff]
    %v3457 = vld [vmem:[%s3442 + $0x70] sm:$0xff]
    %v3458 = vld [vmem:[%s3442 + $0x78] sm:$0xff]
    %v3459 = vld [vmem:[%s3442 + $0x80] sm:$0xff]
    %v3460 = vld [vmem:[%s3442 + $0x88] sm:$0xff]
    %v3461 = vld [vmem:[%s3442 + $0x90] sm:$0xff]
    %v3462 = vld [vmem:[%s3442 + $0x98] sm:$0xff]
    %v3463 = vld [vmem:[%s3442 + $0xa0] sm:$0xff]
    %v3464 = vld [vmem:[%s3442 + $0xa8] sm:$0xff]
    %v3465 = vld [vmem:[%s3442 + $0xb0] sm:$0xff]
    %v3466 = vld [vmem:[%s3442 + $0xb8] sm:$0xff]
    %v3467 = vld [vmem:[%s3442 + $0xc0] sm:$0xff]
    %v3468 = vld [vmem:[%s3442 + $0xc8] sm:$0xff]
    %v3469 = vld [vmem:[%s3442 + $0xd0] sm:$0xff]
    %v3470 = vld [vmem:[%s3442 + $0xd8] sm:$0xff]
    %v3471 = vld [vmem:[%s3442 + $0xe0] sm:$0xff]
    %v3472 = vld [vmem:[%s3442 + $0xe8] sm:$0xff]
    %v3473 = vld [vmem:[%s3442 + $0xf0] sm:$0xff]
    %v3474 = vld [vmem:[%s3442 + $0xf8] sm:$0xff]
    %3476 = vset.pattern.permute.xlu0 0
    %3477 = vperm.xlu0 %3476, %v3443
    %v3478 = vpop.permute.xlu0 %3477
    %3481 = vset.pattern.permute.xlu0 0
    %3482 = vperm.xlu0 %3481, %v3444
    %v3483 = vpop.permute.xlu0 %3482
    %3486 = vset.pattern.permute.xlu0 0
    %3487 = vperm.xlu0 %3486, %v3445
    %v3488 = vpop.permute.xlu0 %3487
    %3491 = vset.pattern.permute.xlu0 0
    %3492 = vperm.xlu0 %3491, %v3446
    %v3493 = vpop.permute.xlu0 %3492
    %3496 = vset.pattern.permute.xlu0 0
    %3497 = vperm.xlu0 %3496, %v3447
    %v3498 = vpop.permute.xlu0 %3497
    %3501 = vset.pattern.permute.xlu0 0
    %3502 = vperm.xlu0 %3501, %v3448
    %v3503 = vpop.permute.xlu0 %3502
    %3506 = vset.pattern.permute.xlu0 0
    %3507 = vperm.xlu0 %3506, %v3449
    %v3508 = vpop.permute.xlu0 %3507
    %3511 = vset.pattern.permute.xlu0 0
    %3512 = vperm.xlu0 %3511, %v3450
    %v3513 = vpop.permute.xlu0 %3512
    %3516 = vset.pattern.permute.xlu0 0
    %3517 = vperm.xlu0 %3516, %v3451
    %v3518 = vpop.permute.xlu0 %3517
    %3521 = vset.pattern.permute.xlu0 0
    %3522 = vperm.xlu0 %3521, %v3452
    %v3523 = vpop.permute.xlu0 %3522
    %3526 = vset.pattern.permute.xlu0 0
    %3527 = vperm.xlu0 %3526, %v3453
    %v3528 = vpop.permute.xlu0 %3527
    %3531 = vset.pattern.permute.xlu0 0
    %3532 = vperm.xlu0 %3531, %v3454
    %v3533 = vpop.permute.xlu0 %3532
    %3536 = vset.pattern.permute.xlu0 0
    %3537 = vperm.xlu0 %3536, %v3455
    %v3538 = vpop.permute.xlu0 %3537
    %3541 = vset.pattern.permute.xlu0 0
    %3542 = vperm.xlu0 %3541, %v3456
    %v3543 = vpop.permute.xlu0 %3542
    %3546 = vset.pattern.permute.xlu0 0
    %3547 = vperm.xlu0 %3546, %v3457
    %v3548 = vpop.permute.xlu0 %3547
    %3551 = vset.pattern.permute.xlu0 0
    %3552 = vperm.xlu0 %3551, %v3458
    %v3553 = vpop.permute.xlu0 %3552
    %3556 = vset.pattern.permute.xlu0 0
    %3557 = vperm.xlu0 %3556, %v3459
    %v3558 = vpop.permute.xlu0 %3557
    %3561 = vset.pattern.permute.xlu0 0
    %3562 = vperm.xlu0 %3561, %v3460
    %v3563 = vpop.permute.xlu0 %3562
    %3566 = vset.pattern.permute.xlu0 0
    %3567 = vperm.xlu0 %3566, %v3461
    %v3568 = vpop.permute.xlu0 %3567
    %3571 = vset.pattern.permute.xlu0 0
    %3572 = vperm.xlu0 %3571, %v3462
    %v3573 = vpop.permute.xlu0 %3572
    %3576 = vset.pattern.permute.xlu0 0
    %3577 = vperm.xlu0 %3576, %v3463
    %v3578 = vpop.permute.xlu0 %3577
    %3581 = vset.pattern.permute.xlu0 0
    %3582 = vperm.xlu0 %3581, %v3464
    %v3583 = vpop.permute.xlu0 %3582
    %3586 = vset.pattern.permute.xlu0 0
    %3587 = vperm.xlu0 %3586, %v3465
    %v3588 = vpop.permute.xlu0 %3587
    %3591 = vset.pattern.permute.xlu0 0
    %3592 = vperm.xlu0 %3591, %v3466
    %v3593 = vpop.permute.xlu0 %3592
    %3596 = vset.pattern.permute.xlu0 0
    %3597 = vperm.xlu0 %3596, %v3467
    %v3598 = vpop.permute.xlu0 %3597
    %3601 = vset.pattern.permute.xlu0 0
    %3602 = vperm.xlu0 %3601, %v3468
    %v3603 = vpop.permute.xlu0 %3602
    %3606 = vset.pattern.permute.xlu0 0
    %3607 = vperm.xlu0 %3606, %v3469
    %v3608 = vpop.permute.xlu0 %3607
    %3611 = vset.pattern.permute.xlu0 0
    %3612 = vperm.xlu0 %3611, %v3470
    %v3613 = vpop.permute.xlu0 %3612
    %3616 = vset.pattern.permute.xlu0 0
    %3617 = vperm.xlu0 %3616, %v3471
    %v3618 = vpop.permute.xlu0 %3617
    %3621 = vset.pattern.permute.xlu0 0
    %3622 = vperm.xlu0 %3621, %v3472
    %v3623 = vpop.permute.xlu0 %3622
    %3626 = vset.pattern.permute.xlu0 0
    %3627 = vperm.xlu0 %3626, %v3473
    %v3628 = vpop.permute.xlu0 %3627
    %3631 = vset.pattern.permute.xlu0 0
    %3632 = vperm.xlu0 %3631, %v3474
    %v3633 = vpop.permute.xlu0 %3632
    %v3667 = vunpack.c.l.b16 %v3410
    %v3668 = vunpack.c.l.b16 %v3411
    %v3669 = vunpack.c.l.b16 %v3412
    %v3670 = vunpack.c.l.b16 %v3413
    %v3671 = vunpack.c.l.b16 %v3414
    %v3672 = vunpack.c.l.b16 %v3415
    %v3673 = vunpack.c.l.b16 %v3416
    %v3674 = vunpack.c.l.b16 %v3417
    %v3675 = vunpack.c.l.b16 %v3418
    %v3676 = vunpack.c.l.b16 %v3419
    %v3677 = vunpack.c.l.b16 %v3420
    %v3678 = vunpack.c.l.b16 %v3421
    %v3679 = vunpack.c.l.b16 %v3422
    %v3680 = vunpack.c.l.b16 %v3423
    %v3681 = vunpack.c.l.b16 %v3424
    %v3682 = vunpack.c.l.b16 %v3425
    %v3683 = vunpack.c.l.b16 %v3426
    %v3684 = vunpack.c.l.b16 %v3427
    %v3685 = vunpack.c.l.b16 %v3428
    %v3686 = vunpack.c.l.b16 %v3429
    %v3687 = vunpack.c.l.b16 %v3430
    %v3688 = vunpack.c.l.b16 %v3431
    %v3689 = vunpack.c.l.b16 %v3432
    %v3690 = vunpack.c.l.b16 %v3433
    %v3691 = vunpack.c.l.b16 %v3434
    %v3692 = vunpack.c.l.b16 %v3435
    %v3693 = vunpack.c.l.b16 %v3436
    %v3694 = vunpack.c.l.b16 %v3437
    %v3695 = vunpack.c.l.b16 %v3438
    %v3696 = vunpack.c.l.b16 %v3439
    %v3697 = vunpack.c.l.b16 %v3440
    %v3698 = vunpack.c.l.b16 %v3441
    %v3699 = vpack.c.b16 %v3668, %v3667
    %v3700 = vpack.c.b16 %v3670, %v3669
    %v3701 = vpack.c.b16 %v3672, %v3671
    %v3702 = vpack.c.b16 %v3674, %v3673
    %v3703 = vpack.c.b16 %v3676, %v3675
    %v3704 = vpack.c.b16 %v3678, %v3677
    %v3705 = vpack.c.b16 %v3680, %v3679
    %v3706 = vpack.c.b16 %v3682, %v3681
    %v3707 = vpack.c.b16 %v3684, %v3683
    %v3708 = vpack.c.b16 %v3686, %v3685
    %v3709 = vpack.c.b16 %v3688, %v3687
    %v3710 = vpack.c.b16 %v3690, %v3689
    %v3711 = vpack.c.b16 %v3692, %v3691
    %v3712 = vpack.c.b16 %v3694, %v3693
    %v3713 = vpack.c.b16 %v3696, %v3695
    %v3714 = vpack.c.b16 %v3698, %v3697
    %v3716 = vsel %vm651, %v3699, 0
    %v3719 = vsel %vm651, %v3700, 0
    %v3722 = vsel %vm651, %v3701, 0
    %v3725 = vsel %vm651, %v3702, 0
    %v3728 = vsel %vm651, %v3703, 0
    %v3731 = vsel %vm651, %v3704, 0
    %v3734 = vsel %vm651, %v3705, 0
    %v3737 = vsel %vm651, %v3706, 0
    %v3740 = vsel %vm651, %v3707, 0
    %v3743 = vsel %vm651, %v3708, 0
    %v3746 = vsel %vm651, %v3709, 0
    %v3749 = vsel %vm651, %v3710, 0
    %v3752 = vsel %vm651, %v3711, 0
    %v3755 = vsel %vm651, %v3712, 0
    %v3758 = vsel %vm651, %v3713, 0
    %v3761 = vsel %vm651, %v3714, 0
    %3763 = vmatpush.bf16.msra.mxu0 0
    %3764 = vmatpush.bf16.msra.mxu0 0
    %3765 = vmatpush.bf16.msra.mxu0 0
    %3766 = vmatpush.bf16.msra.mxu0 %v645
    %3767 = vmatpush.bf16.msra.mxu0 %v644
    %3768 = vmatpush.bf16.msra.mxu0 %v643
    %3769 = vmatpush.bf16.msra.mxu0 %v642
    %3770 = vmatpush.bf16.msra.mxu0 %v641
    %3771 = vmatmul.bf16.gmra.mxu0 %v3716
    %v3772 = vpop.f32.mrf.mxu0
    %v3773 = vadd.f32 %v3478, %v3772
    %v3774 = vpop.f32.mrf.mxu0
    %v3775 = vadd.f32 %v3483, %v3774
    %3776 = vmatmul.bf16.gmra.mxu0 %v3719
    %v3777 = vpop.f32.mrf.mxu0
    %v3778 = vadd.f32 %v3488, %v3777
    %v3779 = vpop.f32.mrf.mxu0
    %v3780 = vadd.f32 %v3493, %v3779
    %3781 = vmatmul.bf16.gmra.mxu0 %v3722
    %v3782 = vpop.f32.mrf.mxu0
    %v3783 = vadd.f32 %v3498, %v3782
    %v3784 = vpop.f32.mrf.mxu0
    %v3785 = vadd.f32 %v3503, %v3784
    %3786 = vmatmul.bf16.gmra.mxu0 %v3725
    %v3787 = vpop.f32.mrf.mxu0
    %v3788 = vadd.f32 %v3508, %v3787
    %v3789 = vpop.f32.mrf.mxu0
    %v3790 = vadd.f32 %v3513, %v3789
    %3791 = vmatmul.bf16.gmra.mxu0 %v3728
    %v3792 = vpop.f32.mrf.mxu0
    %v3793 = vadd.f32 %v3518, %v3792
    %v3794 = vpop.f32.mrf.mxu0
    %v3795 = vadd.f32 %v3523, %v3794
    %3796 = vmatmul.bf16.gmra.mxu0 %v3731
    %v3797 = vpop.f32.mrf.mxu0
    %v3798 = vadd.f32 %v3528, %v3797
    %v3799 = vpop.f32.mrf.mxu0
    %v3800 = vadd.f32 %v3533, %v3799
    %3801 = vmatmul.bf16.gmra.mxu0 %v3734
    %v3802 = vpop.f32.mrf.mxu0
    %v3803 = vadd.f32 %v3538, %v3802
    %v3804 = vpop.f32.mrf.mxu0
    %v3805 = vadd.f32 %v3543, %v3804
    %3806 = vmatmul.bf16.gmra.mxu0 %v3737
    %v3807 = vpop.f32.mrf.mxu0
    %v3808 = vadd.f32 %v3548, %v3807
    %v3809 = vpop.f32.mrf.mxu0
    %v3810 = vadd.f32 %v3553, %v3809
    %3811 = vmatmul.bf16.gmra.mxu0 %v3740
    %v3812 = vpop.f32.mrf.mxu0
    %v3813 = vadd.f32 %v3558, %v3812
    %v3814 = vpop.f32.mrf.mxu0
    %v3815 = vadd.f32 %v3563, %v3814
    %3816 = vmatmul.bf16.gmra.mxu0 %v3743
    %v3817 = vpop.f32.mrf.mxu0
    %v3818 = vadd.f32 %v3568, %v3817
    %v3819 = vpop.f32.mrf.mxu0
    %v3820 = vadd.f32 %v3573, %v3819
    %3821 = vmatmul.bf16.gmra.mxu0 %v3746
    %v3822 = vpop.f32.mrf.mxu0
    %v3823 = vadd.f32 %v3578, %v3822
    %v3824 = vpop.f32.mrf.mxu0
    %v3825 = vadd.f32 %v3583, %v3824
    %3826 = vmatmul.bf16.gmra.mxu0 %v3749
    %v3827 = vpop.f32.mrf.mxu0
    %v3828 = vadd.f32 %v3588, %v3827
    %v3829 = vpop.f32.mrf.mxu0
    %v3830 = vadd.f32 %v3593, %v3829
    %3831 = vmatmul.bf16.gmra.mxu0 %v3752
    %v3832 = vpop.f32.mrf.mxu0
    %v3833 = vadd.f32 %v3598, %v3832
    %v3834 = vpop.f32.mrf.mxu0
    %v3835 = vadd.f32 %v3603, %v3834
    %3836 = vmatmul.bf16.gmra.mxu0 %v3755
    %v3837 = vpop.f32.mrf.mxu0
    %v3838 = vadd.f32 %v3608, %v3837
    %v3839 = vpop.f32.mrf.mxu0
    %v3840 = vadd.f32 %v3613, %v3839
    %3841 = vmatmul.bf16.gmra.mxu0 %v3758
    %v3842 = vpop.f32.mrf.mxu0
    %v3843 = vadd.f32 %v3618, %v3842
    %v3844 = vpop.f32.mrf.mxu0
    %v3845 = vadd.f32 %v3623, %v3844
    %3846 = vmatmul.bf16.gmra.mxu0 %v3761
    %v3847 = vpop.f32.mrf.mxu0
    %v3848 = vadd.f32 %v3628, %v3847
    %v3849 = vpop.f32.mrf.mxu0
    %v3850 = vadd.f32 %v3633, %v3849
    %3851 = vdwg.mxu0
    %v3852 = vmax.f32 %v3773, 0.0
    %v3853 = vmax.f32 %v3775, 0.0
    %v3854 = vmax.f32 %v3778, 0.0
    %v3855 = vmax.f32 %v3780, 0.0
    %v3856 = vmax.f32 %v3783, 0.0
    %v3857 = vmax.f32 %v3785, 0.0
    %v3858 = vmax.f32 %v3788, 0.0
    %v3859 = vmax.f32 %v3790, 0.0
    %v3860 = vmax.f32 %v3793, 0.0
    %v3861 = vmax.f32 %v3795, 0.0
    %v3862 = vmax.f32 %v3798, 0.0
    %v3863 = vmax.f32 %v3800, 0.0
    %v3864 = vmax.f32 %v3803, 0.0
    %v3865 = vmax.f32 %v3805, 0.0
    %v3866 = vmax.f32 %v3808, 0.0
    %v3867 = vmax.f32 %v3810, 0.0
    %v3868 = vmax.f32 %v3813, 0.0
    %v3869 = vmax.f32 %v3815, 0.0
    %v3870 = vmax.f32 %v3818, 0.0
    %v3871 = vmax.f32 %v3820, 0.0
    %v3872 = vmax.f32 %v3823, 0.0
    %v3873 = vmax.f32 %v3825, 0.0
    %v3874 = vmax.f32 %v3828, 0.0
    %v3875 = vmax.f32 %v3830, 0.0
    %v3876 = vmax.f32 %v3833, 0.0
    %v3877 = vmax.f32 %v3835, 0.0
    %v3878 = vmax.f32 %v3838, 0.0
    %v3879 = vmax.f32 %v3840, 0.0
    %v3880 = vmax.f32 %v3843, 0.0
    %v3881 = vmax.f32 %v3845, 0.0
    %v3882 = vmax.f32 %v3848, 0.0
    %v3883 = vmax.f32 %v3850, 0.0
    %s3884 = scalar_lea.vmem %s6, 768
    %v3885 = vld [vmem:[%s3884] sm:$0xff]
    %v3886 = vld [vmem:[%s3884 + $0x8] sm:$0xff]
    %v3887 = vld [vmem:[%s3884 + $0x10] sm:$0xff]
    %v3888 = vld [vmem:[%s3884 + $0x18] sm:$0xff]
    %v3889 = vld [vmem:[%s3884 + $0x20] sm:$0xff]
    %v3890 = vld [vmem:[%s3884 + $0x28] sm:$0xff]
    %v3891 = vld [vmem:[%s3884 + $0x30] sm:$0xff]
    %v3892 = vld [vmem:[%s3884 + $0x38] sm:$0xff]
    %v3893 = vld [vmem:[%s3884 + $0x40] sm:$0xff]
    %v3894 = vld [vmem:[%s3884 + $0x48] sm:$0xff]
    %v3895 = vld [vmem:[%s3884 + $0x50] sm:$0xff]
    %v3896 = vld [vmem:[%s3884 + $0x58] sm:$0xff]
    %v3897 = vld [vmem:[%s3884 + $0x60] sm:$0xff]
    %v3898 = vld [vmem:[%s3884 + $0x68] sm:$0xff]
    %v3899 = vld [vmem:[%s3884 + $0x70] sm:$0xff]
    %v3900 = vld [vmem:[%s3884 + $0x78] sm:$0xff]
    %v3901 = vld [vmem:[%s3884 + $0x80] sm:$0xff]
    %v3902 = vld [vmem:[%s3884 + $0x88] sm:$0xff]
    %v3903 = vld [vmem:[%s3884 + $0x90] sm:$0xff]
    %v3904 = vld [vmem:[%s3884 + $0x98] sm:$0xff]
    %v3905 = vld [vmem:[%s3884 + $0xa0] sm:$0xff]
    %v3906 = vld [vmem:[%s3884 + $0xa8] sm:$0xff]
    %v3907 = vld [vmem:[%s3884 + $0xb0] sm:$0xff]
    %v3908 = vld [vmem:[%s3884 + $0xb8] sm:$0xff]
    %v3909 = vld [vmem:[%s3884 + $0xc0] sm:$0xff]
    %v3910 = vld [vmem:[%s3884 + $0xc8] sm:$0xff]
    %v3911 = vld [vmem:[%s3884 + $0xd0] sm:$0xff]
    %v3912 = vld [vmem:[%s3884 + $0xd8] sm:$0xff]
    %v3913 = vld [vmem:[%s3884 + $0xe0] sm:$0xff]
    %v3914 = vld [vmem:[%s3884 + $0xe8] sm:$0xff]
    %v3915 = vld [vmem:[%s3884 + $0xf0] sm:$0xff]
    %v3916 = vld [vmem:[%s3884 + $0xf8] sm:$0xff]
    %3918 = vset.pattern.permute.xlu0 0
    %3919 = vperm.xlu0 %3918, %v3885
    %v3920 = vpop.permute.xlu0 %3919
    %3923 = vset.pattern.permute.xlu0 0
    %3924 = vperm.xlu0 %3923, %v3886
    %v3925 = vpop.permute.xlu0 %3924
    %3928 = vset.pattern.permute.xlu0 0
    %3929 = vperm.xlu0 %3928, %v3887
    %v3930 = vpop.permute.xlu0 %3929
    %3933 = vset.pattern.permute.xlu0 0
    %3934 = vperm.xlu0 %3933, %v3888
    %v3935 = vpop.permute.xlu0 %3934
    %3938 = vset.pattern.permute.xlu0 0
    %3939 = vperm.xlu0 %3938, %v3889
    %v3940 = vpop.permute.xlu0 %3939
    %3943 = vset.pattern.permute.xlu0 0
    %3944 = vperm.xlu0 %3943, %v3890
    %v3945 = vpop.permute.xlu0 %3944
    %3948 = vset.pattern.permute.xlu0 0
    %3949 = vperm.xlu0 %3948, %v3891
    %v3950 = vpop.permute.xlu0 %3949
    %3953 = vset.pattern.permute.xlu0 0
    %3954 = vperm.xlu0 %3953, %v3892
    %v3955 = vpop.permute.xlu0 %3954
    %3958 = vset.pattern.permute.xlu0 0
    %3959 = vperm.xlu0 %3958, %v3893
    %v3960 = vpop.permute.xlu0 %3959
    %3963 = vset.pattern.permute.xlu0 0
    %3964 = vperm.xlu0 %3963, %v3894
    %v3965 = vpop.permute.xlu0 %3964
    %3968 = vset.pattern.permute.xlu0 0
    %3969 = vperm.xlu0 %3968, %v3895
    %v3970 = vpop.permute.xlu0 %3969
    %3973 = vset.pattern.permute.xlu0 0
    %3974 = vperm.xlu0 %3973, %v3896
    %v3975 = vpop.permute.xlu0 %3974
    %3978 = vset.pattern.permute.xlu0 0
    %3979 = vperm.xlu0 %3978, %v3897
    %v3980 = vpop.permute.xlu0 %3979
    %3983 = vset.pattern.permute.xlu0 0
    %3984 = vperm.xlu0 %3983, %v3898
    %v3985 = vpop.permute.xlu0 %3984
    %3988 = vset.pattern.permute.xlu0 0
    %3989 = vperm.xlu0 %3988, %v3899
    %v3990 = vpop.permute.xlu0 %3989
    %3993 = vset.pattern.permute.xlu0 0
    %3994 = vperm.xlu0 %3993, %v3900
    %v3995 = vpop.permute.xlu0 %3994
    %3998 = vset.pattern.permute.xlu0 0
    %3999 = vperm.xlu0 %3998, %v3901
    %v4000 = vpop.permute.xlu0 %3999
    %4003 = vset.pattern.permute.xlu0 0
    %4004 = vperm.xlu0 %4003, %v3902
    %v4005 = vpop.permute.xlu0 %4004
    %4008 = vset.pattern.permute.xlu0 0
    %4009 = vperm.xlu0 %4008, %v3903
    %v4010 = vpop.permute.xlu0 %4009
    %4013 = vset.pattern.permute.xlu0 0
    %4014 = vperm.xlu0 %4013, %v3904
    %v4015 = vpop.permute.xlu0 %4014
    %4018 = vset.pattern.permute.xlu0 0
    %4019 = vperm.xlu0 %4018, %v3905
    %v4020 = vpop.permute.xlu0 %4019
    %4023 = vset.pattern.permute.xlu0 0
    %4024 = vperm.xlu0 %4023, %v3906
    %v4025 = vpop.permute.xlu0 %4024
    %4028 = vset.pattern.permute.xlu0 0
    %4029 = vperm.xlu0 %4028, %v3907
    %v4030 = vpop.permute.xlu0 %4029
    %4033 = vset.pattern.permute.xlu0 0
    %4034 = vperm.xlu0 %4033, %v3908
    %v4035 = vpop.permute.xlu0 %4034
    %4038 = vset.pattern.permute.xlu0 0
    %4039 = vperm.xlu0 %4038, %v3909
    %v4040 = vpop.permute.xlu0 %4039
    %4043 = vset.pattern.permute.xlu0 0
    %4044 = vperm.xlu0 %4043, %v3910
    %v4045 = vpop.permute.xlu0 %4044
    %4048 = vset.pattern.permute.xlu0 0
    %4049 = vperm.xlu0 %4048, %v3911
    %v4050 = vpop.permute.xlu0 %4049
    %4053 = vset.pattern.permute.xlu0 0
    %4054 = vperm.xlu0 %4053, %v3912
    %v4055 = vpop.permute.xlu0 %4054
    %4058 = vset.pattern.permute.xlu0 0
    %4059 = vperm.xlu0 %4058, %v3913
    %v4060 = vpop.permute.xlu0 %4059
    %4063 = vset.pattern.permute.xlu0 0
    %4064 = vperm.xlu0 %4063, %v3914
    %v4065 = vpop.permute.xlu0 %4064
    %4068 = vset.pattern.permute.xlu0 0
    %4069 = vperm.xlu0 %4068, %v3915
    %v4070 = vpop.permute.xlu0 %4069
    %4073 = vset.pattern.permute.xlu0 0
    %4074 = vperm.xlu0 %4073, %v3916
    %v4075 = vpop.permute.xlu0 %4074
    %v4077 = vmul.f32 %v3852, %v3920
    %v4078 = vmul.f32 %v3853, %v3925
    %v4079 = vmul.f32 %v3854, %v3930
    %v4080 = vmul.f32 %v3855, %v3935
    %v4081 = vmul.f32 %v3856, %v3940
    %v4082 = vmul.f32 %v3857, %v3945
    %v4083 = vmul.f32 %v3858, %v3950
    %v4084 = vmul.f32 %v3859, %v3955
    %v4085 = vmul.f32 %v3860, %v3960
    %v4086 = vmul.f32 %v3861, %v3965
    %v4087 = vmul.f32 %v3862, %v3970
    %v4088 = vmul.f32 %v3863, %v3975
    %v4089 = vmul.f32 %v3864, %v3980
    %v4090 = vmul.f32 %v3865, %v3985
    %v4091 = vmul.f32 %v3866, %v3990
    %v4092 = vmul.f32 %v3867, %v3995
    %v4093 = vmul.f32 %v3868, %v4000
    %v4094 = vmul.f32 %v3869, %v4005
    %v4095 = vmul.f32 %v3870, %v4010
    %v4096 = vmul.f32 %v3871, %v4015
    %v4097 = vmul.f32 %v3872, %v4020
    %v4098 = vmul.f32 %v3873, %v4025
    %v4099 = vmul.f32 %v3874, %v4030
    %v4100 = vmul.f32 %v3875, %v4035
    %v4101 = vmul.f32 %v3876, %v4040
    %v4102 = vmul.f32 %v3877, %v4045
    %v4103 = vmul.f32 %v3878, %v4050
    %v4104 = vmul.f32 %v3879, %v4055
    %v4105 = vmul.f32 %v3880, %v4060
    %v4106 = vmul.f32 %v3881, %v4065
    %v4107 = vmul.f32 %v3882, %v4070
    %v4108 = vmul.f32 %v3883, %v4075
    %4109 = vmatpush.msra.mxu0 %v4092
    %4110 = vmatpush.msra.mxu0 %v4091
    %4111 = vmatpush.msra.mxu0 %v4090
    %4112 = vmatpush.msra.mxu0 %v4089
    %4113 = vmatpush.msra.mxu0 %v4088
    %4114 = vmatpush.msra.mxu0 %v4087
    %4115 = vmatpush.msra.mxu0 %v4086
    %4116 = vmatpush.msra.mxu0 %v4085
    %4117 = vmatpush.msra.mxu0 %v4084
    %4118 = vmatpush.msra.mxu0 %v4083
    %4119 = vmatpush.msra.mxu0 %v4082
    %4120 = vmatpush.msra.mxu0 %v4081
    %4121 = vmatpush.msra.mxu0 %v4080
    %4122 = vmatpush.msra.mxu0 %v4079
    %4123 = vmatpush.msra.mxu0 %v4078
    %4124 = vmatpush.msra.mxu0 %v4077
    %4125 = vmatmul.f32.gmra.mxu0 %v3377
    %v4126 = vpop.f32.mrf.mxu0
    %v4127 = vadd.f32 0.0, %v4126
    %4128 = vmatmul.f32.gmra.mxu0 %v3379
    %v4129 = vpop.f32.mrf.mxu0
    %v4130 = vadd.f32 0.0, %v4129
    %4131 = vmatmul.f32.gmra.mxu0 %v3381
    %v4132 = vpop.f32.mrf.mxu0
    %v4133 = vadd.f32 0.0, %v4132
    %4134 = vmatmul.f32.gmra.mxu0 %v3383
    %v4135 = vpop.f32.mrf.mxu0
    %v4136 = vadd.f32 0.0, %v4135
    %4137 = vmatmul.f32.gmra.mxu0 %v3385
    %v4138 = vpop.f32.mrf.mxu0
    %v4139 = vadd.f32 0.0, %v4138
    %4140 = vmatmul.f32.gmra.mxu0 %v3387
    %v4141 = vpop.f32.mrf.mxu0
    %v4142 = vadd.f32 0.0, %v4141
    %4143 = vmatmul.f32.gmra.mxu0 %v3389
    %v4144 = vpop.f32.mrf.mxu0
    %v4145 = vadd.f32 0.0, %v4144
    %4146 = vmatmul.f32.gmra.mxu0 %v3391
    %v4147 = vpop.f32.mrf.mxu0
    %v4148 = vadd.f32 0.0, %v4147
    %4149 = vmatmul.f32.gmra.mxu0 %v3393
    %v4150 = vpop.f32.mrf.mxu0
    %v4151 = vadd.f32 0.0, %v4150
    %4152 = vmatmul.f32.gmra.mxu0 %v3395
    %v4153 = vpop.f32.mrf.mxu0
    %v4154 = vadd.f32 0.0, %v4153
    %4155 = vmatmul.f32.gmra.mxu0 %v3397
    %v4156 = vpop.f32.mrf.mxu0
    %v4157 = vadd.f32 0.0, %v4156
    %4158 = vmatmul.f32.gmra.mxu0 %v3399
    %v4159 = vpop.f32.mrf.mxu0
    %v4160 = vadd.f32 0.0, %v4159
    %4161 = vmatmul.f32.gmra.mxu0 %v3401
    %v4162 = vpop.f32.mrf.mxu0
    %v4163 = vadd.f32 0.0, %v4162
    %4164 = vmatmul.f32.gmra.mxu0 %v3403
    %v4165 = vpop.f32.mrf.mxu0
    %v4166 = vadd.f32 0.0, %v4165
    %4167 = vmatmul.f32.gmra.mxu0 %v3405
    %v4168 = vpop.f32.mrf.mxu0
    %v4169 = vadd.f32 0.0, %v4168
    %4170 = vmatmul.f32.gmra.mxu0 %v3407
    %v4171 = vpop.f32.mrf.mxu0
    %v4172 = vadd.f32 0.0, %v4171
    %4173 = vdwg.mxu0
    %4174 = vmatpush.msra.mxu0 %v4108
    %4175 = vmatpush.msra.mxu0 %v4107
    %4176 = vmatpush.msra.mxu0 %v4106
    %4177 = vmatpush.msra.mxu0 %v4105
    %4178 = vmatpush.msra.mxu0 %v4104
    %4179 = vmatpush.msra.mxu0 %v4103
    %4180 = vmatpush.msra.mxu0 %v4102
    %4181 = vmatpush.msra.mxu0 %v4101
    %4182 = vmatpush.msra.mxu0 %v4100
    %4183 = vmatpush.msra.mxu0 %v4099
    %4184 = vmatpush.msra.mxu0 %v4098
    %4185 = vmatpush.msra.mxu0 %v4097
    %4186 = vmatpush.msra.mxu0 %v4096
    %4187 = vmatpush.msra.mxu0 %v4095
    %4188 = vmatpush.msra.mxu0 %v4094
    %4189 = vmatpush.msra.mxu0 %v4093
    %4190 = vmatmul.f32.gmra.mxu0 %v3378
    %v4191 = vpop.f32.mrf.mxu0
    %v4192 = vadd.f32 %v4127, %v4191
    %4193 = vmatmul.f32.gmra.mxu0 %v3380
    %v4194 = vpop.f32.mrf.mxu0
    %v4195 = vadd.f32 %v4130, %v4194
    %4196 = vmatmul.f32.gmra.mxu0 %v3382
    %v4197 = vpop.f32.mrf.mxu0
    %v4198 = vadd.f32 %v4133, %v4197
    %4199 = vmatmul.f32.gmra.mxu0 %v3384
    %v4200 = vpop.f32.mrf.mxu0
    %v4201 = vadd.f32 %v4136, %v4200
    %4202 = vmatmul.f32.gmra.mxu0 %v3386
    %v4203 = vpop.f32.mrf.mxu0
    %v4204 = vadd.f32 %v4139, %v4203
    %4205 = vmatmul.f32.gmra.mxu0 %v3388
    %v4206 = vpop.f32.mrf.mxu0
    %v4207 = vadd.f32 %v4142, %v4206
    %4208 = vmatmul.f32.gmra.mxu0 %v3390
    %v4209 = vpop.f32.mrf.mxu0
    %v4210 = vadd.f32 %v4145, %v4209
    %4211 = vmatmul.f32.gmra.mxu0 %v3392
    %v4212 = vpop.f32.mrf.mxu0
    %v4213 = vadd.f32 %v4148, %v4212
    %4214 = vmatmul.f32.gmra.mxu0 %v3394
    %v4215 = vpop.f32.mrf.mxu0
    %v4216 = vadd.f32 %v4151, %v4215
    %4217 = vmatmul.f32.gmra.mxu0 %v3396
    %v4218 = vpop.f32.mrf.mxu0
    %v4219 = vadd.f32 %v4154, %v4218
    %4220 = vmatmul.f32.gmra.mxu0 %v3398
    %v4221 = vpop.f32.mrf.mxu0
    %v4222 = vadd.f32 %v4157, %v4221
    %4223 = vmatmul.f32.gmra.mxu0 %v3400
    %v4224 = vpop.f32.mrf.mxu0
    %v4225 = vadd.f32 %v4160, %v4224
    %4226 = vmatmul.f32.gmra.mxu0 %v3402
    %v4227 = vpop.f32.mrf.mxu0
    %v4228 = vadd.f32 %v4163, %v4227
    %4229 = vmatmul.f32.gmra.mxu0 %v3404
    %v4230 = vpop.f32.mrf.mxu0
    %v4231 = vadd.f32 %v4166, %v4230
    %4232 = vmatmul.f32.gmra.mxu0 %v3406
    %v4233 = vpop.f32.mrf.mxu0
    %v4234 = vadd.f32 %v4169, %v4233
    %4235 = vmatmul.f32.gmra.mxu0 %v3408
    %v4236 = vpop.f32.mrf.mxu0
    %v4237 = vadd.f32 %v4172, %v4236
    %4238 = vdwg.mxu0
    %v4239 = vadd.f32 %v3207, %v4192
    %v4240 = vadd.f32 %v3208, %v4195
    %v4241 = vadd.f32 %v3209, %v4198
    %v4242 = vadd.f32 %v3210, %v4201
    %v4243 = vadd.f32 %v3211, %v4204
    %v4244 = vadd.f32 %v3212, %v4207
    %v4245 = vadd.f32 %v3213, %v4210
    %v4246 = vadd.f32 %v3214, %v4213
    %v4247 = vadd.f32 %v3215, %v4216
    %v4248 = vadd.f32 %v3216, %v4219
    %v4249 = vadd.f32 %v3217, %v4222
    %v4250 = vadd.f32 %v3218, %v4225
    %v4251 = vadd.f32 %v3219, %v4228
    %v4252 = vadd.f32 %v3220, %v4231
    %v4253 = vadd.f32 %v3221, %v4234
    %v4254 = vadd.f32 %v3222, %v4237
    %v4255 = vld [vmem:[%s8] sm:$0xff]
    %v4256 = vld [vmem:[%s8 + $0x8] sm:$0xff]
    %v4257 = vld [vmem:[%s8 + $0x10] sm:$0xff]
    %v4258 = vld [vmem:[%s8 + $0x18] sm:$0xff]
    %v4259 = vld [vmem:[%s8 + $0x20] sm:$0xff]
    %v4260 = vld [vmem:[%s8 + $0x28] sm:$0xff]
    %v4261 = vld [vmem:[%s8 + $0x30] sm:$0xff]
    %v4262 = vld [vmem:[%s8 + $0x38] sm:$0xff]
    %v4263 = vld [vmem:[%s8 + $0x40] sm:$0xff]
    %v4264 = vld [vmem:[%s8 + $0x48] sm:$0xff]
    %v4265 = vld [vmem:[%s8 + $0x50] sm:$0xff]
    %v4266 = vld [vmem:[%s8 + $0x58] sm:$0xff]
    %v4267 = vld [vmem:[%s8 + $0x60] sm:$0xff]
    %v4268 = vld [vmem:[%s8 + $0x68] sm:$0xff]
    %v4269 = vld [vmem:[%s8 + $0x70] sm:$0xff]
    %v4270 = vld [vmem:[%s8 + $0x78] sm:$0xff]
    %v4271 = vmul.f32 %v4239, %v4255
    %v4272 = vmul.f32 %v4240, %v4256
    %v4273 = vmul.f32 %v4241, %v4257
    %v4274 = vmul.f32 %v4242, %v4258
    %v4275 = vmul.f32 %v4243, %v4259
    %v4276 = vmul.f32 %v4244, %v4260
    %v4277 = vmul.f32 %v4245, %v4261
    %v4278 = vmul.f32 %v4246, %v4262
    %v4279 = vmul.f32 %v4247, %v4263
    %v4280 = vmul.f32 %v4248, %v4264
    %v4281 = vmul.f32 %v4249, %v4265
    %v4282 = vmul.f32 %v4250, %v4266
    %v4283 = vmul.f32 %v4251, %v4267
    %v4284 = vmul.f32 %v4252, %v4268
    %v4285 = vmul.f32 %v4253, %v4269
    %v4286 = vmul.f32 %v4254, %v4270
    %vm4287 = vcmask 15360
    %v4288 = vsel %vm4287, %v4271, 0.0
    %4289 = vadd.xlane.f32.xlu0 %v4288
    %v4290 = vpop.xlane.xlu0 %4289
    %v4291 = vsel %vm4287, %v4272, 0.0
    %4292 = vadd.xlane.f32.xlu0 %v4291
    %v4293 = vpop.xlane.xlu0 %4292
    %v4294 = vsel %vm4287, %v4273, 0.0
    %4295 = vadd.xlane.f32.xlu0 %v4294
    %v4296 = vpop.xlane.xlu0 %4295
    %v4297 = vsel %vm4287, %v4274, 0.0
    %4298 = vadd.xlane.f32.xlu0 %v4297
    %v4299 = vpop.xlane.xlu0 %4298
    %v4300 = vsel %vm4287, %v4275, 0.0
    %4301 = vadd.xlane.f32.xlu0 %v4300
    %v4302 = vpop.xlane.xlu0 %4301
    %v4303 = vsel %vm4287, %v4276, 0.0
    %4304 = vadd.xlane.f32.xlu0 %v4303
    %v4305 = vpop.xlane.xlu0 %4304
    %v4306 = vsel %vm4287, %v4277, 0.0
    %4307 = vadd.xlane.f32.xlu0 %v4306
    %v4308 = vpop.xlane.xlu0 %4307
    %v4309 = vsel %vm4287, %v4278, 0.0
    %4310 = vadd.xlane.f32.xlu0 %v4309
    %v4311 = vpop.xlane.xlu0 %4310
    %v4312 = vsel %vm4287, %v4279, 0.0
    %4313 = vadd.xlane.f32.xlu0 %v4312
    %v4314 = vpop.xlane.xlu0 %4313
    %v4315 = vsel %vm4287, %v4280, 0.0
    %4316 = vadd.xlane.f32.xlu0 %v4315
    %v4317 = vpop.xlane.xlu0 %4316
    %v4318 = vsel %vm4287, %v4281, 0.0
    %4319 = vadd.xlane.f32.xlu0 %v4318
    %v4320 = vpop.xlane.xlu0 %4319
    %v4321 = vsel %vm4287, %v4282, 0.0
    %4322 = vadd.xlane.f32.xlu0 %v4321
    %v4323 = vpop.xlane.xlu0 %4322
    %v4324 = vsel %vm4287, %v4283, 0.0
    %4325 = vadd.xlane.f32.xlu0 %v4324
    %v4326 = vpop.xlane.xlu0 %4325
    %v4327 = vsel %vm4287, %v4284, 0.0
    %4328 = vadd.xlane.f32.xlu0 %v4327
    %v4329 = vpop.xlane.xlu0 %4328
    %v4330 = vsel %vm4287, %v4285, 0.0
    %4331 = vadd.xlane.f32.xlu0 %v4330
    %v4332 = vpop.xlane.xlu0 %4331
    %v4333 = vsel %vm4287, %v4286, 0.0
    %4334 = vadd.xlane.f32.xlu0 %v4333
    %v4335 = vpop.xlane.xlu0 %4334
    %v4336 = vld [vmem:[%s10] sm:$0xff]
    %v4337 = vld [vmem:[%s9] sm:$0xff]
    %v4338 = vld [vmem:[%s9 + $0x8] sm:$0xff]
    %v4339 = vld [vmem:[%s9 + $0x10] sm:$0xff]
    %v4340 = vld [vmem:[%s9 + $0x18] sm:$0xff]
    %v4341 = vld [vmem:[%s9 + $0x20] sm:$0xff]
    %v4342 = vld [vmem:[%s9 + $0x28] sm:$0xff]
    %v4343 = vld [vmem:[%s9 + $0x30] sm:$0xff]
    %v4344 = vld [vmem:[%s9 + $0x38] sm:$0xff]
    %v4345 = vld [vmem:[%s9 + $0x40] sm:$0xff]
    %v4346 = vld [vmem:[%s9 + $0x48] sm:$0xff]
    %v4347 = vld [vmem:[%s9 + $0x50] sm:$0xff]
    %v4348 = vld [vmem:[%s9 + $0x58] sm:$0xff]
    %v4349 = vld [vmem:[%s9 + $0x60] sm:$0xff]
    %v4350 = vld [vmem:[%s9 + $0x68] sm:$0xff]
    %v4351 = vld [vmem:[%s9 + $0x70] sm:$0xff]
    %v4352 = vld [vmem:[%s9 + $0x78] sm:$0xff]
    %v4353 = vmul.f32 %v4290, %v4337
    %v4354 = vmul.f32 %v4293, %v4338
    %v4355 = vmul.f32 %v4296, %v4339
    %v4356 = vmul.f32 %v4299, %v4340
    %v4357 = vmul.f32 %v4302, %v4341
    %v4358 = vmul.f32 %v4305, %v4342
    %v4359 = vmul.f32 %v4308, %v4343
    %v4360 = vmul.f32 %v4311, %v4344
    %v4361 = vmul.f32 %v4314, %v4345
    %v4362 = vmul.f32 %v4317, %v4346
    %v4363 = vmul.f32 %v4320, %v4347
    %v4364 = vmul.f32 %v4323, %v4348
    %v4365 = vmul.f32 %v4326, %v4349
    %v4366 = vmul.f32 %v4329, %v4350
    %v4367 = vmul.f32 %v4332, %v4351
    %v4368 = vmul.f32 %v4335, %v4352
    %v4369 = vld [vmem:[#allocation2] sm:$0x1]
    %v4371 = vperm.slane %v4369, 0
    %4372 = vset.pattern.permute.xlu0 0
    %4373 = vperm.xlu0 %4372, %v4371
    %v4374 = vpop.permute.xlu0 %4373
    %4376 = vmatpush.msra.mxu0 %v4368
    %4377 = vmatpush.msra.mxu0 %v4367
    %4378 = vmatpush.msra.mxu0 %v4366
    %4379 = vmatpush.msra.mxu0 %v4365
    %4380 = vmatpush.msra.mxu0 %v4364
    %4381 = vmatpush.msra.mxu0 %v4363
    %4382 = vmatpush.msra.mxu0 %v4362
    %4383 = vmatpush.msra.mxu0 %v4361
    %4384 = vmatpush.msra.mxu0 %v4360
    %4385 = vmatpush.msra.mxu0 %v4359
    %4386 = vmatpush.msra.mxu0 %v4358
    %4387 = vmatpush.msra.mxu0 %v4357
    %4388 = vmatpush.msra.mxu0 %v4356
    %4389 = vmatpush.msra.mxu0 %v4355
    %4390 = vmatpush.msra.mxu0 %v4354
    %4391 = vmatpush.msra.mxu0 %v4353
    %4392 = vmatmul.f32.gmra.mxu0 %v4336
    %v4393 = vpop.f32.mrf.mxu0
    %v4394 = vadd.f32 %v4374, %v4393
    %4395 = vdwg.mxu0
    %vm4396 = vcmask 130048
    %v4397 = vsel %vm4396, %v4394, -inf
    %4398 = vmax.xlane.f32.xlu0 %v4397
    %v4399 = vpop.xlane.xlu0 %4398
    %v4400 = vsub.f32 %v4394, %v4399
    %v4401 = vmul.f32 %v4400, 1.442695
    %v4402 = vpow.pop %v4401
    %v4403 = vsel %vm4396, %v4402, 0.0
    %4404 = vadd.xlane.f32.xlu0 %v4403
    %v4405 = vpop.xlane.xlu0 %4404
    %v4406 = vrcp.pop %v4405
    %v4407 = vmul.f32 %v4405, %v4406
    %v4408 = vsub.f32 1.0, %v4407
    %v4409 = vmul.f32 %v4406, %v4408
    %v4410 = vadd.f32 %v4406, %v4409
    %vm4411 = vweird.f32 %v4405
    %vm4412 = vweird.f32 %v4406
    %vm4413 = vmor %vm4411, %vm4412
    %v4414 = vsel %vm4413, %v4406, %v4410
    %v4415 = vand.u32 2147483647, %v4405
    %vm4416 = vcmp.eq.f32.partialorder %v4415, 8.507059e+37
    %v4417 = vand.u32 %v4405, 2147483648
    %v4418 = vor.u32 1.1754944e-38, %v4417
    %v4419 = vsel %vm4416, %v4418, %v4414
    %v4420 = vmul.f32 %v4402, %v4419
    %4421 = vst.msk [vmem:[#allocation3] sm:$0xff] %vm4396, %v4420
    // Predicated region
    $region46: #{tpu_custom_call.1} parent=1 // pred_check
      _
    $region47: #{tpu_custom_call.1} parent=1 // pred_check_branch
      %4423 = sbr.rel (0) target = $region49
    $region48: #{tpu_custom_call.1} parent=1 // pred_region
      %4425 = vsyncadd [#allocation4], 0
      %s4427 = sshll.u32 [#allocation3], 4
      %s4428 = int_to_ptr.vmem [resolvable:$true] %s4427
      %s4429 = sshll.u32 %s11, 4
      %s4430 = int_to_ptr.hbm [resolvable:$true] %s4429
      %4432 = dma.vmem_to_hbm [thread:$0]  %s4428, 128, %s4430, [#allocation4]
    $region49: #{tpu_custom_call.1} parent=1 // pred_fallthru
      _
    // Predicated region
    $region50: #{tpu_custom_call.1} parent=1 // pred_check
      _
    $region51: #{tpu_custom_call.1} parent=1 // pred_check_branch
      %4434 = sbr.rel (0) target = $region53
    $region52: #{tpu_custom_call.1} parent=1 // pred_region
      %4436 = dma.done [#allocation4], 128
    $region53: #{tpu_custom_call.1} parent=1 // pred_fallthru
      _
    %4437 = vsyncpa [#allocation4], 1

</llo_original>
